<compile_context>
chip_gen: v7x
topology: tpu7x:2x2x1
jax: 0.10.0
libtpu: 0.0.40
codegen_flags: <defaults>
</compile_context>

<pallas_src>
import jax
import jax.numpy as jnp
from jax.experimental import pallas as pl
from jax.experimental.pallas import tpu as pltpu

ENC_DIMS = [28 * 28, 512, 256, 128, 64, 10]
DEC_DIMS = [10, 64, 128, 256, 512, 28 * 28]
LAYER_DIMS = list(zip(ENC_DIMS[:-1], ENC_DIMS[1:])) + list(zip(DEC_DIMS[:-1], DEC_DIMS[1:]))
N_LAYERS = len(LAYER_DIMS)                 # 10 linear layers total
LATENT_LAYER = len(ENC_DIMS) - 2           # index 4: last encoder layer
LATENT_DIM = ENC_DIMS[-1]                  # 10
LATENT_PAD = 128                           # lane-dense padded latent width
NEG_SLOPE = 0.01
MACS_PER_SAMPLE = sum(d_in * d_out for d_in, d_out in LAYER_DIMS)

# Padded per-layer dims: latent layer gets 128 output cols (zeros beyond 10),
# the first decoder layer gets 128 input rows (zeros beyond 10).
PADDED_LAYER_DIMS = []
for _li, (_din, _dout) in enumerate(LAYER_DIMS):
    d_in_p = LATENT_PAD if _li == LATENT_LAYER + 1 else _din
    d_out_p = LATENT_PAD if _li == LATENT_LAYER else _dout
    PADDED_LAYER_DIMS.append((d_in_p, d_out_p))

BIAS_OFFSETS = []
_off = 0
for _, _dout_p in PADDED_LAYER_DIMS:
    BIAS_OFFSETS.append(_off)
    _off += _dout_p
BIAS_TOTAL = _off                          # 2832

# --- generation-dependent knobs (safe defaults if detection fails) -----------
try:
    _KIND = jax.devices()[0].device_kind.lower()
except Exception:  # pragma: no cover
    _KIND = ""
# bf16 VPU/EUP exist on v6e and v7x; keep the f32 epilogue on v5e and older.
USE_BF16_EPILOGUE = not any(g in _KIND for g in ("v2", "v3", "v4", "v5"))
if ("v7" in _KIND) or ("7x" in _KIND):
    VMEM_LIMIT_BYTES = 48 << 20            # 64 MiB physical per TC on v7x
elif ("v6" in _KIND) or ("v5" in _KIND):
    VMEM_LIMIT_BYTES = 64 << 20            # 128 MiB physical
else:
    VMEM_LIMIT_BYTES = 32 << 20


def _leaky_relu(h):
    return jnp.where(h > 0, h, NEG_SLOPE * h)


def autoencoder_kernel(x_ref, *refs):
    """Whole autoencoder forward for one batch tile.

    refs = (w0, ..., w9, bias_packed, out_ref, latent_ref)
    Weights are bf16 (~2.3 MB total) and grid-invariant (resident in VMEM);
    each layer is one MXU matmul (bf16 x bf16 -> f32 accum) plus a VPU
    bias/LeakyReLU epilogue (bf16 on v6e/v7x, f32 on v5e).
    """
    weight_refs = refs[:N_LAYERS]
    bias_ref = refs[N_LAYERS]
    out_ref, latent_ref = refs[N_LAYERS + 1], refs[N_LAYERS + 2]

    h = x_ref[...].astype(jnp.bfloat16)
    for li in range(N_LAYERS):
        w = weight_refs[li][...]                       # bf16 (d_in_p, d_out_p)
        off = BIAS_OFFSETS[li]
        width = PADDED_LAYER_DIMS[li][1]
        b = bias_ref[:, off:off + width]               # f32 (1, d_out_p), static slice
        acc = jnp.dot(h, w, preferred_element_type=jnp.float32)
        if li == LATENT_LAYER:
            # Latent = encoder output, no activation; lane-dense 128-wide store,
            # columns 10..127 are exactly zero by construction.
            z = acc + b
            latent_ref[...] = z
            h = z.astype(jnp.bfloat16)
        elif li == N_LAYERS - 1:
            # Final decoder layer: no activation, f32 store.
            out_ref[...] = acc + b
        else:
            if USE_BF16_EPILOGUE:
                h = _leaky_relu(acc.astype(jnp.bfloat16) + b.astype(jnp.bfloat16))
            else:
                h = _leaky_relu(acc + b).astype(jnp.bfloat16)


def init_params(key):
    """PyTorch-style Linear params: W (d_out, d_in), b (d_out,), U(-1/sqrt(fan_in), ..)."""
    params = []
    for d_in, d_out in LAYER_DIMS:
        key, kw, kb = jax.random.split(key, 3)
        bound = 1.0 / (d_in ** 0.5)
        w = jax.random.uniform(kw, (d_out, d_in), jnp.float32, -bound, bound)
        b = jax.random.uniform(kb, (d_out,), jnp.float32, -bound, bound)
        params.append((w, b))
    return params


def prepare_params(params):
    """Convert PyTorch-layout f32 params to kernel layout.

    Returns (weights, bias_packed):
      weights[i]  : bf16 (d_in_p, d_out_p), transposed and zero-padded where needed.
      bias_packed : f32 (1, BIAS_TOTAL), all biases concatenated (latent bias
                    zero-padded to 128 cols).
    """
    weights = []
    bias_chunks = []
    for (w, b), (d_in_p, d_out_p) in zip(params, PADDED_LAYER_DIMS):
        wt = w.T.astype(jnp.float32)                   # (d_in, d_out)
        d_in, d_out = wt.shape
        if (d_in, d_out) != (d_in_p, d_out_p):
            wt = jnp.zeros((d_in_p, d_out_p), jnp.float32).at[:d_in, :d_out].set(wt)
        bb = b
        if d_out != d_out_p:
            bb = jnp.zeros((d_out_p,), jnp.float32).at[:d_out].set(b)
        weights.append(wt.astype(jnp.bfloat16))
        bias_chunks.append(bb)
    bias_packed = jnp.concatenate(bias_chunks).reshape(1, -1)
    return tuple(weights), bias_packed


def _choose_tiling(B):
    """Pick (tile_b, n_tiles). Batches >= 128 get >= 2 grid steps (both v7x TCs
    busy); big batches use 512-row tiles; tiny batches stay single-step."""
    if B < 128:
        return B, 1
    if B >= 1024:
        n = -(-B // 512)           # ceil(B / 512)
    else:
        n = 2
    tile_b = -(-B // n)            # ceil
    tile_b = ((tile_b + 7) // 8) * 8
    return tile_b, n


def _pallas_forward(x, weights, bias_packed, tile_b):
    B, D = x.shape
    assert D == 28 * 28 and B % tile_b == 0

    in_specs = [pl.BlockSpec((tile_b, D), lambda i: (i, 0))]
    for w in weights:
        # Full-extent, grid-invariant blocks for weights.
        in_specs.append(pl.BlockSpec(w.shape, lambda i: (0, 0)))
    in_specs.append(pl.BlockSpec(bias_packed.shape, lambda i: (0, 0)))

    out_specs = [
        pl.BlockSpec((tile_b, 28 * 28), lambda i: (i, 0)),
        pl.BlockSpec((tile_b, LATENT_PAD), lambda i: (i, 0)),
    ]
    out_shape = [
        jax.ShapeDtypeStruct((B, 28 * 28), jnp.float32),
        jax.ShapeDtypeStruct((B, LATENT_PAD), jnp.float32),
    ]

    param_bytes = sum(int(p.size) * p.dtype.itemsize for p in weights)
    param_bytes += int(bias_packed.size) * bias_packed.dtype.itemsize
    io_bytes = (x.size * x.dtype.itemsize            # input x
                + B * (28 * 28) * 4                  # recon
                + B * LATENT_PAD * 4)                # latent (padded)
    cost = pl.CostEstimate(
        flops=2 * MACS_PER_SAMPLE * B,
        transcendentals=0,
        bytes_accessed=param_bytes + io_bytes,
    )

    recon, latent_padded = pl.pallas_call(
        autoencoder_kernel,
        grid=(B // tile_b,),
        in_specs=in_specs,
        out_specs=out_specs,
        out_shape=out_shape,
        compiler_params=pltpu.CompilerParams(
            dimension_semantics=("parallel",),
            vmem_limit_bytes=VMEM_LIMIT_BYTES,
        ),
        cost_estimate=cost,
    )(x, *weights, bias_packed)
    return recon, latent_padded


@jax.jit
def autoencoder_forward(x, weights, bias_packed):
    """Shape-adaptive wrapper: single program for tiny batches; >=2 parallel
    batch tiles (512 rows max) for larger ones so both v7x TCs get work."""
    B = x.shape[0]
    tile_b, n_tiles = _choose_tiling(B)
    b_pad = tile_b * n_tiles
    x_in = jnp.pad(x, ((0, b_pad - B), (0, 0))) if b_pad != B else x
    recon, latent_padded = _pallas_forward(x_in, weights, bias_packed, tile_b)
    return recon[:B], latent_padded[:B, :LATENT_DIM]


def reference_forward(x, weights, bias_packed):
    """Pure-JAX reference mirroring the kernel's numerics exactly (bf16 matmul
    operands, f32 MXU accumulation, same epilogue dtype policy)."""
    h = x.astype(jnp.bfloat16)
    latent, recon = None, None
    for li in range(N_LAYERS):
        w = weights[li]
        off = BIAS_OFFSETS[li]
        width = PADDED_LAYER_DIMS[li][1]
        b = bias_packed[:, off:off + width]
        acc = jnp.dot(h, w, preferred_element_type=jnp.float32)
        if li == LATENT_LAYER:
            z = acc + b
            latent = z[:, :LATENT_DIM]
            h = z.astype(jnp.bfloat16)
        elif li == N_LAYERS - 1:
            recon = acc + b
        else:
            if USE_BF16_EPILOGUE:
                h = _leaky_relu(acc.astype(jnp.bfloat16) + b.astype(jnp.bfloat16))
            else:
                h = _leaky_relu(acc + b).astype(jnp.bfloat16)
    return recon, latent


if __name__ == "__main__":
    key = jax.random.PRNGKey(0)
    k_params, k_x, k_x2 = jax.random.split(key, 3)

    params = init_params(k_params)
    weights, bias_packed = prepare_params(params)

    # Small batch -> single grid step.
    B = 64
    x = jax.random.normal(k_x, (B, 28 * 28), jnp.float32)
    recon, latent = autoencoder_forward(x, weights, bias_packed)
    jax.block_until_ready((recon, latent))

    ref_recon, ref_latent = reference_forward(x, weights, bias_packed)
    assert recon.shape == (B, 28 * 28) and latent.shape == (B, LATENT_DIM)
    assert jnp.allclose(recon, ref_recon, atol=2e-2, rtol=2e-2)
    assert jnp.allclose(latent, ref_latent, atol=2e-2, rtol=2e-2)

    # Mid-size batch -> 2 parallel tiles (exercises the padded multi-tile path /
    # both v7x TensorCores).
    B2 = 160
    x2 = jax.random.normal(k_x2, (B2, 28 * 28), jnp.float32)
    recon2, latent2 = autoencoder_forward(x2, weights, bias_packed)
    jax.block_until_ready((recon2, latent2))
    ref_recon2, ref_latent2 = reference_forward(x2, weights, bias_packed)
    assert recon2.shape == (B2, 28 * 28) and latent2.shape == (B2, LATENT_DIM)
    assert jnp.allclose(recon2, ref_recon2, atol=2e-2, rtol=2e-2)
    assert jnp.allclose(latent2, ref_latent2, atol=2e-2, rtol=2e-2)

    print("KERNEL_OK")
</pallas_src>

<mosaic_0001>
module attributes {stable_mosaic.version = 11 : i64} {
  func.func @autoencoder_kernel(%arg0: i32, %arg1: memref<64x784xf32, #tpu.memory_space<vmem>>, %arg2: memref<784x512xbf16, #tpu.memory_space<vmem>>, %arg3: memref<512x256xbf16, #tpu.memory_space<vmem>>, %arg4: memref<256x128xbf16, #tpu.memory_space<vmem>>, %arg5: memref<128x64xbf16, #tpu.memory_space<vmem>>, %arg6: memref<64x128xbf16, #tpu.memory_space<vmem>>, %arg7: memref<128x64xbf16, #tpu.memory_space<vmem>>, %arg8: memref<64x128xbf16, #tpu.memory_space<vmem>>, %arg9: memref<128x256xbf16, #tpu.memory_space<vmem>>, %arg10: memref<256x512xbf16, #tpu.memory_space<vmem>>, %arg11: memref<512x784xbf16, #tpu.memory_space<vmem>>, %arg12: memref<1x2832xf32, #tpu.memory_space<vmem>>, %arg13: memref<64x784xf32, #tpu.memory_space<vmem>>, %arg14: memref<64x128xf32, #tpu.memory_space<vmem>>) attributes {dimension_semantics = [#tpu.dimension_semantics<parallel>], iteration_bounds = array<i64: 1>, scalar_prefetch = 0 : i64, scratch_operands = 0 : i64, tpu.core_type = #tpu.core_type<tc>, window_params = [{transform_indices = @transform_0, window_bounds = array<i64: 64, 784>}, {pipeline_mode = #tpu.pipeline_mode<synchronous>, transform_indices = @transform_1, window_bounds = array<i64: 784, 512>}, {pipeline_mode = #tpu.pipeline_mode<synchronous>, transform_indices = @transform_2, window_bounds = array<i64: 512, 256>}, {pipeline_mode = #tpu.pipeline_mode<synchronous>, transform_indices = @transform_3, window_bounds = array<i64: 256, 128>}, {pipeline_mode = #tpu.pipeline_mode<synchronous>, transform_indices = @transform_4, window_bounds = array<i64: 128, 64>}, {pipeline_mode = #tpu.pipeline_mode<synchronous>, transform_indices = @transform_5, window_bounds = array<i64: 64, 128>}, {pipeline_mode = #tpu.pipeline_mode<synchronous>, transform_indices = @transform_6, window_bounds = array<i64: 128, 64>}, {pipeline_mode = #tpu.pipeline_mode<synchronous>, transform_indices = @transform_7, window_bounds = array<i64: 64, 128>}, {pipeline_mode = #tpu.pipeline_mode<synchronous>, transform_indices = @transform_8, window_bounds = array<i64: 128, 256>}, {pipeline_mode = #tpu.pipeline_mode<synchronous>, transform_indices = @transform_9, window_bounds = array<i64: 256, 512>}, {pipeline_mode = #tpu.pipeline_mode<synchronous>, transform_indices = @transform_10, window_bounds = array<i64: 512, 784>}, {pipeline_mode = #tpu.pipeline_mode<synchronous>, transform_indices = @transform_11, window_bounds = array<i64: 1, 2832>}, {transform_indices = @transform_12, window_bounds = array<i64: 64, 784>}, {transform_indices = @transform_13, window_bounds = array<i64: 64, 128>}]} {
    %c0 = arith.constant 0 : index
    %c0_0 = arith.constant 0 : index
    %0 = vector.load %arg1[%c0, %c0_0] : memref<64x784xf32, #tpu.memory_space<vmem>>, vector<64x784xf32>
    %1 = arith.truncf %0 : vector<64x784xf32> to vector<64x784xbf16>
    %c0_1 = arith.constant 0 : index
    %c0_2 = arith.constant 0 : index
    %2 = vector.load %arg2[%c0_1, %c0_2] : memref<784x512xbf16, #tpu.memory_space<vmem>>, vector<784x512xbf16>
    %c0_3 = arith.constant 0 : index
    %c0_4 = arith.constant 0 : index
    %3 = vector.load %arg12[%c0_3, %c0_4] : memref<1x2832xf32, #tpu.memory_space<vmem>>, vector<1x512xf32>
    %cst = arith.constant dense<0.000000e+00> : vector<64x512xf32>
    %4 = tpu.matmul %1, %2, %cst {dimension_numbers = #tpu.dot_dimension_numbers<[1], [0], [0], [1], [0, 0, 1, 1], [], []>} : vector<64x784xbf16>, vector<784x512xbf16>, vector<64x512xf32> -> vector<64x512xf32>
    %5 = arith.truncf %4 : vector<64x512xf32> to vector<64x512xbf16>
    %6 = arith.truncf %3 : vector<1x512xf32> to vector<1x512xbf16>
    %7 = vector.broadcast %6 : vector<1x512xbf16> to vector<64x512xbf16>
    %8 = arith.addf %5, %7 : vector<64x512xbf16>
    %cst_5 = arith.constant 0.000000e+00 : bf16
    %9 = vector.broadcast %cst_5 : bf16 to vector<64x512xbf16>
    %10 = arith.cmpf ogt, %8, %9 : vector<64x512xbf16>
    %cst_6 = arith.constant 1.000980e-02 : bf16
    %11 = vector.broadcast %cst_6 : bf16 to vector<64x512xbf16>
    %12 = arith.mulf %11, %8 : vector<64x512xbf16>
    %13 = arith.select %10, %8, %12 : vector<64x512xi1>, vector<64x512xbf16>
    %c0_7 = arith.constant 0 : index
    %c0_8 = arith.constant 0 : index
    %14 = vector.load %arg3[%c0_7, %c0_8] : memref<512x256xbf16, #tpu.memory_space<vmem>>, vector<512x256xbf16>
    %c0_9 = arith.constant 0 : index
    %c512 = arith.constant 512 : index
    %15 = vector.load %arg12[%c0_9, %c512] : memref<1x2832xf32, #tpu.memory_space<vmem>>, vector<1x256xf32>
    %cst_10 = arith.constant dense<0.000000e+00> : vector<64x256xf32>
    %16 = tpu.matmul %13, %14, %cst_10 {dimension_numbers = #tpu.dot_dimension_numbers<[1], [0], [0], [1], [0, 0, 1, 1], [], []>} : vector<64x512xbf16>, vector<512x256xbf16>, vector<64x256xf32> -> vector<64x256xf32>
    %17 = arith.truncf %16 : vector<64x256xf32> to vector<64x256xbf16>
    %18 = arith.truncf %15 : vector<1x256xf32> to vector<1x256xbf16>
    %19 = vector.broadcast %18 : vector<1x256xbf16> to vector<64x256xbf16>
    %20 = arith.addf %17, %19 : vector<64x256xbf16>
    %cst_11 = arith.constant 0.000000e+00 : bf16
    %21 = vector.broadcast %cst_11 : bf16 to vector<64x256xbf16>
    %22 = arith.cmpf ogt, %20, %21 : vector<64x256xbf16>
    %cst_12 = arith.constant 1.000980e-02 : bf16
    %23 = vector.broadcast %cst_12 : bf16 to vector<64x256xbf16>
    %24 = arith.mulf %23, %20 : vector<64x256xbf16>
    %25 = arith.select %22, %20, %24 : vector<64x256xi1>, vector<64x256xbf16>
    %c0_13 = arith.constant 0 : index
    %c0_14 = arith.constant 0 : index
    %26 = vector.load %arg4[%c0_13, %c0_14] : memref<256x128xbf16, #tpu.memory_space<vmem>>, vector<256x128xbf16>
    %c0_15 = arith.constant 0 : index
    %c768 = arith.constant 768 : index
    %27 = vector.load %arg12[%c0_15, %c768] : memref<1x2832xf32, #tpu.memory_space<vmem>>, vector<1x128xf32>
    %cst_16 = arith.constant dense<0.000000e+00> : vector<64x128xf32>
    %28 = tpu.matmul %25, %26, %cst_16 {dimension_numbers = #tpu.dot_dimension_numbers<[1], [0], [0], [1], [0, 0, 1, 1], [], []>} : vector<64x256xbf16>, vector<256x128xbf16>, vector<64x128xf32> -> vector<64x128xf32>
    %29 = arith.truncf %28 : vector<64x128xf32> to vector<64x128xbf16>
    %30 = arith.truncf %27 : vector<1x128xf32> to vector<1x128xbf16>
    %31 = vector.broadcast %30 : vector<1x128xbf16> to vector<64x128xbf16>
    %32 = arith.addf %29, %31 : vector<64x128xbf16>
    %cst_17 = arith.constant 0.000000e+00 : bf16
    %33 = vector.broadcast %cst_17 : bf16 to vector<64x128xbf16>
    %34 = arith.cmpf ogt, %32, %33 : vector<64x128xbf16>
    %cst_18 = arith.constant 1.000980e-02 : bf16
    %35 = vector.broadcast %cst_18 : bf16 to vector<64x128xbf16>
    %36 = arith.mulf %35, %32 : vector<64x128xbf16>
    %37 = arith.select %34, %32, %36 : vector<64x128xi1>, vector<64x128xbf16>
    %c0_19 = arith.constant 0 : index
    %c0_20 = arith.constant 0 : index
    %38 = vector.load %arg5[%c0_19, %c0_20] : memref<128x64xbf16, #tpu.memory_space<vmem>>, vector<128x64xbf16>
    %c0_21 = arith.constant 0 : index
    %c896 = arith.constant 896 : index
    %39 = vector.load %arg12[%c0_21, %c896] : memref<1x2832xf32, #tpu.memory_space<vmem>>, vector<1x64xf32>
    %cst_22 = arith.constant dense<0.000000e+00> : vector<64x64xf32>
    %40 = tpu.matmul %37, %38, %cst_22 {dimension_numbers = #tpu.dot_dimension_numbers<[1], [0], [0], [1], [0, 0, 1, 1], [], []>} : vector<64x128xbf16>, vector<128x64xbf16>, vector<64x64xf32> -> vector<64x64xf32>
    %41 = arith.truncf %40 : vector<64x64xf32> to vector<64x64xbf16>
    %42 = arith.truncf %39 : vector<1x64xf32> to vector<1x64xbf16>
    %43 = vector.broadcast %42 : vector<1x64xbf16> to vector<64x64xbf16>
    %44 = arith.addf %41, %43 : vector<64x64xbf16>
    %cst_23 = arith.constant 0.000000e+00 : bf16
    %45 = vector.broadcast %cst_23 : bf16 to vector<64x64xbf16>
    %46 = arith.cmpf ogt, %44, %45 : vector<64x64xbf16>
    %cst_24 = arith.constant 1.000980e-02 : bf16
    %47 = vector.broadcast %cst_24 : bf16 to vector<64x64xbf16>
    %48 = arith.mulf %47, %44 : vector<64x64xbf16>
    %49 = arith.select %46, %44, %48 : vector<64x64xi1>, vector<64x64xbf16>
    %c0_25 = arith.constant 0 : index
    %c0_26 = arith.constant 0 : index
    %50 = vector.load %arg6[%c0_25, %c0_26] : memref<64x128xbf16, #tpu.memory_space<vmem>>, vector<64x128xbf16>
    %c0_27 = arith.constant 0 : index
    %c960 = arith.constant 960 : index
    %51 = vector.load %arg12[%c0_27, %c960] : memref<1x2832xf32, #tpu.memory_space<vmem>>, vector<1x128xf32>
    %cst_28 = arith.constant dense<0.000000e+00> : vector<64x128xf32>
    %52 = tpu.matmul %49, %50, %cst_28 {dimension_numbers = #tpu.dot_dimension_numbers<[1], [0], [0], [1], [0, 0, 1, 1], [], []>} : vector<64x64xbf16>, vector<64x128xbf16>, vector<64x128xf32> -> vector<64x128xf32>
    %53 = vector.broadcast %51 : vector<1x128xf32> to vector<64x128xf32>
    %54 = arith.addf %52, %53 : vector<64x128xf32>
    %c0_29 = arith.constant 0 : index
    %c0_30 = arith.constant 0 : index
    %55 = vector.load %arg14[%c0_29, %c0_30] : memref<64x128xf32, #tpu.memory_space<vmem>>, vector<64x128xf32>
    tpu.vector_store %arg14[%c0_29, %c0_30], %54 {strides = array<i32>} : memref<64x128xf32, #tpu.memory_space<vmem>>, vector<64x128xf32>,
    %56 = arith.truncf %54 : vector<64x128xf32> to vector<64x128xbf16>
    %c0_31 = arith.constant 0 : index
    %c0_32 = arith.constant 0 : index
    %57 = vector.load %arg7[%c0_31, %c0_32] : memref<128x64xbf16, #tpu.memory_space<vmem>>, vector<128x64xbf16>
    %c0_33 = arith.constant 0 : index
    %c1088 = arith.constant 1088 : index
    %58 = vector.load %arg12[%c0_33, %c1088] : memref<1x2832xf32, #tpu.memory_space<vmem>>, vector<1x64xf32>
    %cst_34 = arith.constant dense<0.000000e+00> : vector<64x64xf32>
    %59 = tpu.matmul %56, %57, %cst_34 {dimension_numbers = #tpu.dot_dimension_numbers<[1], [0], [0], [1], [0, 0, 1, 1], [], []>} : vector<64x128xbf16>, vector<128x64xbf16>, vector<64x64xf32> -> vector<64x64xf32>
    %60 = arith.truncf %59 : vector<64x64xf32> to vector<64x64xbf16>
    %61 = arith.truncf %58 : vector<1x64xf32> to vector<1x64xbf16>
    %62 = vector.broadcast %61 : vector<1x64xbf16> to vector<64x64xbf16>
    %63 = arith.addf %60, %62 : vector<64x64xbf16>
    %cst_35 = arith.constant 0.000000e+00 : bf16
    %64 = vector.broadcast %cst_35 : bf16 to vector<64x64xbf16>
    %65 = arith.cmpf ogt, %63, %64 : vector<64x64xbf16>
    %cst_36 = arith.constant 1.000980e-02 : bf16
    %66 = vector.broadcast %cst_36 : bf16 to vector<64x64xbf16>
    %67 = arith.mulf %66, %63 : vector<64x64xbf16>
    %68 = arith.select %65, %63, %67 : vector<64x64xi1>, vector<64x64xbf16>
    %c0_37 = arith.constant 0 : index
    %c0_38 = arith.constant 0 : index
    %69 = vector.load %arg8[%c0_37, %c0_38] : memref<64x128xbf16, #tpu.memory_space<vmem>>, vector<64x128xbf16>
    %c0_39 = arith.constant 0 : index
    %c1152 = arith.constant 1152 : index
    %70 = vector.load %arg12[%c0_39, %c1152] : memref<1x2832xf32, #tpu.memory_space<vmem>>, vector<1x128xf32>
    %cst_40 = arith.constant dense<0.000000e+00> : vector<64x128xf32>
    %71 = tpu.matmul %68, %69, %cst_40 {dimension_numbers = #tpu.dot_dimension_numbers<[1], [0], [0], [1], [0, 0, 1, 1], [], []>} : vector<64x64xbf16>, vector<64x128xbf16>, vector<64x128xf32> -> vector<64x128xf32>
    %72 = arith.truncf %71 : vector<64x128xf32> to vector<64x128xbf16>
    %73 = arith.truncf %70 : vector<1x128xf32> to vector<1x128xbf16>
    %74 = vector.broadcast %73 : vector<1x128xbf16> to vector<64x128xbf16>
    %75 = arith.addf %72, %74 : vector<64x128xbf16>
    %cst_41 = arith.constant 0.000000e+00 : bf16
    %76 = vector.broadcast %cst_41 : bf16 to vector<64x128xbf16>
    %77 = arith.cmpf ogt, %75, %76 : vector<64x128xbf16>
    %cst_42 = arith.constant 1.000980e-02 : bf16
    %78 = vector.broadcast %cst_42 : bf16 to vector<64x128xbf16>
    %79 = arith.mulf %78, %75 : vector<64x128xbf16>
    %80 = arith.select %77, %75, %79 : vector<64x128xi1>, vector<64x128xbf16>
    %c0_43 = arith.constant 0 : index
    %c0_44 = arith.constant 0 : index
    %81 = vector.load %arg9[%c0_43, %c0_44] : memref<128x256xbf16, #tpu.memory_space<vmem>>, vector<128x256xbf16>
    %c0_45 = arith.constant 0 : index
    %c1280 = arith.constant 1280 : index
    %82 = vector.load %arg12[%c0_45, %c1280] : memref<1x2832xf32, #tpu.memory_space<vmem>>, vector<1x256xf32>
    %cst_46 = arith.constant dense<0.000000e+00> : vector<64x256xf32>
    %83 = tpu.matmul %80, %81, %cst_46 {dimension_numbers = #tpu.dot_dimension_numbers<[1], [0], [0], [1], [0, 0, 1, 1], [], []>} : vector<64x128xbf16>, vector<128x256xbf16>, vector<64x256xf32> -> vector<64x256xf32>
    %84 = arith.truncf %83 : vector<64x256xf32> to vector<64x256xbf16>
    %85 = arith.truncf %82 : vector<1x256xf32> to vector<1x256xbf16>
    %86 = vector.broadcast %85 : vector<1x256xbf16> to vector<64x256xbf16>
    %87 = arith.addf %84, %86 : vector<64x256xbf16>
    %cst_47 = arith.constant 0.000000e+00 : bf16
    %88 = vector.broadcast %cst_47 : bf16 to vector<64x256xbf16>
    %89 = arith.cmpf ogt, %87, %88 : vector<64x256xbf16>
    %cst_48 = arith.constant 1.000980e-02 : bf16
    %90 = vector.broadcast %cst_48 : bf16 to vector<64x256xbf16>
    %91 = arith.mulf %90, %87 : vector<64x256xbf16>
    %92 = arith.select %89, %87, %91 : vector<64x256xi1>, vector<64x256xbf16>
    %c0_49 = arith.constant 0 : index
    %c0_50 = arith.constant 0 : index
    %93 = vector.load %arg10[%c0_49, %c0_50] : memref<256x512xbf16, #tpu.memory_space<vmem>>, vector<256x512xbf16>
    %c0_51 = arith.constant 0 : index
    %c1536 = arith.constant 1536 : index
    %94 = vector.load %arg12[%c0_51, %c1536] : memref<1x2832xf32, #tpu.memory_space<vmem>>, vector<1x512xf32>
    %cst_52 = arith.constant dense<0.000000e+00> : vector<64x512xf32>
    %95 = tpu.matmul %92, %93, %cst_52 {dimension_numbers = #tpu.dot_dimension_numbers<[1], [0], [0], [1], [0, 0, 1, 1], [], []>} : vector<64x256xbf16>, vector<256x512xbf16>, vector<64x512xf32> -> vector<64x512xf32>
    %96 = arith.truncf %95 : vector<64x512xf32> to vector<64x512xbf16>
    %97 = arith.truncf %94 : vector<1x512xf32> to vector<1x512xbf16>
    %98 = vector.broadcast %97 : vector<1x512xbf16> to vector<64x512xbf16>
    %99 = arith.addf %96, %98 : vector<64x512xbf16>
    %cst_53 = arith.constant 0.000000e+00 : bf16
    %100 = vector.broadcast %cst_53 : bf16 to vector<64x512xbf16>
    %101 = arith.cmpf ogt, %99, %100 : vector<64x512xbf16>
    %cst_54 = arith.constant 1.000980e-02 : bf16
    %102 = vector.broadcast %cst_54 : bf16 to vector<64x512xbf16>
    %103 = arith.mulf %102, %99 : vector<64x512xbf16>
    %104 = arith.select %101, %99, %103 : vector<64x512xi1>, vector<64x512xbf16>
    %c0_55 = arith.constant 0 : index
    %c0_56 = arith.constant 0 : index
    %105 = vector.load %arg11[%c0_55, %c0_56] : memref<512x784xbf16, #tpu.memory_space<vmem>>, vector<512x784xbf16>
    %c0_57 = arith.constant 0 : index
    %c2048 = arith.constant 2048 : index
    %106 = vector.load %arg12[%c0_57, %c2048] : memref<1x2832xf32, #tpu.memory_space<vmem>>, vector<1x784xf32>
    %cst_58 = arith.constant dense<0.000000e+00> : vector<64x784xf32>
    %107 = tpu.matmul %104, %105, %cst_58 {dimension_numbers = #tpu.dot_dimension_numbers<[1], [0], [0], [1], [0, 0, 1, 1], [], []>} : vector<64x512xbf16>, vector<512x784xbf16>, vector<64x784xf32> -> vector<64x784xf32>
    %108 = vector.broadcast %106 : vector<1x784xf32> to vector<64x784xf32>
    %109 = arith.addf %107, %108 : vector<64x784xf32>
    %c0_59 = arith.constant 0 : index
    %c0_60 = arith.constant 0 : index
    %110 = vector.load %arg13[%c0_59, %c0_60] : memref<64x784xf32, #tpu.memory_space<vmem>>, vector<64x784xf32>
    tpu.vector_store %arg13[%c0_59, %c0_60], %109 {strides = array<i32>} : memref<64x784xf32, #tpu.memory_space<vmem>>, vector<64x784xf32>,
    return
  }
  func.func @transform_0(%arg0: i32) -> (i32, i32) {
    %c0_i32 = arith.constant 0 : i32
    %c0_i32_0 = arith.constant 0 : i32
    return %arg0, %c0_i32 : i32, i32
  }
  func.func @transform_1(%arg0: i32) -> (i32, i32) {
    %c0_i32 = arith.constant 0 : i32
    %c0_i32_0 = arith.constant 0 : i32
    %c0_i32_1 = arith.constant 0 : i32
    return %c0_i32, %c0_i32_0 : i32, i32
  }
  func.func @transform_2(%arg0: i32) -> (i32, i32) {
    %c0_i32 = arith.constant 0 : i32
    %c0_i32_0 = arith.constant 0 : i32
    %c0_i32_1 = arith.constant 0 : i32
    return %c0_i32, %c0_i32_0 : i32, i32
  }
  func.func @transform_3(%arg0: i32) -> (i32, i32) {
    %c0_i32 = arith.constant 0 : i32
    %c0_i32_0 = arith.constant 0 : i32
    %c0_i32_1 = arith.constant 0 : i32
    return %c0_i32, %c0_i32_0 : i32, i32
  }
  func.func @transform_4(%arg0: i32) -> (i32, i32) {
    %c0_i32 = arith.constant 0 : i32
    %c0_i32_0 = arith.constant 0 : i32
    %c0_i32_1 = arith.constant 0 : i32
    return %c0_i32, %c0_i32_0 : i32, i32
  }
  func.func @transform_5(%arg0: i32) -> (i32, i32) {
    %c0_i32 = arith.constant 0 : i32
    %c0_i32_0 = arith.constant 0 : i32
    %c0_i32_1 = arith.constant 0 : i32
    return %c0_i32, %c0_i32_0 : i32, i32
  }
  func.func @transform_6(%arg0: i32) -> (i32, i32) {
    %c0_i32 = arith.constant 0 : i32
    %c0_i32_0 = arith.constant 0 : i32
    %c0_i32_1 = arith.constant 0 : i32
    return %c0_i32, %c0_i32_0 : i32, i32
  }
  func.func @transform_7(%arg0: i32) -> (i32, i32) {
    %c0_i32 = arith.constant 0 : i32
    %c0_i32_0 = arith.constant 0 : i32
    %c0_i32_1 = arith.constant 0 : i32
    return %c0_i32, %c0_i32_0 : i32, i32
  }
  func.func @transform_8(%arg0: i32) -> (i32, i32) {
    %c0_i32 = arith.constant 0 : i32
    %c0_i32_0 = arith.constant 0 : i32
    %c0_i32_1 = arith.constant 0 : i32
    return %c0_i32, %c0_i32_0 : i32, i32
  }
  func.func @transform_9(%arg0: i32) -> (i32, i32) {
    %c0_i32 = arith.constant 0 : i32
    %c0_i32_0 = arith.constant 0 : i32
    %c0_i32_1 = arith.constant 0 : i32
    return %c0_i32, %c0_i32_0 : i32, i32
  }
  func.func @transform_10(%arg0: i32) -> (i32, i32) {
    %c0_i32 = arith.constant 0 : i32
    %c0_i32_0 = arith.constant 0 : i32
    %c0_i32_1 = arith.constant 0 : i32
    return %c0_i32, %c0_i32_0 : i32, i32
  }
  func.func @transform_11(%arg0: i32) -> (i32, i32) {
    %c0_i32 = arith.constant 0 : i32
    %c0_i32_0 = arith.constant 0 : i32
    %c0_i32_1 = arith.constant 0 : i32
    return %c0_i32, %c0_i32_0 : i32, i32
  }
  func.func @transform_12(%arg0: i32) -> (i32, i32) {
    %c0_i32 = arith.constant 0 : i32
    %c0_i32_0 = arith.constant 0 : i32
    return %arg0, %c0_i32 : i32, i32
  }
  func.func @transform_13(%arg0: i32) -> (i32, i32) {
    %c0_i32 = arith.constant 0 : i32
    %c0_i32_0 = arith.constant 0 : i32
    return %arg0, %c0_i32 : i32, i32
  }
}

</mosaic_0001>

<llo_original>
// kernel: autoencoder_forward.1
$region0: #{autoencoder_forward.1}
  #allocation0 [shape = 'u32[]', space=smem, size = 0x4, offset = 0x4, fixed_abs, tag = 'smem constant byte address 0x4 - core index']
  #allocation1 [shape = 'u32[144,128]{1,0:T(1,128)}', space=vmem, size = 0x12000, scoped, tag = 'internal scratch']
  %s0 = inlined_call_operand.vmem [shape: f32[64,784], index: 0, kind: input, shape index: {}]
  %s1 = inlined_call_operand.vmem [shape: bf16[784,512], index: 1, kind: input, shape index: {}]
  %s2 = inlined_call_operand.vmem [shape: bf16[512,256], index: 2, kind: input, shape index: {}]
  %s3 = inlined_call_operand.vmem [shape: bf16[256,128], index: 3, kind: input, shape index: {}]
  %s4 = inlined_call_operand.vmem [shape: bf16[128,64], index: 4, kind: input, shape index: {}]
  %s5 = inlined_call_operand.vmem [shape: bf16[64,128], index: 5, kind: input, shape index: {}]
  %s6 = inlined_call_operand.vmem [shape: bf16[128,64], index: 6, kind: input, shape index: {}]
  %s7 = inlined_call_operand.vmem [shape: bf16[64,128], index: 7, kind: input, shape index: {}]
  %s8 = inlined_call_operand.vmem [shape: bf16[128,256], index: 8, kind: input, shape index: {}]
  %s9 = inlined_call_operand.vmem [shape: bf16[256,512], index: 9, kind: input, shape index: {}]
  %s10 = inlined_call_operand.vmem [shape: bf16[512,784], index: 10, kind: input, shape index: {}]
  %s11 = inlined_call_operand.vmem [shape: f32[1,2832], index: 11, kind: input, shape index: {}]
  %s12 = inlined_call_operand.hbm [shape: f32[64,784], index: 12, kind: output, shape index: {0}]
  %s13 = inlined_call_operand.vmem [shape: f32[64,128], index: 13, kind: output, shape index: {1}]
  %14 = xla_tuple %s12, %s13
  %s15 = sld [smem:[#allocation0]]
  $region66: #{autoencoder_forward.1} parent=0
    _
  %s17 = ssub.s32 1, %s15
  %s18 = scalar_select 0, %s17, %s15
  $region1: #{autoencoder_forward.1} parent=0
    #allocation2 [shape = 'u8[229376]{0}', space=vmem, size = 0x38000, scoped, tag = 'output window, operand 0, single buffered']
    #allocation3 [shape = 's32[1]{0}', space=sflag, size = 0x4, scoped, tag = 'scoped memory for autoencoder_forward.1']
    %19 = vsyncpa [#allocation3], 0
    // Predicated region
    $region2: #{autoencoder_forward.1} parent=1 // pred_check
      _
    $region3: #{autoencoder_forward.1} parent=1 // pred_check_branch
      %21 = sbr.rel (0) target = $region5
    $region4: #{autoencoder_forward.1} parent=1 // pred_region
      _
    $region5: #{autoencoder_forward.1} parent=1 // pred_fallthru
      _
    // Predicated region
    $region6: #{autoencoder_forward.1} parent=1 // pred_check
      _
    $region7: #{autoencoder_forward.1} parent=1 // pred_check_branch
      %23 = sbr.rel (0) target = $region9
    $region8: #{autoencoder_forward.1} parent=1 // pred_region
      _
    $region9: #{autoencoder_forward.1} parent=1 // pred_fallthru
      _
    // Predicated region
    $region10: #{autoencoder_forward.1} parent=1 // pred_check
      _
    $region11: #{autoencoder_forward.1} parent=1 // pred_check_branch
      %25 = sbr.rel (0) target = $region13
    $region12: #{autoencoder_forward.1} parent=1 // pred_region
      _
    $region13: #{autoencoder_forward.1} parent=1 // pred_fallthru
      _
    // Predicated region
    $region14: #{autoencoder_forward.1} parent=1 // pred_check
      _
    $region15: #{autoencoder_forward.1} parent=1 // pred_check_branch
      %27 = sbr.rel (0) target = $region17
    $region16: #{autoencoder_forward.1} parent=1 // pred_region
      _
    $region17: #{autoencoder_forward.1} parent=1 // pred_fallthru
      _
    // Predicated region
    $region18: #{autoencoder_forward.1} parent=1 // pred_check
      _
    $region19: #{autoencoder_forward.1} parent=1 // pred_check_branch
      %29 = sbr.rel (0) target = $region21
    $region20: #{autoencoder_forward.1} parent=1 // pred_region
      _
    $region21: #{autoencoder_forward.1} parent=1 // pred_fallthru
      _
    // Predicated region
    $region22: #{autoencoder_forward.1} parent=1 // pred_check
      _
    $region23: #{autoencoder_forward.1} parent=1 // pred_check_branch
      %31 = sbr.rel (0) target = $region25
    $region24: #{autoencoder_forward.1} parent=1 // pred_region
      _
    $region25: #{autoencoder_forward.1} parent=1 // pred_fallthru
      _
    // Predicated region
    $region26: #{autoencoder_forward.1} parent=1 // pred_check
      _
    $region27: #{autoencoder_forward.1} parent=1 // pred_check_branch
      %33 = sbr.rel (0) target = $region29
    $region28: #{autoencoder_forward.1} parent=1 // pred_region
      _
    $region29: #{autoencoder_forward.1} parent=1 // pred_fallthru
      _
    // Predicated region
    $region30: #{autoencoder_forward.1} parent=1 // pred_check
      _
    $region31: #{autoencoder_forward.1} parent=1 // pred_check_branch
      %35 = sbr.rel (0) target = $region33
    $region32: #{autoencoder_forward.1} parent=1 // pred_region
      _
    $region33: #{autoencoder_forward.1} parent=1 // pred_fallthru
      _
    // Predicated region
    $region34: #{autoencoder_forward.1} parent=1 // pred_check
      _
    $region35: #{autoencoder_forward.1} parent=1 // pred_check_branch
      %37 = sbr.rel (0) target = $region37
    $region36: #{autoencoder_forward.1} parent=1 // pred_region
      _
    $region37: #{autoencoder_forward.1} parent=1 // pred_fallthru
      _
    // Predicated region
    $region38: #{autoencoder_forward.1} parent=1 // pred_check
      _
    $region39: #{autoencoder_forward.1} parent=1 // pred_check_branch
      %39 = sbr.rel (0) target = $region41
    $region40: #{autoencoder_forward.1} parent=1 // pred_region
      _
    $region41: #{autoencoder_forward.1} parent=1 // pred_fallthru
      _
    // Predicated region
    $region42: #{autoencoder_forward.1} parent=1 // pred_check
      _
    $region43: #{autoencoder_forward.1} parent=1 // pred_check_branch
      %41 = sbr.rel (0) target = $region45
    $region44: #{autoencoder_forward.1} parent=1 // pred_region
      _
    $region45: #{autoencoder_forward.1} parent=1 // pred_fallthru
      _
    // Predicated region
    $region46: #{autoencoder_forward.1} parent=1 // pred_check
      _
    $region47: #{autoencoder_forward.1} parent=1 // pred_check_branch
      %43 = sbr.rel (0) target = $region49
    $region48: #{autoencoder_forward.1} parent=1 // pred_region
      _
    $region49: #{autoencoder_forward.1} parent=1 // pred_fallthru
      _
    %v46 = vld [vmem:[%s0] sm:$0xff]
    %v47 = vld [vmem:[%s0 + $0x8] sm:$0xff]
    %v48 = vld [vmem:[%s0 + $0x10] sm:$0xff]
    %v49 = vld [vmem:[%s0 + $0x18] sm:$0xff]
    %v50 = vld [vmem:[%s0 + $0x20] sm:$0xff]
    %v51 = vld [vmem:[%s0 + $0x28] sm:$0xff]
    %v52 = vld [vmem:[%s0 + $0x30] sm:$0xff]
    %v53 = vld [vmem:[%s0 + $0x38] sm:$0xff]
    %v54 = vld [vmem:[%s0 + $0x40] sm:$0xff]
    %v55 = vld [vmem:[%s0 + $0x48] sm:$0xff]
    %v56 = vld [vmem:[%s0 + $0x50] sm:$0xff]
    %v57 = vld [vmem:[%s0 + $0x58] sm:$0xff]
    %v58 = vld [vmem:[%s0 + $0x60] sm:$0xff]
    %v59 = vld [vmem:[%s0 + $0x68] sm:$0xff]
    %v60 = vld [vmem:[%s0 + $0x70] sm:$0xff]
    %v61 = vld [vmem:[%s0 + $0x78] sm:$0xff]
    %v62 = vld [vmem:[%s0 + $0x80] sm:$0xff]
    %v63 = vld [vmem:[%s0 + $0x88] sm:$0xff]
    %v64 = vld [vmem:[%s0 + $0x90] sm:$0xff]
    %v65 = vld [vmem:[%s0 + $0x98] sm:$0xff]
    %v66 = vld [vmem:[%s0 + $0xa0] sm:$0xff]
    %v67 = vld [vmem:[%s0 + $0xa8] sm:$0xff]
    %v68 = vld [vmem:[%s0 + $0xb0] sm:$0xff]
    %v69 = vld [vmem:[%s0 + $0xb8] sm:$0xff]
    %v70 = vld [vmem:[%s0 + $0xc0] sm:$0xff]
    %v71 = vld [vmem:[%s0 + $0xc8] sm:$0xff]
    %v72 = vld [vmem:[%s0 + $0xd0] sm:$0xff]
    %v73 = vld [vmem:[%s0 + $0xd8] sm:$0xff]
    %v74 = vld [vmem:[%s0 + $0xe0] sm:$0xff]
    %v75 = vld [vmem:[%s0 + $0xe8] sm:$0xff]
    %v76 = vld [vmem:[%s0 + $0xf0] sm:$0xff]
    %v77 = vld [vmem:[%s0 + $0xf8] sm:$0xff]
    %v78 = vld [vmem:[%s0 + $0x100] sm:$0xff]
    %v79 = vld [vmem:[%s0 + $0x108] sm:$0xff]
    %v80 = vld [vmem:[%s0 + $0x110] sm:$0xff]
    %v81 = vld [vmem:[%s0 + $0x118] sm:$0xff]
    %v82 = vld [vmem:[%s0 + $0x120] sm:$0xff]
    %v83 = vld [vmem:[%s0 + $0x128] sm:$0xff]
    %v84 = vld [vmem:[%s0 + $0x130] sm:$0xff]
    %v85 = vld [vmem:[%s0 + $0x138] sm:$0xff]
    %v86 = vld [vmem:[%s0 + $0x140] sm:$0xff]
    %v87 = vld [vmem:[%s0 + $0x148] sm:$0xff]
    %v88 = vld [vmem:[%s0 + $0x150] sm:$0xff]
    %v89 = vld [vmem:[%s0 + $0x158] sm:$0xff]
    %v90 = vld [vmem:[%s0 + $0x160] sm:$0xff]
    %v91 = vld [vmem:[%s0 + $0x168] sm:$0xff]
    %v92 = vld [vmem:[%s0 + $0x170] sm:$0xff]
    %v93 = vld [vmem:[%s0 + $0x178] sm:$0xff]
    %v94 = vld [vmem:[%s0 + $0x180] sm:$0xff]
    %v95 = vld [vmem:[%s0 + $0x188] sm:$0xff]
    %v96 = vld [vmem:[%s0 + $0x190] sm:$0xff]
    %v97 = vld [vmem:[%s0 + $0x198] sm:$0xff]
    %v98 = vld [vmem:[%s0 + $0x1a0] sm:$0xff]
    %v99 = vld [vmem:[%s0 + $0x1a8] sm:$0xff]
    %v100 = vld [vmem:[%s0 + $0x1b0] sm:$0xff]
    %v101 = vld [vmem:[%s0 + $0x1b8] sm:$0xff]
    %v102 = vpack.c.bf16 %v53, %v46
    %v103 = vpack.c.bf16 %v54, %v47
    %v104 = vpack.c.bf16 %v55, %v48
    %v105 = vpack.c.bf16 %v56, %v49
    %v106 = vpack.c.bf16 %v57, %v50
    %v107 = vpack.c.bf16 %v58, %v51
    %v108 = vpack.c.bf16 %v59, %v52
    %v109 = vpack.c.bf16 %v67, %v60
    %v110 = vpack.c.bf16 %v68, %v61
    %v111 = vpack.c.bf16 %v69, %v62
    %v112 = vpack.c.bf16 %v70, %v63
    %v113 = vpack.c.bf16 %v71, %v64
    %v114 = vpack.c.bf16 %v72, %v65
    %v115 = vpack.c.bf16 %v73, %v66
    %v116 = vpack.c.bf16 %v81, %v74
    %v117 = vpack.c.bf16 %v82, %v75
    %v118 = vpack.c.bf16 %v83, %v76
    %v119 = vpack.c.bf16 %v84, %v77
    %v120 = vpack.c.bf16 %v85, %v78
    %v121 = vpack.c.bf16 %v86, %v79
    %v122 = vpack.c.bf16 %v87, %v80
    %v123 = vpack.c.bf16 %v95, %v88
    %v124 = vpack.c.bf16 %v96, %v89
    %v125 = vpack.c.bf16 %v97, %v90
    %v126 = vpack.c.bf16 %v98, %v91
    %v127 = vpack.c.bf16 %v99, %v92
    %v128 = vpack.c.bf16 %v100, %v93
    %v129 = vpack.c.bf16 %v101, %v94
    %v130 = vld [vmem:[%s1] sm:$0xff]
    %v131 = vld [vmem:[%s1 + $0x8] sm:$0xff]
    %v132 = vld [vmem:[%s1 + $0x10] sm:$0xff]
    %v133 = vld [vmem:[%s1 + $0x18] sm:$0xff]
    %v134 = vld [vmem:[%s1 + $0x20] sm:$0xff]
    %v135 = vld [vmem:[%s1 + $0x28] sm:$0xff]
    %v136 = vld [vmem:[%s1 + $0x30] sm:$0xff]
    %v137 = vld [vmem:[%s1 + $0x38] sm:$0xff]
    %v138 = vld [vmem:[%s1 + $0x40] sm:$0xff]
    %v139 = vld [vmem:[%s1 + $0x48] sm:$0xff]
    %v140 = vld [vmem:[%s1 + $0x50] sm:$0xff]
    %v141 = vld [vmem:[%s1 + $0x58] sm:$0xff]
    %v142 = vld [vmem:[%s1 + $0x60] sm:$0xff]
    %v143 = vld [vmem:[%s1 + $0x68] sm:$0xff]
    %v144 = vld [vmem:[%s1 + $0x70] sm:$0xff]
    %v145 = vld [vmem:[%s1 + $0x78] sm:$0xff]
    %v146 = vld [vmem:[%s1 + $0x80] sm:$0xff]
    %v147 = vld [vmem:[%s1 + $0x88] sm:$0xff]
    %v148 = vld [vmem:[%s1 + $0x90] sm:$0xff]
    %v149 = vld [vmem:[%s1 + $0x98] sm:$0xff]
    %v150 = vld [vmem:[%s1 + $0xa0] sm:$0xff]
    %v151 = vld [vmem:[%s1 + $0xa8] sm:$0xff]
    %v152 = vld [vmem:[%s1 + $0xb0] sm:$0xff]
    %v153 = vld [vmem:[%s1 + $0xb8] sm:$0xff]
    %v154 = vld [vmem:[%s1 + $0xc0] sm:$0xff]
    %v155 = vld [vmem:[%s1 + $0xc8] sm:$0xff]
    %v156 = vld [vmem:[%s1 + $0xd0] sm:$0xff]
    %v157 = vld [vmem:[%s1 + $0xd8] sm:$0xff]
    %v158 = vld [vmem:[%s1 + $0xe0] sm:$0xff]
    %v159 = vld [vmem:[%s1 + $0xe8] sm:$0xff]
    %v160 = vld [vmem:[%s1 + $0xf0] sm:$0xff]
    %v161 = vld [vmem:[%s1 + $0xf8] sm:$0xff]
    %v162 = vld [vmem:[%s1 + $0x100] sm:$0xff]
    %v163 = vld [vmem:[%s1 + $0x108] sm:$0xff]
    %v164 = vld [vmem:[%s1 + $0x110] sm:$0xff]
    %v165 = vld [vmem:[%s1 + $0x118] sm:$0xff]
    %v166 = vld [vmem:[%s1 + $0x120] sm:$0xff]
    %v167 = vld [vmem:[%s1 + $0x128] sm:$0xff]
    %v168 = vld [vmem:[%s1 + $0x130] sm:$0xff]
    %v169 = vld [vmem:[%s1 + $0x138] sm:$0xff]
    %v170 = vld [vmem:[%s1 + $0x140] sm:$0xff]
    %v171 = vld [vmem:[%s1 + $0x148] sm:$0xff]
    %v172 = vld [vmem:[%s1 + $0x150] sm:$0xff]
    %v173 = vld [vmem:[%s1 + $0x158] sm:$0xff]
    %v174 = vld [vmem:[%s1 + $0x160] sm:$0xff]
    %v175 = vld [vmem:[%s1 + $0x168] sm:$0xff]
    %v176 = vld [vmem:[%s1 + $0x170] sm:$0xff]
    %v177 = vld [vmem:[%s1 + $0x178] sm:$0xff]
    %v178 = vld [vmem:[%s1 + $0x180] sm:$0xff]
    %v179 = vld [vmem:[%s1 + $0x188] sm:$0xff]
    %v180 = vld [vmem:[%s1 + $0x190] sm:$0xff]
    %v181 = vld [vmem:[%s1 + $0x198] sm:$0xff]
    %v182 = vld [vmem:[%s1 + $0x1a0] sm:$0xff]
    %v183 = vld [vmem:[%s1 + $0x1a8] sm:$0xff]
    %v184 = vld [vmem:[%s1 + $0x1b0] sm:$0xff]
    %v185 = vld [vmem:[%s1 + $0x1b8] sm:$0xff]
    %v186 = vld [vmem:[%s1 + $0x1c0] sm:$0xff]
    %v187 = vld [vmem:[%s1 + $0x1c8] sm:$0xff]
    %v188 = vld [vmem:[%s1 + $0x1d0] sm:$0xff]
    %v189 = vld [vmem:[%s1 + $0x1d8] sm:$0xff]
    %v190 = vld [vmem:[%s1 + $0x1e0] sm:$0xff]
    %v191 = vld [vmem:[%s1 + $0x1e8] sm:$0xff]
    %v192 = vld [vmem:[%s1 + $0x1f0] sm:$0xff]
    %v193 = vld [vmem:[%s1 + $0x1f8] sm:$0xff]
    %v194 = vld [vmem:[%s1 + $0x200] sm:$0xff]
    %v195 = vld [vmem:[%s1 + $0x208] sm:$0xff]
    %v196 = vld [vmem:[%s1 + $0x210] sm:$0xff]
    %v197 = vld [vmem:[%s1 + $0x218] sm:$0xff]
    %v198 = vld [vmem:[%s1 + $0x220] sm:$0xff]
    %v199 = vld [vmem:[%s1 + $0x228] sm:$0xff]
    %v200 = vld [vmem:[%s1 + $0x230] sm:$0xff]
    %v201 = vld [vmem:[%s1 + $0x238] sm:$0xff]
    %v202 = vld [vmem:[%s1 + $0x240] sm:$0xff]
    %v203 = vld [vmem:[%s1 + $0x248] sm:$0xff]
    %v204 = vld [vmem:[%s1 + $0x250] sm:$0xff]
    %v205 = vld [vmem:[%s1 + $0x258] sm:$0xff]
    %v206 = vld [vmem:[%s1 + $0x260] sm:$0xff]
    %v207 = vld [vmem:[%s1 + $0x268] sm:$0xff]
    %v208 = vld [vmem:[%s1 + $0x270] sm:$0xff]
    %v209 = vld [vmem:[%s1 + $0x278] sm:$0xff]
    %v210 = vld [vmem:[%s1 + $0x280] sm:$0xff]
    %v211 = vld [vmem:[%s1 + $0x288] sm:$0xff]
    %v212 = vld [vmem:[%s1 + $0x290] sm:$0xff]
    %v213 = vld [vmem:[%s1 + $0x298] sm:$0xff]
    %v214 = vld [vmem:[%s1 + $0x2a0] sm:$0xff]
    %v215 = vld [vmem:[%s1 + $0x2a8] sm:$0xff]
    %v216 = vld [vmem:[%s1 + $0x2b0] sm:$0xff]
    %v217 = vld [vmem:[%s1 + $0x2b8] sm:$0xff]
    %v218 = vld [vmem:[%s1 + $0x2c0] sm:$0xff]
    %v219 = vld [vmem:[%s1 + $0x2c8] sm:$0xff]
    %v220 = vld [vmem:[%s1 + $0x2d0] sm:$0xff]
    %v221 = vld [vmem:[%s1 + $0x2d8] sm:$0xff]
    %v222 = vld [vmem:[%s1 + $0x2e0] sm:$0xff]
    %v223 = vld [vmem:[%s1 + $0x2e8] sm:$0xff]
    %v224 = vld [vmem:[%s1 + $0x2f0] sm:$0xff]
    %v225 = vld [vmem:[%s1 + $0x2f8] sm:$0xff]
    %v226 = vld [vmem:[%s1 + $0x300] sm:$0xff]
    %v227 = vld [vmem:[%s1 + $0x308] sm:$0xff]
    %v228 = vld [vmem:[%s1 + $0x310] sm:$0xff]
    %v229 = vld [vmem:[%s1 + $0x318] sm:$0xff]
    %v230 = vld [vmem:[%s1 + $0x320] sm:$0xff]
    %v231 = vld [vmem:[%s1 + $0x328] sm:$0xff]
    %v232 = vld [vmem:[%s1 + $0x330] sm:$0xff]
    %v233 = vld [vmem:[%s1 + $0x338] sm:$0xff]
    %v234 = vld [vmem:[%s1 + $0x340] sm:$0xff]
    %v235 = vld [vmem:[%s1 + $0x348] sm:$0xff]
    %v236 = vld [vmem:[%s1 + $0x350] sm:$0xff]
    %v237 = vld [vmem:[%s1 + $0x358] sm:$0xff]
    %v238 = vld [vmem:[%s1 + $0x360] sm:$0xff]
    %v239 = vld [vmem:[%s1 + $0x368] sm:$0xff]
    %v240 = vld [vmem:[%s1 + $0x370] sm:$0xff]
    %v241 = vld [vmem:[%s1 + $0x378] sm:$0xff]
    %v242 = vld [vmem:[%s1 + $0x380] sm:$0xff]
    %v243 = vld [vmem:[%s1 + $0x388] sm:$0xff]
    %v244 = vld [vmem:[%s1 + $0x390] sm:$0xff]
    %v245 = vld [vmem:[%s1 + $0x398] sm:$0xff]
    %v246 = vld [vmem:[%s1 + $0x3a0] sm:$0xff]
    %v247 = vld [vmem:[%s1 + $0x3a8] sm:$0xff]
    %v248 = vld [vmem:[%s1 + $0x3b0] sm:$0xff]
    %v249 = vld [vmem:[%s1 + $0x3b8] sm:$0xff]
    %v250 = vld [vmem:[%s1 + $0x3c0] sm:$0xff]
    %v251 = vld [vmem:[%s1 + $0x3c8] sm:$0xff]
    %v252 = vld [vmem:[%s1 + $0x3d0] sm:$0xff]
    %v253 = vld [vmem:[%s1 + $0x3d8] sm:$0xff]
    %v254 = vld [vmem:[%s1 + $0x3e0] sm:$0xff]
    %v255 = vld [vmem:[%s1 + $0x3e8] sm:$0xff]
    %v256 = vld [vmem:[%s1 + $0x3f0] sm:$0xff]
    %v257 = vld [vmem:[%s1 + $0x3f8] sm:$0xff]
    %v258 = vld [vmem:[%s1 + $0x400] sm:$0xff]
    %v259 = vld [vmem:[%s1 + $0x408] sm:$0xff]
    %v260 = vld [vmem:[%s1 + $0x410] sm:$0xff]
    %v261 = vld [vmem:[%s1 + $0x418] sm:$0xff]
    %v262 = vld [vmem:[%s1 + $0x420] sm:$0xff]
    %v263 = vld [vmem:[%s1 + $0x428] sm:$0xff]
    %v264 = vld [vmem:[%s1 + $0x430] sm:$0xff]
    %v265 = vld [vmem:[%s1 + $0x438] sm:$0xff]
    %v266 = vld [vmem:[%s1 + $0x440] sm:$0xff]
    %v267 = vld [vmem:[%s1 + $0x448] sm:$0xff]
    %v268 = vld [vmem:[%s1 + $0x450] sm:$0xff]
    %v269 = vld [vmem:[%s1 + $0x458] sm:$0xff]
    %v270 = vld [vmem:[%s1 + $0x460] sm:$0xff]
    %v271 = vld [vmem:[%s1 + $0x468] sm:$0xff]
    %v272 = vld [vmem:[%s1 + $0x470] sm:$0xff]
    %v273 = vld [vmem:[%s1 + $0x478] sm:$0xff]
    %v274 = vld [vmem:[%s1 + $0x480] sm:$0xff]
    %v275 = vld [vmem:[%s1 + $0x488] sm:$0xff]
    %v276 = vld [vmem:[%s1 + $0x490] sm:$0xff]
    %v277 = vld [vmem:[%s1 + $0x498] sm:$0xff]
    %v278 = vld [vmem:[%s1 + $0x4a0] sm:$0xff]
    %v279 = vld [vmem:[%s1 + $0x4a8] sm:$0xff]
    %v280 = vld [vmem:[%s1 + $0x4b0] sm:$0xff]
    %v281 = vld [vmem:[%s1 + $0x4b8] sm:$0xff]
    %v282 = vld [vmem:[%s1 + $0x4c0] sm:$0xff]
    %v283 = vld [vmem:[%s1 + $0x4c8] sm:$0xff]
    %v284 = vld [vmem:[%s1 + $0x4d0] sm:$0xff]
    %v285 = vld [vmem:[%s1 + $0x4d8] sm:$0xff]
    %v286 = vld [vmem:[%s1 + $0x4e0] sm:$0xff]
    %v287 = vld [vmem:[%s1 + $0x4e8] sm:$0xff]
    %v288 = vld [vmem:[%s1 + $0x4f0] sm:$0xff]
    %v289 = vld [vmem:[%s1 + $0x4f8] sm:$0xff]
    %v290 = vld [vmem:[%s1 + $0x500] sm:$0xff]
    %v291 = vld [vmem:[%s1 + $0x508] sm:$0xff]
    %v292 = vld [vmem:[%s1 + $0x510] sm:$0xff]
    %v293 = vld [vmem:[%s1 + $0x518] sm:$0xff]
    %v294 = vld [vmem:[%s1 + $0x520] sm:$0xff]
    %v295 = vld [vmem:[%s1 + $0x528] sm:$0xff]
    %v296 = vld [vmem:[%s1 + $0x530] sm:$0xff]
    %v297 = vld [vmem:[%s1 + $0x538] sm:$0xff]
    %v298 = vld [vmem:[%s1 + $0x540] sm:$0xff]
    %v299 = vld [vmem:[%s1 + $0x548] sm:$0xff]
    %v300 = vld [vmem:[%s1 + $0x550] sm:$0xff]
    %v301 = vld [vmem:[%s1 + $0x558] sm:$0xff]
    %v302 = vld [vmem:[%s1 + $0x560] sm:$0xff]
    %v303 = vld [vmem:[%s1 + $0x568] sm:$0xff]
    %v304 = vld [vmem:[%s1 + $0x570] sm:$0xff]
    %v305 = vld [vmem:[%s1 + $0x578] sm:$0xff]
    %v306 = vld [vmem:[%s1 + $0x580] sm:$0xff]
    %v307 = vld [vmem:[%s1 + $0x588] sm:$0xff]
    %v308 = vld [vmem:[%s1 + $0x590] sm:$0xff]
    %v309 = vld [vmem:[%s1 + $0x598] sm:$0xff]
    %v310 = vld [vmem:[%s1 + $0x5a0] sm:$0xff]
    %v311 = vld [vmem:[%s1 + $0x5a8] sm:$0xff]
    %v312 = vld [vmem:[%s1 + $0x5b0] sm:$0xff]
    %v313 = vld [vmem:[%s1 + $0x5b8] sm:$0xff]
    %v314 = vld [vmem:[%s1 + $0x5c0] sm:$0xff]
    %v315 = vld [vmem:[%s1 + $0x5c8] sm:$0xff]
    %v316 = vld [vmem:[%s1 + $0x5d0] sm:$0xff]
    %v317 = vld [vmem:[%s1 + $0x5d8] sm:$0xff]
    %v318 = vld [vmem:[%s1 + $0x5e0] sm:$0xff]
    %v319 = vld [vmem:[%s1 + $0x5e8] sm:$0xff]
    %v320 = vld [vmem:[%s1 + $0x5f0] sm:$0xff]
    %v321 = vld [vmem:[%s1 + $0x5f8] sm:$0xff]
    %v322 = vld [vmem:[%s1 + $0x600] sm:$0xff]
    %v323 = vld [vmem:[%s1 + $0x608] sm:$0xff]
    %v324 = vld [vmem:[%s1 + $0x610] sm:$0xff]
    %v325 = vld [vmem:[%s1 + $0x618] sm:$0xff]
    %v326 = vld [vmem:[%s11] sm:$0xf]
    %v523 = vunpack.c.l.b16 %v130
    %v524 = vunpack.c.h.b16 %v130
    %v525 = vunpack.c.l.b16 %v131
    %v526 = vunpack.c.h.b16 %v131
    %v527 = vunpack.c.l.b16 %v132
    %v528 = vunpack.c.h.b16 %v132
    %v529 = vunpack.c.l.b16 %v133
    %v530 = vunpack.c.h.b16 %v133
    %v531 = vunpack.c.l.b16 %v134
    %v532 = vunpack.c.h.b16 %v134
    %v533 = vunpack.c.l.b16 %v135
    %v534 = vunpack.c.h.b16 %v135
    %v535 = vunpack.c.l.b16 %v136
    %v536 = vunpack.c.h.b16 %v136
    %v537 = vunpack.c.l.b16 %v137
    %v538 = vunpack.c.h.b16 %v137
    %v539 = vunpack.c.l.b16 %v138
    %v540 = vunpack.c.h.b16 %v138
    %v541 = vunpack.c.l.b16 %v139
    %v542 = vunpack.c.h.b16 %v139
    %v543 = vunpack.c.l.b16 %v140
    %v544 = vunpack.c.h.b16 %v140
    %v545 = vunpack.c.l.b16 %v141
    %v546 = vunpack.c.h.b16 %v141
    %v547 = vunpack.c.l.b16 %v142
    %v548 = vunpack.c.h.b16 %v142
    %v549 = vunpack.c.l.b16 %v143
    %v550 = vunpack.c.h.b16 %v143
    %v551 = vunpack.c.l.b16 %v144
    %v552 = vunpack.c.h.b16 %v144
    %v553 = vunpack.c.l.b16 %v145
    %v554 = vunpack.c.h.b16 %v145
    %v555 = vunpack.c.l.b16 %v146
    %v556 = vunpack.c.h.b16 %v146
    %v557 = vunpack.c.l.b16 %v147
    %v558 = vunpack.c.h.b16 %v147
    %v559 = vunpack.c.l.b16 %v148
    %v560 = vunpack.c.h.b16 %v148
    %v561 = vunpack.c.l.b16 %v149
    %v562 = vunpack.c.h.b16 %v149
    %v563 = vunpack.c.l.b16 %v150
    %v564 = vunpack.c.h.b16 %v150
    %v565 = vunpack.c.l.b16 %v151
    %v566 = vunpack.c.h.b16 %v151
    %v567 = vunpack.c.l.b16 %v152
    %v568 = vunpack.c.h.b16 %v152
    %v569 = vunpack.c.l.b16 %v153
    %v570 = vunpack.c.h.b16 %v153
    %v571 = vunpack.c.l.b16 %v154
    %v572 = vunpack.c.h.b16 %v154
    %v573 = vunpack.c.l.b16 %v155
    %v574 = vunpack.c.h.b16 %v155
    %v575 = vunpack.c.l.b16 %v156
    %v576 = vunpack.c.h.b16 %v156
    %v577 = vunpack.c.l.b16 %v157
    %v578 = vunpack.c.h.b16 %v157
    %v579 = vunpack.c.l.b16 %v158
    %v580 = vunpack.c.h.b16 %v158
    %v581 = vunpack.c.l.b16 %v159
    %v582 = vunpack.c.h.b16 %v159
    %v583 = vunpack.c.l.b16 %v160
    %v584 = vunpack.c.h.b16 %v160
    %v585 = vunpack.c.l.b16 %v161
    %v586 = vunpack.c.h.b16 %v161
    %v587 = vunpack.c.l.b16 %v162
    %v588 = vunpack.c.h.b16 %v162
    %v589 = vunpack.c.l.b16 %v163
    %v590 = vunpack.c.h.b16 %v163
    %v591 = vunpack.c.l.b16 %v164
    %v592 = vunpack.c.h.b16 %v164
    %v593 = vunpack.c.l.b16 %v165
    %v594 = vunpack.c.h.b16 %v165
    %v595 = vunpack.c.l.b16 %v166
    %v596 = vunpack.c.h.b16 %v166
    %v597 = vunpack.c.l.b16 %v167
    %v598 = vunpack.c.h.b16 %v167
    %v599 = vunpack.c.l.b16 %v168
    %v600 = vunpack.c.h.b16 %v168
    %v601 = vunpack.c.l.b16 %v169
    %v602 = vunpack.c.h.b16 %v169
    %v603 = vunpack.c.l.b16 %v170
    %v604 = vunpack.c.h.b16 %v170
    %v605 = vunpack.c.l.b16 %v171
    %v606 = vunpack.c.h.b16 %v171
    %v607 = vunpack.c.l.b16 %v172
    %v608 = vunpack.c.h.b16 %v172
    %v609 = vunpack.c.l.b16 %v173
    %v610 = vunpack.c.h.b16 %v173
    %v611 = vunpack.c.l.b16 %v174
    %v612 = vunpack.c.h.b16 %v174
    %v613 = vunpack.c.l.b16 %v175
    %v614 = vunpack.c.h.b16 %v175
    %v615 = vunpack.c.l.b16 %v176
    %v616 = vunpack.c.h.b16 %v176
    %v617 = vunpack.c.l.b16 %v177
    %v618 = vunpack.c.h.b16 %v177
    %v619 = vunpack.c.l.b16 %v178
    %v620 = vunpack.c.h.b16 %v178
    %v621 = vunpack.c.l.b16 %v179
    %v622 = vunpack.c.h.b16 %v179
    %v623 = vunpack.c.l.b16 %v180
    %v624 = vunpack.c.h.b16 %v180
    %v625 = vunpack.c.l.b16 %v181
    %v626 = vunpack.c.h.b16 %v181
    %v627 = vunpack.c.l.b16 %v182
    %v628 = vunpack.c.h.b16 %v182
    %v629 = vunpack.c.l.b16 %v183
    %v630 = vunpack.c.h.b16 %v183
    %v631 = vunpack.c.l.b16 %v184
    %v632 = vunpack.c.h.b16 %v184
    %v633 = vunpack.c.l.b16 %v185
    %v634 = vunpack.c.h.b16 %v185
    %v635 = vunpack.c.l.b16 %v186
    %v636 = vunpack.c.h.b16 %v186
    %v637 = vunpack.c.l.b16 %v187
    %v638 = vunpack.c.h.b16 %v187
    %v639 = vunpack.c.l.b16 %v188
    %v640 = vunpack.c.h.b16 %v188
    %v641 = vunpack.c.l.b16 %v189
    %v642 = vunpack.c.h.b16 %v189
    %v643 = vunpack.c.l.b16 %v190
    %v644 = vunpack.c.h.b16 %v190
    %v645 = vunpack.c.l.b16 %v191
    %v646 = vunpack.c.h.b16 %v191
    %v647 = vunpack.c.l.b16 %v192
    %v648 = vunpack.c.h.b16 %v192
    %v649 = vunpack.c.l.b16 %v193
    %v650 = vunpack.c.h.b16 %v193
    %v651 = vunpack.c.l.b16 %v194
    %v652 = vunpack.c.h.b16 %v194
    %v653 = vunpack.c.l.b16 %v195
    %v654 = vunpack.c.h.b16 %v195
    %v655 = vunpack.c.l.b16 %v196
    %v656 = vunpack.c.h.b16 %v196
    %v657 = vunpack.c.l.b16 %v197
    %v658 = vunpack.c.h.b16 %v197
    %v659 = vunpack.c.l.b16 %v198
    %v660 = vunpack.c.h.b16 %v198
    %v661 = vunpack.c.l.b16 %v199
    %v662 = vunpack.c.h.b16 %v199
    %v663 = vunpack.c.l.b16 %v200
    %v664 = vunpack.c.h.b16 %v200
    %v665 = vunpack.c.l.b16 %v201
    %v666 = vunpack.c.h.b16 %v201
    %v667 = vunpack.c.l.b16 %v202
    %v668 = vunpack.c.h.b16 %v202
    %v669 = vunpack.c.l.b16 %v203
    %v670 = vunpack.c.h.b16 %v203
    %v671 = vunpack.c.l.b16 %v204
    %v672 = vunpack.c.h.b16 %v204
    %v673 = vunpack.c.l.b16 %v205
    %v674 = vunpack.c.h.b16 %v205
    %v675 = vunpack.c.l.b16 %v206
    %v676 = vunpack.c.h.b16 %v206
    %v677 = vunpack.c.l.b16 %v207
    %v678 = vunpack.c.h.b16 %v207
    %v679 = vunpack.c.l.b16 %v208
    %v680 = vunpack.c.h.b16 %v208
    %v681 = vunpack.c.l.b16 %v209
    %v682 = vunpack.c.h.b16 %v209
    %v683 = vunpack.c.l.b16 %v210
    %v684 = vunpack.c.h.b16 %v210
    %v685 = vunpack.c.l.b16 %v211
    %v686 = vunpack.c.h.b16 %v211
    %v687 = vunpack.c.l.b16 %v212
    %v688 = vunpack.c.h.b16 %v212
    %v689 = vunpack.c.l.b16 %v213
    %v690 = vunpack.c.h.b16 %v213
    %v691 = vunpack.c.l.b16 %v214
    %v692 = vunpack.c.h.b16 %v214
    %v693 = vunpack.c.l.b16 %v215
    %v694 = vunpack.c.h.b16 %v215
    %v695 = vunpack.c.l.b16 %v216
    %v696 = vunpack.c.h.b16 %v216
    %v697 = vunpack.c.l.b16 %v217
    %v698 = vunpack.c.h.b16 %v217
    %v699 = vunpack.c.l.b16 %v218
    %v700 = vunpack.c.h.b16 %v218
    %v701 = vunpack.c.l.b16 %v219
    %v702 = vunpack.c.h.b16 %v219
    %v703 = vunpack.c.l.b16 %v220
    %v704 = vunpack.c.h.b16 %v220
    %v705 = vunpack.c.l.b16 %v221
    %v706 = vunpack.c.h.b16 %v221
    %v707 = vunpack.c.l.b16 %v222
    %v708 = vunpack.c.h.b16 %v222
    %v709 = vunpack.c.l.b16 %v223
    %v710 = vunpack.c.h.b16 %v223
    %v711 = vunpack.c.l.b16 %v224
    %v712 = vunpack.c.h.b16 %v224
    %v713 = vunpack.c.l.b16 %v225
    %v714 = vunpack.c.h.b16 %v225
    %v715 = vunpack.c.l.b16 %v226
    %v716 = vunpack.c.h.b16 %v226
    %v717 = vunpack.c.l.b16 %v227
    %v718 = vunpack.c.h.b16 %v227
    %v719 = vunpack.c.l.b16 %v228
    %v720 = vunpack.c.h.b16 %v228
    %v721 = vunpack.c.l.b16 %v229
    %v722 = vunpack.c.h.b16 %v229
    %v723 = vunpack.c.l.b16 %v230
    %v724 = vunpack.c.h.b16 %v230
    %v725 = vunpack.c.l.b16 %v231
    %v726 = vunpack.c.h.b16 %v231
    %v727 = vunpack.c.l.b16 %v232
    %v728 = vunpack.c.h.b16 %v232
    %v729 = vunpack.c.l.b16 %v233
    %v730 = vunpack.c.h.b16 %v233
    %v731 = vunpack.c.l.b16 %v234
    %v732 = vunpack.c.h.b16 %v234
    %v733 = vunpack.c.l.b16 %v235
    %v734 = vunpack.c.h.b16 %v235
    %v735 = vunpack.c.l.b16 %v236
    %v736 = vunpack.c.h.b16 %v236
    %v737 = vunpack.c.l.b16 %v237
    %v738 = vunpack.c.h.b16 %v237
    %v739 = vunpack.c.l.b16 %v238
    %v740 = vunpack.c.h.b16 %v238
    %v741 = vunpack.c.l.b16 %v239
    %v742 = vunpack.c.h.b16 %v239
    %v743 = vunpack.c.l.b16 %v240
    %v744 = vunpack.c.h.b16 %v240
    %v745 = vunpack.c.l.b16 %v241
    %v746 = vunpack.c.h.b16 %v241
    %v747 = vunpack.c.l.b16 %v242
    %v748 = vunpack.c.h.b16 %v242
    %v749 = vunpack.c.l.b16 %v243
    %v750 = vunpack.c.h.b16 %v243
    %v751 = vunpack.c.l.b16 %v244
    %v752 = vunpack.c.h.b16 %v244
    %v753 = vunpack.c.l.b16 %v245
    %v754 = vunpack.c.h.b16 %v245
    %v755 = vunpack.c.l.b16 %v246
    %v756 = vunpack.c.h.b16 %v246
    %v757 = vunpack.c.l.b16 %v247
    %v758 = vunpack.c.h.b16 %v247
    %v759 = vunpack.c.l.b16 %v248
    %v760 = vunpack.c.h.b16 %v248
    %v761 = vunpack.c.l.b16 %v249
    %v762 = vunpack.c.h.b16 %v249
    %v763 = vunpack.c.l.b16 %v250
    %v764 = vunpack.c.h.b16 %v250
    %v765 = vunpack.c.l.b16 %v251
    %v766 = vunpack.c.h.b16 %v251
    %v767 = vunpack.c.l.b16 %v252
    %v768 = vunpack.c.h.b16 %v252
    %v769 = vunpack.c.l.b16 %v253
    %v770 = vunpack.c.h.b16 %v253
    %v771 = vunpack.c.l.b16 %v254
    %v772 = vunpack.c.h.b16 %v254
    %v773 = vunpack.c.l.b16 %v255
    %v774 = vunpack.c.h.b16 %v255
    %v775 = vunpack.c.l.b16 %v256
    %v776 = vunpack.c.h.b16 %v256
    %v777 = vunpack.c.l.b16 %v257
    %v778 = vunpack.c.h.b16 %v257
    %v779 = vunpack.c.l.b16 %v258
    %v780 = vunpack.c.h.b16 %v258
    %v781 = vunpack.c.l.b16 %v259
    %v782 = vunpack.c.h.b16 %v259
    %v783 = vunpack.c.l.b16 %v260
    %v784 = vunpack.c.h.b16 %v260
    %v785 = vunpack.c.l.b16 %v261
    %v786 = vunpack.c.h.b16 %v261
    %v787 = vunpack.c.l.b16 %v262
    %v788 = vunpack.c.h.b16 %v262
    %v789 = vunpack.c.l.b16 %v263
    %v790 = vunpack.c.h.b16 %v263
    %v791 = vunpack.c.l.b16 %v264
    %v792 = vunpack.c.h.b16 %v264
    %v793 = vunpack.c.l.b16 %v265
    %v794 = vunpack.c.h.b16 %v265
    %v795 = vunpack.c.l.b16 %v266
    %v796 = vunpack.c.h.b16 %v266
    %v797 = vunpack.c.l.b16 %v267
    %v798 = vunpack.c.h.b16 %v267
    %v799 = vunpack.c.l.b16 %v268
    %v800 = vunpack.c.h.b16 %v268
    %v801 = vunpack.c.l.b16 %v269
    %v802 = vunpack.c.h.b16 %v269
    %v803 = vunpack.c.l.b16 %v270
    %v804 = vunpack.c.h.b16 %v270
    %v805 = vunpack.c.l.b16 %v271
    %v806 = vunpack.c.h.b16 %v271
    %v807 = vunpack.c.l.b16 %v272
    %v808 = vunpack.c.h.b16 %v272
    %v809 = vunpack.c.l.b16 %v273
    %v810 = vunpack.c.h.b16 %v273
    %v811 = vunpack.c.l.b16 %v274
    %v812 = vunpack.c.h.b16 %v274
    %v813 = vunpack.c.l.b16 %v275
    %v814 = vunpack.c.h.b16 %v275
    %v815 = vunpack.c.l.b16 %v276
    %v816 = vunpack.c.h.b16 %v276
    %v817 = vunpack.c.l.b16 %v277
    %v818 = vunpack.c.h.b16 %v277
    %v819 = vunpack.c.l.b16 %v278
    %v820 = vunpack.c.h.b16 %v278
    %v821 = vunpack.c.l.b16 %v279
    %v822 = vunpack.c.h.b16 %v279
    %v823 = vunpack.c.l.b16 %v280
    %v824 = vunpack.c.h.b16 %v280
    %v825 = vunpack.c.l.b16 %v281
    %v826 = vunpack.c.h.b16 %v281
    %v827 = vunpack.c.l.b16 %v282
    %v828 = vunpack.c.h.b16 %v282
    %v829 = vunpack.c.l.b16 %v283
    %v830 = vunpack.c.h.b16 %v283
    %v831 = vunpack.c.l.b16 %v284
    %v832 = vunpack.c.h.b16 %v284
    %v833 = vunpack.c.l.b16 %v285
    %v834 = vunpack.c.h.b16 %v285
    %v835 = vunpack.c.l.b16 %v286
    %v836 = vunpack.c.h.b16 %v286
    %v837 = vunpack.c.l.b16 %v287
    %v838 = vunpack.c.h.b16 %v287
    %v839 = vunpack.c.l.b16 %v288
    %v840 = vunpack.c.h.b16 %v288
    %v841 = vunpack.c.l.b16 %v289
    %v842 = vunpack.c.h.b16 %v289
    %v843 = vunpack.c.l.b16 %v290
    %v844 = vunpack.c.h.b16 %v290
    %v845 = vunpack.c.l.b16 %v291
    %v846 = vunpack.c.h.b16 %v291
    %v847 = vunpack.c.l.b16 %v292
    %v848 = vunpack.c.h.b16 %v292
    %v849 = vunpack.c.l.b16 %v293
    %v850 = vunpack.c.h.b16 %v293
    %v851 = vunpack.c.l.b16 %v294
    %v852 = vunpack.c.h.b16 %v294
    %v853 = vunpack.c.l.b16 %v295
    %v854 = vunpack.c.h.b16 %v295
    %v855 = vunpack.c.l.b16 %v296
    %v856 = vunpack.c.h.b16 %v296
    %v857 = vunpack.c.l.b16 %v297
    %v858 = vunpack.c.h.b16 %v297
    %v859 = vunpack.c.l.b16 %v298
    %v860 = vunpack.c.h.b16 %v298
    %v861 = vunpack.c.l.b16 %v299
    %v862 = vunpack.c.h.b16 %v299
    %v863 = vunpack.c.l.b16 %v300
    %v864 = vunpack.c.h.b16 %v300
    %v865 = vunpack.c.l.b16 %v301
    %v866 = vunpack.c.h.b16 %v301
    %v867 = vunpack.c.l.b16 %v302
    %v868 = vunpack.c.h.b16 %v302
    %v869 = vunpack.c.l.b16 %v303
    %v870 = vunpack.c.h.b16 %v303
    %v871 = vunpack.c.l.b16 %v304
    %v872 = vunpack.c.h.b16 %v304
    %v873 = vunpack.c.l.b16 %v305
    %v874 = vunpack.c.h.b16 %v305
    %v875 = vunpack.c.l.b16 %v306
    %v876 = vunpack.c.h.b16 %v306
    %v877 = vunpack.c.l.b16 %v307
    %v878 = vunpack.c.h.b16 %v307
    %v879 = vunpack.c.l.b16 %v308
    %v880 = vunpack.c.h.b16 %v308
    %v881 = vunpack.c.l.b16 %v309
    %v882 = vunpack.c.h.b16 %v309
    %v883 = vunpack.c.l.b16 %v310
    %v884 = vunpack.c.h.b16 %v310
    %v885 = vunpack.c.l.b16 %v311
    %v886 = vunpack.c.h.b16 %v311
    %v887 = vunpack.c.l.b16 %v312
    %v888 = vunpack.c.h.b16 %v312
    %v889 = vunpack.c.l.b16 %v313
    %v890 = vunpack.c.h.b16 %v313
    %v891 = vunpack.c.l.b16 %v314
    %v892 = vunpack.c.h.b16 %v314
    %v893 = vunpack.c.l.b16 %v315
    %v894 = vunpack.c.h.b16 %v315
    %v895 = vunpack.c.l.b16 %v316
    %v896 = vunpack.c.h.b16 %v316
    %v897 = vunpack.c.l.b16 %v317
    %v898 = vunpack.c.h.b16 %v317
    %v899 = vunpack.c.l.b16 %v318
    %v900 = vunpack.c.h.b16 %v318
    %v901 = vunpack.c.l.b16 %v319
    %v902 = vunpack.c.h.b16 %v319
    %v903 = vunpack.c.l.b16 %v320
    %v904 = vunpack.c.h.b16 %v320
    %v905 = vunpack.c.l.b16 %v321
    %v906 = vunpack.c.h.b16 %v321
    %v907 = vunpack.c.l.b16 %v322
    %v908 = vunpack.c.h.b16 %v322
    %v909 = vunpack.c.l.b16 %v323
    %v910 = vunpack.c.h.b16 %v323
    %v911 = vunpack.c.l.b16 %v324
    %v912 = vunpack.c.h.b16 %v324
    %v913 = vunpack.c.l.b16 %v325
    %v914 = vunpack.c.h.b16 %v325
    %v915 = vpack.c.b16 %v527, %v523
    %v916 = vpack.c.b16 %v528, %v524
    %v917 = vpack.c.b16 %v529, %v525
    %v918 = vpack.c.b16 %v530, %v526
    %v919 = vpack.c.b16 %v535, %v531
    %v920 = vpack.c.b16 %v536, %v532
    %v921 = vpack.c.b16 %v537, %v533
    %v922 = vpack.c.b16 %v538, %v534
    %v923 = vpack.c.b16 %v543, %v539
    %v924 = vpack.c.b16 %v544, %v540
    %v925 = vpack.c.b16 %v545, %v541
    %v926 = vpack.c.b16 %v546, %v542
    %v927 = vpack.c.b16 %v551, %v547
    %v928 = vpack.c.b16 %v552, %v548
    %v929 = vpack.c.b16 %v553, %v549
    %v930 = vpack.c.b16 %v554, %v550
    %v931 = vpack.c.b16 %v559, %v555
    %v932 = vpack.c.b16 %v560, %v556
    %v933 = vpack.c.b16 %v561, %v557
    %v934 = vpack.c.b16 %v562, %v558
    %v935 = vpack.c.b16 %v567, %v563
    %v936 = vpack.c.b16 %v568, %v564
    %v937 = vpack.c.b16 %v569, %v565
    %v938 = vpack.c.b16 %v570, %v566
    %v939 = vpack.c.b16 %v575, %v571
    %v940 = vpack.c.b16 %v576, %v572
    %v941 = vpack.c.b16 %v577, %v573
    %v942 = vpack.c.b16 %v578, %v574
    %v943 = vpack.c.b16 %v583, %v579
    %v944 = vpack.c.b16 %v584, %v580
    %v945 = vpack.c.b16 %v585, %v581
    %v946 = vpack.c.b16 %v586, %v582
    %v947 = vpack.c.b16 %v591, %v587
    %v948 = vpack.c.b16 %v592, %v588
    %v949 = vpack.c.b16 %v593, %v589
    %v950 = vpack.c.b16 %v594, %v590
    %v951 = vpack.c.b16 %v599, %v595
    %v952 = vpack.c.b16 %v600, %v596
    %v953 = vpack.c.b16 %v601, %v597
    %v954 = vpack.c.b16 %v602, %v598
    %v955 = vpack.c.b16 %v607, %v603
    %v956 = vpack.c.b16 %v608, %v604
    %v957 = vpack.c.b16 %v609, %v605
    %v958 = vpack.c.b16 %v610, %v606
    %v959 = vpack.c.b16 %v615, %v611
    %v960 = vpack.c.b16 %v616, %v612
    %v961 = vpack.c.b16 %v617, %v613
    %v962 = vpack.c.b16 %v618, %v614
    %v963 = vpack.c.b16 %v623, %v619
    %v964 = vpack.c.b16 %v624, %v620
    %v965 = vpack.c.b16 %v625, %v621
    %v966 = vpack.c.b16 %v626, %v622
    %v967 = vpack.c.b16 %v631, %v627
    %v968 = vpack.c.b16 %v632, %v628
    %v969 = vpack.c.b16 %v633, %v629
    %v970 = vpack.c.b16 %v634, %v630
    %v971 = vpack.c.b16 %v639, %v635
    %v972 = vpack.c.b16 %v640, %v636
    %v973 = vpack.c.b16 %v641, %v637
    %v974 = vpack.c.b16 %v642, %v638
    %v975 = vpack.c.b16 %v647, %v643
    %v976 = vpack.c.b16 %v648, %v644
    %v977 = vpack.c.b16 %v649, %v645
    %v978 = vpack.c.b16 %v650, %v646
    %v979 = vpack.c.b16 %v655, %v651
    %v980 = vpack.c.b16 %v656, %v652
    %v981 = vpack.c.b16 %v657, %v653
    %v982 = vpack.c.b16 %v658, %v654
    %v983 = vpack.c.b16 %v663, %v659
    %v984 = vpack.c.b16 %v664, %v660
    %v985 = vpack.c.b16 %v665, %v661
    %v986 = vpack.c.b16 %v666, %v662
    %v987 = vpack.c.b16 %v671, %v667
    %v988 = vpack.c.b16 %v672, %v668
    %v989 = vpack.c.b16 %v673, %v669
    %v990 = vpack.c.b16 %v674, %v670
    %v991 = vpack.c.b16 %v679, %v675
    %v992 = vpack.c.b16 %v680, %v676
    %v993 = vpack.c.b16 %v681, %v677
    %v994 = vpack.c.b16 %v682, %v678
    %v995 = vpack.c.b16 %v687, %v683
    %v996 = vpack.c.b16 %v688, %v684
    %v997 = vpack.c.b16 %v689, %v685
    %v998 = vpack.c.b16 %v690, %v686
    %v999 = vpack.c.b16 %v695, %v691
    %v1000 = vpack.c.b16 %v696, %v692
    %v1001 = vpack.c.b16 %v697, %v693
    %v1002 = vpack.c.b16 %v698, %v694
    %v1003 = vpack.c.b16 %v703, %v699
    %v1004 = vpack.c.b16 %v704, %v700
    %v1005 = vpack.c.b16 %v705, %v701
    %v1006 = vpack.c.b16 %v706, %v702
    %v1007 = vpack.c.b16 %v711, %v707
    %v1008 = vpack.c.b16 %v712, %v708
    %v1009 = vpack.c.b16 %v713, %v709
    %v1010 = vpack.c.b16 %v714, %v710
    %v1011 = vpack.c.b16 %v719, %v715
    %v1012 = vpack.c.b16 %v720, %v716
    %v1013 = vpack.c.b16 %v721, %v717
    %v1014 = vpack.c.b16 %v722, %v718
    %v1015 = vpack.c.b16 %v727, %v723
    %v1016 = vpack.c.b16 %v728, %v724
    %v1017 = vpack.c.b16 %v729, %v725
    %v1018 = vpack.c.b16 %v730, %v726
    %v1019 = vpack.c.b16 %v735, %v731
    %v1020 = vpack.c.b16 %v736, %v732
    %v1021 = vpack.c.b16 %v737, %v733
    %v1022 = vpack.c.b16 %v738, %v734
    %v1023 = vpack.c.b16 %v743, %v739
    %v1024 = vpack.c.b16 %v744, %v740
    %v1025 = vpack.c.b16 %v745, %v741
    %v1026 = vpack.c.b16 %v746, %v742
    %v1027 = vpack.c.b16 %v751, %v747
    %v1028 = vpack.c.b16 %v752, %v748
    %v1029 = vpack.c.b16 %v753, %v749
    %v1030 = vpack.c.b16 %v754, %v750
    %v1031 = vpack.c.b16 %v759, %v755
    %v1032 = vpack.c.b16 %v760, %v756
    %v1033 = vpack.c.b16 %v761, %v757
    %v1034 = vpack.c.b16 %v762, %v758
    %v1035 = vpack.c.b16 %v767, %v763
    %v1036 = vpack.c.b16 %v768, %v764
    %v1037 = vpack.c.b16 %v769, %v765
    %v1038 = vpack.c.b16 %v770, %v766
    %v1039 = vpack.c.b16 %v775, %v771
    %v1040 = vpack.c.b16 %v776, %v772
    %v1041 = vpack.c.b16 %v777, %v773
    %v1042 = vpack.c.b16 %v778, %v774
    %v1043 = vpack.c.b16 %v783, %v779
    %v1044 = vpack.c.b16 %v784, %v780
    %v1045 = vpack.c.b16 %v785, %v781
    %v1046 = vpack.c.b16 %v786, %v782
    %v1047 = vpack.c.b16 %v791, %v787
    %v1048 = vpack.c.b16 %v792, %v788
    %v1049 = vpack.c.b16 %v793, %v789
    %v1050 = vpack.c.b16 %v794, %v790
    %v1051 = vpack.c.b16 %v799, %v795
    %v1052 = vpack.c.b16 %v800, %v796
    %v1053 = vpack.c.b16 %v801, %v797
    %v1054 = vpack.c.b16 %v802, %v798
    %v1055 = vpack.c.b16 %v807, %v803
    %v1056 = vpack.c.b16 %v808, %v804
    %v1057 = vpack.c.b16 %v809, %v805
    %v1058 = vpack.c.b16 %v810, %v806
    %v1059 = vpack.c.b16 %v815, %v811
    %v1060 = vpack.c.b16 %v816, %v812
    %v1061 = vpack.c.b16 %v817, %v813
    %v1062 = vpack.c.b16 %v818, %v814
    %v1063 = vpack.c.b16 %v823, %v819
    %v1064 = vpack.c.b16 %v824, %v820
    %v1065 = vpack.c.b16 %v825, %v821
    %v1066 = vpack.c.b16 %v826, %v822
    %v1067 = vpack.c.b16 %v831, %v827
    %v1068 = vpack.c.b16 %v832, %v828
    %v1069 = vpack.c.b16 %v833, %v829
    %v1070 = vpack.c.b16 %v834, %v830
    %v1071 = vpack.c.b16 %v839, %v835
    %v1072 = vpack.c.b16 %v840, %v836
    %v1073 = vpack.c.b16 %v841, %v837
    %v1074 = vpack.c.b16 %v842, %v838
    %v1075 = vpack.c.b16 %v847, %v843
    %v1076 = vpack.c.b16 %v848, %v844
    %v1077 = vpack.c.b16 %v849, %v845
    %v1078 = vpack.c.b16 %v850, %v846
    %v1079 = vpack.c.b16 %v855, %v851
    %v1080 = vpack.c.b16 %v856, %v852
    %v1081 = vpack.c.b16 %v857, %v853
    %v1082 = vpack.c.b16 %v858, %v854
    %v1083 = vpack.c.b16 %v863, %v859
    %v1084 = vpack.c.b16 %v864, %v860
    %v1085 = vpack.c.b16 %v865, %v861
    %v1086 = vpack.c.b16 %v866, %v862
    %v1087 = vpack.c.b16 %v871, %v867
    %v1088 = vpack.c.b16 %v872, %v868
    %v1089 = vpack.c.b16 %v873, %v869
    %v1090 = vpack.c.b16 %v874, %v870
    %v1091 = vpack.c.b16 %v879, %v875
    %v1092 = vpack.c.b16 %v880, %v876
    %v1093 = vpack.c.b16 %v881, %v877
    %v1094 = vpack.c.b16 %v882, %v878
    %v1095 = vpack.c.b16 %v887, %v883
    %v1096 = vpack.c.b16 %v888, %v884
    %v1097 = vpack.c.b16 %v889, %v885
    %v1098 = vpack.c.b16 %v890, %v886
    %v1099 = vpack.c.b16 %v895, %v891
    %v1100 = vpack.c.b16 %v896, %v892
    %v1101 = vpack.c.b16 %v897, %v893
    %v1102 = vpack.c.b16 %v898, %v894
    %v1103 = vpack.c.b16 %v903, %v899
    %v1104 = vpack.c.b16 %v904, %v900
    %v1105 = vpack.c.b16 %v905, %v901
    %v1106 = vpack.c.b16 %v906, %v902
    %v1107 = vpack.c.b16 %v911, %v907
    %v1108 = vpack.c.b16 %v912, %v908
    %v1109 = vpack.c.b16 %v913, %v909
    %v1110 = vpack.c.b16 %v914, %v910
    %vm1307 = vcmask 130048
    %v1309 = vsel %vm1307, %v108, 0
    %v1312 = vsel %vm1307, %v115, 0
    %v1315 = vsel %vm1307, %v122, 0
    %v1318 = vsel %vm1307, %v129, 0
    %1320 = vmatprep.subr.bf16.mxu0 %v916
    %1321 = vmatpush1.bf16.msra.mxu0 %v915
    %1322 = vmatprep.subr.bf16.mxu0 %v920
    %1323 = vmatpush1.bf16.msra.mxu0 %v919
    %1324 = vmatprep.subr.bf16.mxu0 %v924
    %1325 = vmatpush1.bf16.msra.mxu0 %v923
    %1326 = vmatprep.subr.bf16.mxu0 %v928
    %1327 = vmatpush1.bf16.msra.mxu0 %v927
    %1328 = vmatprep.subr.bf16.mxu0 %v932
    %1329 = vmatpush1.bf16.msra.mxu0 %v931
    %1330 = vmatprep.subr.bf16.mxu0 %v936
    %1331 = vmatpush1.bf16.msra.mxu0 %v935
    %1332 = vmatprep.subr.bf16.mxu0 %v940
    %1333 = vmatpush1.bf16.msra.mxu0 %v939
    %1334 = vmatprep.subr.bf16.mxu0 %v944
    %1335 = vmatpush1.bf16.msra.mxu0 %v943
    %1336 = vmatprep.subr.bf16.mxu0 %v948
    %1337 = vmatpush1.bf16.msra.mxu0 %v947
    %1338 = vmatprep.subr.bf16.mxu0 %v952
    %1339 = vmatpush1.bf16.msra.mxu0 %v951
    %1340 = vmatprep.subr.bf16.mxu0 %v956
    %1341 = vmatpush1.bf16.msra.mxu0 %v955
    %1342 = vmatprep.subr.bf16.mxu0 %v960
    %1343 = vmatpush1.bf16.msra.mxu0 %v959
    %1344 = vmatprep.subr.bf16.mxu0 %v964
    %1345 = vmatpush1.bf16.msra.mxu0 %v963
    %1346 = vmatprep.subr.bf16.mxu0 %v968
    %1347 = vmatpush1.bf16.msra.mxu0 %v967
    %1348 = vmatprep.subr.bf16.mxu0 %v972
    %1349 = vmatpush1.bf16.msra.mxu0 %v971
    %1350 = vmatprep.subr.bf16.mxu0 %v976
    %1351 = vmatpush1.bf16.msra.mxu0 %v975
    %1352 = vmatprep.mubr.bf16.mxu0 %v103
    %1353 = vmatmul.mubr.bf16.gmra.mrb[0].mxu0 %v102
    %v1354 = vpop.f32.mrb[0].mxu0
    %v1355 = vadd.f32 0.0, %v1354
    %v1356 = vpop.f32.mrb[0].mxu0
    %v1357 = vadd.f32 0.0, %v1356
    %v1358 = vpop.f32.mrb[0].mxu0
    %v1359 = vadd.f32 0.0, %v1358
    %v1360 = vpop.f32.mrb[0].mxu0
    %v1361 = vadd.f32 0.0, %v1360
    %1362 = vmatprep.mubr.bf16.mxu0 %v110
    %1363 = vmatmul.mubr.bf16.gmra.mrb[0].mxu0 %v109
    %v1364 = vpop.f32.mrb[0].mxu0
    %v1365 = vadd.f32 0.0, %v1364
    %v1366 = vpop.f32.mrb[0].mxu0
    %v1367 = vadd.f32 0.0, %v1366
    %v1368 = vpop.f32.mrb[0].mxu0
    %v1369 = vadd.f32 0.0, %v1368
    %v1370 = vpop.f32.mrb[0].mxu0
    %v1371 = vadd.f32 0.0, %v1370
    %1372 = vmatprep.mubr.bf16.mxu0 %v117
    %1373 = vmatmul.mubr.bf16.gmra.mrb[0].mxu0 %v116
    %v1374 = vpop.f32.mrb[0].mxu0
    %v1375 = vadd.f32 0.0, %v1374
    %v1376 = vpop.f32.mrb[0].mxu0
    %v1377 = vadd.f32 0.0, %v1376
    %v1378 = vpop.f32.mrb[0].mxu0
    %v1379 = vadd.f32 0.0, %v1378
    %v1380 = vpop.f32.mrb[0].mxu0
    %v1381 = vadd.f32 0.0, %v1380
    %1382 = vmatprep.mubr.bf16.mxu0 %v124
    %1383 = vmatmul.mubr.bf16.gmra.mrb[0].mxu0 %v123
    %v1384 = vpop.f32.mrb[0].mxu0
    %v1385 = vadd.f32 0.0, %v1384
    %v1386 = vpop.f32.mrb[0].mxu0
    %v1387 = vadd.f32 0.0, %v1386
    %v1388 = vpop.f32.mrb[0].mxu0
    %v1389 = vadd.f32 0.0, %v1388
    %v1390 = vpop.f32.mrb[0].mxu0
    %v1391 = vadd.f32 0.0, %v1390
    %1392 = vdwg.mxu0
    %1393 = vmatprep.subr.bf16.mxu0 %v980
    %1394 = vmatpush1.bf16.msra.mxu0 %v979
    %1395 = vmatprep.subr.bf16.mxu0 %v984
    %1396 = vmatpush1.bf16.msra.mxu0 %v983
    %1397 = vmatprep.subr.bf16.mxu0 %v988
    %1398 = vmatpush1.bf16.msra.mxu0 %v987
    %1399 = vmatprep.subr.bf16.mxu0 %v992
    %1400 = vmatpush1.bf16.msra.mxu0 %v991
    %1401 = vmatprep.subr.bf16.mxu0 %v996
    %1402 = vmatpush1.bf16.msra.mxu0 %v995
    %1403 = vmatprep.subr.bf16.mxu0 %v1000
    %1404 = vmatpush1.bf16.msra.mxu0 %v999
    %1405 = vmatprep.subr.bf16.mxu0 %v1004
    %1406 = vmatpush1.bf16.msra.mxu0 %v1003
    %1407 = vmatprep.subr.bf16.mxu0 %v1008
    %1408 = vmatpush1.bf16.msra.mxu0 %v1007
    %1409 = vmatprep.subr.bf16.mxu0 %v1012
    %1410 = vmatpush1.bf16.msra.mxu0 %v1011
    %1411 = vmatprep.subr.bf16.mxu0 %v1016
    %1412 = vmatpush1.bf16.msra.mxu0 %v1015
    %1413 = vmatprep.subr.bf16.mxu0 %v1020
    %1414 = vmatpush1.bf16.msra.mxu0 %v1019
    %1415 = vmatprep.subr.bf16.mxu0 %v1024
    %1416 = vmatpush1.bf16.msra.mxu0 %v1023
    %1417 = vmatprep.subr.bf16.mxu0 %v1028
    %1418 = vmatpush1.bf16.msra.mxu0 %v1027
    %1419 = vmatprep.subr.bf16.mxu0 %v1032
    %1420 = vmatpush1.bf16.msra.mxu0 %v1031
    %1421 = vmatprep.subr.bf16.mxu0 %v1036
    %1422 = vmatpush1.bf16.msra.mxu0 %v1035
    %1423 = vmatprep.subr.bf16.mxu0 %v1040
    %1424 = vmatpush1.bf16.msra.mxu0 %v1039
    %1425 = vmatprep.mubr.bf16.mxu0 %v105
    %1426 = vmatmul.mubr.bf16.gmra.mrb[0].mxu0 %v104
    %v1427 = vpop.f32.mrb[0].mxu0
    %v1428 = vadd.f32 %v1355, %v1427
    %v1429 = vpop.f32.mrb[0].mxu0
    %v1430 = vadd.f32 %v1357, %v1429
    %v1431 = vpop.f32.mrb[0].mxu0
    %v1432 = vadd.f32 %v1359, %v1431
    %v1433 = vpop.f32.mrb[0].mxu0
    %v1434 = vadd.f32 %v1361, %v1433
    %1435 = vmatprep.mubr.bf16.mxu0 %v112
    %1436 = vmatmul.mubr.bf16.gmra.mrb[0].mxu0 %v111
    %v1437 = vpop.f32.mrb[0].mxu0
    %v1438 = vadd.f32 %v1365, %v1437
    %v1439 = vpop.f32.mrb[0].mxu0
    %v1440 = vadd.f32 %v1367, %v1439
    %v1441 = vpop.f32.mrb[0].mxu0
    %v1442 = vadd.f32 %v1369, %v1441
    %v1443 = vpop.f32.mrb[0].mxu0
    %v1444 = vadd.f32 %v1371, %v1443
    %1445 = vmatprep.mubr.bf16.mxu0 %v119
    %1446 = vmatmul.mubr.bf16.gmra.mrb[0].mxu0 %v118
    %v1447 = vpop.f32.mrb[0].mxu0
    %v1448 = vadd.f32 %v1375, %v1447
    %v1449 = vpop.f32.mrb[0].mxu0
    %v1450 = vadd.f32 %v1377, %v1449
    %v1451 = vpop.f32.mrb[0].mxu0
    %v1452 = vadd.f32 %v1379, %v1451
    %v1453 = vpop.f32.mrb[0].mxu0
    %v1454 = vadd.f32 %v1381, %v1453
    %1455 = vmatprep.mubr.bf16.mxu0 %v126
    %1456 = vmatmul.mubr.bf16.gmra.mrb[0].mxu0 %v125
    %v1457 = vpop.f32.mrb[0].mxu0
    %v1458 = vadd.f32 %v1385, %v1457
    %v1459 = vpop.f32.mrb[0].mxu0
    %v1460 = vadd.f32 %v1387, %v1459
    %v1461 = vpop.f32.mrb[0].mxu0
    %v1462 = vadd.f32 %v1389, %v1461
    %v1463 = vpop.f32.mrb[0].mxu0
    %v1464 = vadd.f32 %v1391, %v1463
    %1465 = vdwg.mxu0
    %1466 = vmatprep.subr.bf16.mxu0 %v1044
    %1467 = vmatpush1.bf16.msra.mxu0 %v1043
    %1468 = vmatprep.subr.bf16.mxu0 %v1048
    %1469 = vmatpush1.bf16.msra.mxu0 %v1047
    %1470 = vmatprep.subr.bf16.mxu0 %v1052
    %1471 = vmatpush1.bf16.msra.mxu0 %v1051
    %1472 = vmatprep.subr.bf16.mxu0 %v1056
    %1473 = vmatpush1.bf16.msra.mxu0 %v1055
    %1474 = vmatprep.subr.bf16.mxu0 %v1060
    %1475 = vmatpush1.bf16.msra.mxu0 %v1059
    %1476 = vmatprep.subr.bf16.mxu0 %v1064
    %1477 = vmatpush1.bf16.msra.mxu0 %v1063
    %1478 = vmatprep.subr.bf16.mxu0 %v1068
    %1479 = vmatpush1.bf16.msra.mxu0 %v1067
    %1480 = vmatprep.subr.bf16.mxu0 %v1072
    %1481 = vmatpush1.bf16.msra.mxu0 %v1071
    %1482 = vmatprep.subr.bf16.mxu0 %v1076
    %1483 = vmatpush1.bf16.msra.mxu0 %v1075
    %1484 = vmatprep.subr.bf16.mxu0 %v1080
    %1485 = vmatpush1.bf16.msra.mxu0 %v1079
    %1486 = vmatprep.subr.bf16.mxu0 %v1084
    %1487 = vmatpush1.bf16.msra.mxu0 %v1083
    %1488 = vmatprep.subr.bf16.mxu0 %v1088
    %1489 = vmatpush1.bf16.msra.mxu0 %v1087
    %1490 = vmatprep.subr.bf16.mxu0 %v1092
    %1491 = vmatpush1.bf16.msra.mxu0 %v1091
    %1492 = vmatprep.subr.bf16.mxu0 %v1096
    %1493 = vmatpush1.bf16.msra.mxu0 %v1095
    %1494 = vmatprep.subr.bf16.mxu0 %v1100
    %1495 = vmatpush1.bf16.msra.mxu0 %v1099
    %1496 = vmatprep.subr.bf16.mxu0 %v1104
    %1497 = vmatpush1.bf16.msra.mxu0 %v1103
    %1498 = vmatprep.mubr.bf16.mxu0 %v107
    %1499 = vmatmul.mubr.bf16.gmra.mrb[0].mxu0 %v106
    %v1500 = vpop.f32.mrb[0].mxu0
    %v1501 = vadd.f32 %v1428, %v1500
    %v1502 = vpop.f32.mrb[0].mxu0
    %v1503 = vadd.f32 %v1430, %v1502
    %v1504 = vpop.f32.mrb[0].mxu0
    %v1505 = vadd.f32 %v1432, %v1504
    %v1506 = vpop.f32.mrb[0].mxu0
    %v1507 = vadd.f32 %v1434, %v1506
    %1508 = vmatprep.mubr.bf16.mxu0 %v114
    %1509 = vmatmul.mubr.bf16.gmra.mrb[0].mxu0 %v113
    %v1510 = vpop.f32.mrb[0].mxu0
    %v1511 = vadd.f32 %v1438, %v1510
    %v1512 = vpop.f32.mrb[0].mxu0
    %v1513 = vadd.f32 %v1440, %v1512
    %v1514 = vpop.f32.mrb[0].mxu0
    %v1515 = vadd.f32 %v1442, %v1514
    %v1516 = vpop.f32.mrb[0].mxu0
    %v1517 = vadd.f32 %v1444, %v1516
    %1518 = vmatprep.mubr.bf16.mxu0 %v121
    %1519 = vmatmul.mubr.bf16.gmra.mrb[0].mxu0 %v120
    %v1520 = vpop.f32.mrb[0].mxu0
    %v1521 = vadd.f32 %v1448, %v1520
    %v1522 = vpop.f32.mrb[0].mxu0
    %v1523 = vadd.f32 %v1450, %v1522
    %v1524 = vpop.f32.mrb[0].mxu0
    %v1525 = vadd.f32 %v1452, %v1524
    %v1526 = vpop.f32.mrb[0].mxu0
    %v1527 = vadd.f32 %v1454, %v1526
    %1528 = vmatprep.mubr.bf16.mxu0 %v128
    %1529 = vmatmul.mubr.bf16.gmra.mrb[0].mxu0 %v127
    %v1530 = vpop.f32.mrb[0].mxu0
    %v1531 = vadd.f32 %v1458, %v1530
    %v1532 = vpop.f32.mrb[0].mxu0
    %v1533 = vadd.f32 %v1460, %v1532
    %v1534 = vpop.f32.mrb[0].mxu0
    %v1535 = vadd.f32 %v1462, %v1534
    %v1536 = vpop.f32.mrb[0].mxu0
    %v1537 = vadd.f32 %v1464, %v1536
    %1538 = vdwg.mxu0
    %1539 = vmatprep.subr.bf16.mxu0 %v1108
    %1540 = vmatpush1.bf16.msra.mxu0 %v1107
    %1541 = vmatprep.subr.bf16.mxu0 0
    %1542 = vmatpush1.bf16.msra.mxu0 0
    %1543 = vmatprep.subr.bf16.mxu0 0
    %1544 = vmatpush1.bf16.msra.mxu0 0
    %1545 = vmatprep.subr.bf16.mxu0 0
    %1546 = vmatpush1.bf16.msra.mxu0 0
    %1547 = vmatprep.subr.bf16.mxu0 0
    %1548 = vmatpush1.bf16.msra.mxu0 0
    %1549 = vmatprep.subr.bf16.mxu0 0
    %1550 = vmatpush1.bf16.msra.mxu0 0
    %1551 = vmatprep.subr.bf16.mxu0 0
    %1552 = vmatpush1.bf16.msra.mxu0 0
    %1553 = vmatprep.subr.bf16.mxu0 0
    %1554 = vmatpush1.bf16.msra.mxu0 0
    %1555 = vmatprep.subr.bf16.mxu0 0
    %1556 = vmatpush1.bf16.msra.mxu0 0
    %1557 = vmatprep.subr.bf16.mxu0 0
    %1558 = vmatpush1.bf16.msra.mxu0 0
    %1559 = vmatprep.subr.bf16.mxu0 0
    %1560 = vmatpush1.bf16.msra.mxu0 0
    %1561 = vmatprep.subr.bf16.mxu0 0
    %1562 = vmatpush1.bf16.msra.mxu0 0
    %1563 = vmatprep.subr.bf16.mxu0 0
    %1564 = vmatpush1.bf16.msra.mxu0 0
    %1565 = vmatprep.subr.bf16.mxu0 0
    %1566 = vmatpush1.bf16.msra.mxu0 0
    %1567 = vmatprep.subr.bf16.mxu0 0
    %1568 = vmatpush1.bf16.msra.mxu0 0
    %1569 = vmatprep.subr.bf16.mxu0 0
    %1570 = vmatpush1.bf16.msra.mxu0 0
    %1571 = vmatprep.mubr.bf16.mxu0 0
    %1572 = vmatmul.mubr.bf16.gmra.mrb[0].mxu0 %v1309
    %v1573 = vpop.f32.mrb[0].mxu0
    %v1574 = vadd.f32 %v1501, %v1573
    %v1575 = vpop.f32.mrb[0].mxu0
    %v1576 = vadd.f32 %v1503, %v1575
    %v1577 = vpop.f32.mrb[0].mxu0
    %v1578 = vadd.f32 %v1505, %v1577
    %v1579 = vpop.f32.mrb[0].mxu0
    %v1580 = vadd.f32 %v1507, %v1579
    %1581 = vmatprep.mubr.bf16.mxu0 0
    %1582 = vmatmul.mubr.bf16.gmra.mrb[0].mxu0 %v1312
    %v1583 = vpop.f32.mrb[0].mxu0
    %v1584 = vadd.f32 %v1511, %v1583
    %v1585 = vpop.f32.mrb[0].mxu0
    %v1586 = vadd.f32 %v1513, %v1585
    %v1587 = vpop.f32.mrb[0].mxu0
    %v1588 = vadd.f32 %v1515, %v1587
    %v1589 = vpop.f32.mrb[0].mxu0
    %v1590 = vadd.f32 %v1517, %v1589
    %1591 = vmatprep.mubr.bf16.mxu0 0
    %1592 = vmatmul.mubr.bf16.gmra.mrb[0].mxu0 %v1315
    %v1593 = vpop.f32.mrb[0].mxu0
    %v1594 = vadd.f32 %v1521, %v1593
    %v1595 = vpop.f32.mrb[0].mxu0
    %v1596 = vadd.f32 %v1523, %v1595
    %v1597 = vpop.f32.mrb[0].mxu0
    %v1598 = vadd.f32 %v1525, %v1597
    %v1599 = vpop.f32.mrb[0].mxu0
    %v1600 = vadd.f32 %v1527, %v1599
    %1601 = vmatprep.mubr.bf16.mxu0 0
    %1602 = vmatmul.mubr.bf16.gmra.mrb[0].mxu0 %v1318
    %v1603 = vpop.f32.mrb[0].mxu0
    %v1604 = vadd.f32 %v1531, %v1603
    %v1605 = vpop.f32.mrb[0].mxu0
    %v1606 = vadd.f32 %v1533, %v1605
    %v1607 = vpop.f32.mrb[0].mxu0
    %v1608 = vadd.f32 %v1535, %v1607
    %v1609 = vpop.f32.mrb[0].mxu0
    %v1610 = vadd.f32 %v1537, %v1609
    %1611 = vdwg.mxu0
    %1612 = vmatprep.subr.bf16.mxu0 %v918
    %1613 = vmatpush1.bf16.msra.mxu0 %v917
    %1614 = vmatprep.subr.bf16.mxu0 %v922
    %1615 = vmatpush1.bf16.msra.mxu0 %v921
    %1616 = vmatprep.subr.bf16.mxu0 %v926
    %1617 = vmatpush1.bf16.msra.mxu0 %v925
    %1618 = vmatprep.subr.bf16.mxu0 %v930
    %1619 = vmatpush1.bf16.msra.mxu0 %v929
    %1620 = vmatprep.subr.bf16.mxu0 %v934
    %1621 = vmatpush1.bf16.msra.mxu0 %v933
    %1622 = vmatprep.subr.bf16.mxu0 %v938
    %1623 = vmatpush1.bf16.msra.mxu0 %v937
    %1624 = vmatprep.subr.bf16.mxu0 %v942
    %1625 = vmatpush1.bf16.msra.mxu0 %v941
    %1626 = vmatprep.subr.bf16.mxu0 %v946
    %1627 = vmatpush1.bf16.msra.mxu0 %v945
    %1628 = vmatprep.subr.bf16.mxu0 %v950
    %1629 = vmatpush1.bf16.msra.mxu0 %v949
    %1630 = vmatprep.subr.bf16.mxu0 %v954
    %1631 = vmatpush1.bf16.msra.mxu0 %v953
    %1632 = vmatprep.subr.bf16.mxu0 %v958
    %1633 = vmatpush1.bf16.msra.mxu0 %v957
    %1634 = vmatprep.subr.bf16.mxu0 %v962
    %1635 = vmatpush1.bf16.msra.mxu0 %v961
    %1636 = vmatprep.subr.bf16.mxu0 %v966
    %1637 = vmatpush1.bf16.msra.mxu0 %v965
    %1638 = vmatprep.subr.bf16.mxu0 %v970
    %1639 = vmatpush1.bf16.msra.mxu0 %v969
    %1640 = vmatprep.subr.bf16.mxu0 %v974
    %1641 = vmatpush1.bf16.msra.mxu0 %v973
    %1642 = vmatprep.subr.bf16.mxu0 %v978
    %1643 = vmatpush1.bf16.msra.mxu0 %v977
    %1644 = vmatprep.mubr.bf16.mxu0 %v103
    %1645 = vmatmul.mubr.bf16.gmra.mrb[0].mxu0 %v102
    %v1646 = vpop.f32.mrb[0].mxu0
    %v1647 = vadd.f32 0.0, %v1646
    %v1648 = vpop.f32.mrb[0].mxu0
    %v1649 = vadd.f32 0.0, %v1648
    %v1650 = vpop.f32.mrb[0].mxu0
    %v1651 = vadd.f32 0.0, %v1650
    %v1652 = vpop.f32.mrb[0].mxu0
    %v1653 = vadd.f32 0.0, %v1652
    %1654 = vmatprep.mubr.bf16.mxu0 %v110
    %1655 = vmatmul.mubr.bf16.gmra.mrb[0].mxu0 %v109
    %v1656 = vpop.f32.mrb[0].mxu0
    %v1657 = vadd.f32 0.0, %v1656
    %v1658 = vpop.f32.mrb[0].mxu0
    %v1659 = vadd.f32 0.0, %v1658
    %v1660 = vpop.f32.mrb[0].mxu0
    %v1661 = vadd.f32 0.0, %v1660
    %v1662 = vpop.f32.mrb[0].mxu0
    %v1663 = vadd.f32 0.0, %v1662
    %1664 = vmatprep.mubr.bf16.mxu0 %v117
    %1665 = vmatmul.mubr.bf16.gmra.mrb[0].mxu0 %v116
    %v1666 = vpop.f32.mrb[0].mxu0
    %v1667 = vadd.f32 0.0, %v1666
    %v1668 = vpop.f32.mrb[0].mxu0
    %v1669 = vadd.f32 0.0, %v1668
    %v1670 = vpop.f32.mrb[0].mxu0
    %v1671 = vadd.f32 0.0, %v1670
    %v1672 = vpop.f32.mrb[0].mxu0
    %v1673 = vadd.f32 0.0, %v1672
    %1674 = vmatprep.mubr.bf16.mxu0 %v124
    %1675 = vmatmul.mubr.bf16.gmra.mrb[0].mxu0 %v123
    %v1676 = vpop.f32.mrb[0].mxu0
    %v1677 = vadd.f32 0.0, %v1676
    %v1678 = vpop.f32.mrb[0].mxu0
    %v1679 = vadd.f32 0.0, %v1678
    %v1680 = vpop.f32.mrb[0].mxu0
    %v1681 = vadd.f32 0.0, %v1680
    %v1682 = vpop.f32.mrb[0].mxu0
    %v1683 = vadd.f32 0.0, %v1682
    %1684 = vdwg.mxu0
    %1685 = vmatprep.subr.bf16.mxu0 %v982
    %1686 = vmatpush1.bf16.msra.mxu0 %v981
    %1687 = vmatprep.subr.bf16.mxu0 %v986
    %1688 = vmatpush1.bf16.msra.mxu0 %v985
    %1689 = vmatprep.subr.bf16.mxu0 %v990
    %1690 = vmatpush1.bf16.msra.mxu0 %v989
    %1691 = vmatprep.subr.bf16.mxu0 %v994
    %1692 = vmatpush1.bf16.msra.mxu0 %v993
    %1693 = vmatprep.subr.bf16.mxu0 %v998
    %1694 = vmatpush1.bf16.msra.mxu0 %v997
    %1695 = vmatprep.subr.bf16.mxu0 %v1002
    %1696 = vmatpush1.bf16.msra.mxu0 %v1001
    %1697 = vmatprep.subr.bf16.mxu0 %v1006
    %1698 = vmatpush1.bf16.msra.mxu0 %v1005
    %1699 = vmatprep.subr.bf16.mxu0 %v1010
    %1700 = vmatpush1.bf16.msra.mxu0 %v1009
    %1701 = vmatprep.subr.bf16.mxu0 %v1014
    %1702 = vmatpush1.bf16.msra.mxu0 %v1013
    %1703 = vmatprep.subr.bf16.mxu0 %v1018
    %1704 = vmatpush1.bf16.msra.mxu0 %v1017
    %1705 = vmatprep.subr.bf16.mxu0 %v1022
    %1706 = vmatpush1.bf16.msra.mxu0 %v1021
    %1707 = vmatprep.subr.bf16.mxu0 %v1026
    %1708 = vmatpush1.bf16.msra.mxu0 %v1025
    %1709 = vmatprep.subr.bf16.mxu0 %v1030
    %1710 = vmatpush1.bf16.msra.mxu0 %v1029
    %1711 = vmatprep.subr.bf16.mxu0 %v1034
    %1712 = vmatpush1.bf16.msra.mxu0 %v1033
    %1713 = vmatprep.subr.bf16.mxu0 %v1038
    %1714 = vmatpush1.bf16.msra.mxu0 %v1037
    %1715 = vmatprep.subr.bf16.mxu0 %v1042
    %1716 = vmatpush1.bf16.msra.mxu0 %v1041
    %1717 = vmatprep.mubr.bf16.mxu0 %v105
    %1718 = vmatmul.mubr.bf16.gmra.mrb[0].mxu0 %v104
    %v1719 = vpop.f32.mrb[0].mxu0
    %v1720 = vadd.f32 %v1647, %v1719
    %v1721 = vpop.f32.mrb[0].mxu0
    %v1722 = vadd.f32 %v1649, %v1721
    %v1723 = vpop.f32.mrb[0].mxu0
    %v1724 = vadd.f32 %v1651, %v1723
    %v1725 = vpop.f32.mrb[0].mxu0
    %v1726 = vadd.f32 %v1653, %v1725
    %1727 = vmatprep.mubr.bf16.mxu0 %v112
    %1728 = vmatmul.mubr.bf16.gmra.mrb[0].mxu0 %v111
    %v1729 = vpop.f32.mrb[0].mxu0
    %v1730 = vadd.f32 %v1657, %v1729
    %v1731 = vpop.f32.mrb[0].mxu0
    %v1732 = vadd.f32 %v1659, %v1731
    %v1733 = vpop.f32.mrb[0].mxu0
    %v1734 = vadd.f32 %v1661, %v1733
    %v1735 = vpop.f32.mrb[0].mxu0
    %v1736 = vadd.f32 %v1663, %v1735
    %1737 = vmatprep.mubr.bf16.mxu0 %v119
    %1738 = vmatmul.mubr.bf16.gmra.mrb[0].mxu0 %v118
    %v1739 = vpop.f32.mrb[0].mxu0
    %v1740 = vadd.f32 %v1667, %v1739
    %v1741 = vpop.f32.mrb[0].mxu0
    %v1742 = vadd.f32 %v1669, %v1741
    %v1743 = vpop.f32.mrb[0].mxu0
    %v1744 = vadd.f32 %v1671, %v1743
    %v1745 = vpop.f32.mrb[0].mxu0
    %v1746 = vadd.f32 %v1673, %v1745
    %1747 = vmatprep.mubr.bf16.mxu0 %v126
    %1748 = vmatmul.mubr.bf16.gmra.mrb[0].mxu0 %v125
    %v1749 = vpop.f32.mrb[0].mxu0
    %v1750 = vadd.f32 %v1677, %v1749
    %v1751 = vpop.f32.mrb[0].mxu0
    %v1752 = vadd.f32 %v1679, %v1751
    %v1753 = vpop.f32.mrb[0].mxu0
    %v1754 = vadd.f32 %v1681, %v1753
    %v1755 = vpop.f32.mrb[0].mxu0
    %v1756 = vadd.f32 %v1683, %v1755
    %1757 = vdwg.mxu0
    %1758 = vmatprep.subr.bf16.mxu0 %v1046
    %1759 = vmatpush1.bf16.msra.mxu0 %v1045
    %1760 = vmatprep.subr.bf16.mxu0 %v1050
    %1761 = vmatpush1.bf16.msra.mxu0 %v1049
    %1762 = vmatprep.subr.bf16.mxu0 %v1054
    %1763 = vmatpush1.bf16.msra.mxu0 %v1053
    %1764 = vmatprep.subr.bf16.mxu0 %v1058
    %1765 = vmatpush1.bf16.msra.mxu0 %v1057
    %1766 = vmatprep.subr.bf16.mxu0 %v1062
    %1767 = vmatpush1.bf16.msra.mxu0 %v1061
    %1768 = vmatprep.subr.bf16.mxu0 %v1066
    %1769 = vmatpush1.bf16.msra.mxu0 %v1065
    %1770 = vmatprep.subr.bf16.mxu0 %v1070
    %1771 = vmatpush1.bf16.msra.mxu0 %v1069
    %1772 = vmatprep.subr.bf16.mxu0 %v1074
    %1773 = vmatpush1.bf16.msra.mxu0 %v1073
    %1774 = vmatprep.subr.bf16.mxu0 %v1078
    %1775 = vmatpush1.bf16.msra.mxu0 %v1077
    %1776 = vmatprep.subr.bf16.mxu0 %v1082
    %1777 = vmatpush1.bf16.msra.mxu0 %v1081
    %1778 = vmatprep.subr.bf16.mxu0 %v1086
    %1779 = vmatpush1.bf16.msra.mxu0 %v1085
    %1780 = vmatprep.subr.bf16.mxu0 %v1090
    %1781 = vmatpush1.bf16.msra.mxu0 %v1089
    %1782 = vmatprep.subr.bf16.mxu0 %v1094
    %1783 = vmatpush1.bf16.msra.mxu0 %v1093
    %1784 = vmatprep.subr.bf16.mxu0 %v1098
    %1785 = vmatpush1.bf16.msra.mxu0 %v1097
    %1786 = vmatprep.subr.bf16.mxu0 %v1102
    %1787 = vmatpush1.bf16.msra.mxu0 %v1101
    %1788 = vmatprep.subr.bf16.mxu0 %v1106
    %1789 = vmatpush1.bf16.msra.mxu0 %v1105
    %1790 = vmatprep.mubr.bf16.mxu0 %v107
    %1791 = vmatmul.mubr.bf16.gmra.mrb[0].mxu0 %v106
    %v1792 = vpop.f32.mrb[0].mxu0
    %v1793 = vadd.f32 %v1720, %v1792
    %v1794 = vpop.f32.mrb[0].mxu0
    %v1795 = vadd.f32 %v1722, %v1794
    %v1796 = vpop.f32.mrb[0].mxu0
    %v1797 = vadd.f32 %v1724, %v1796
    %v1798 = vpop.f32.mrb[0].mxu0
    %v1799 = vadd.f32 %v1726, %v1798
    %1800 = vmatprep.mubr.bf16.mxu0 %v114
    %1801 = vmatmul.mubr.bf16.gmra.mrb[0].mxu0 %v113
    %v1802 = vpop.f32.mrb[0].mxu0
    %v1803 = vadd.f32 %v1730, %v1802
    %v1804 = vpop.f32.mrb[0].mxu0
    %v1805 = vadd.f32 %v1732, %v1804
    %v1806 = vpop.f32.mrb[0].mxu0
    %v1807 = vadd.f32 %v1734, %v1806
    %v1808 = vpop.f32.mrb[0].mxu0
    %v1809 = vadd.f32 %v1736, %v1808
    %1810 = vmatprep.mubr.bf16.mxu0 %v121
    %1811 = vmatmul.mubr.bf16.gmra.mrb[0].mxu0 %v120
    %v1812 = vpop.f32.mrb[0].mxu0
    %v1813 = vadd.f32 %v1740, %v1812
    %v1814 = vpop.f32.mrb[0].mxu0
    %v1815 = vadd.f32 %v1742, %v1814
    %v1816 = vpop.f32.mrb[0].mxu0
    %v1817 = vadd.f32 %v1744, %v1816
    %v1818 = vpop.f32.mrb[0].mxu0
    %v1819 = vadd.f32 %v1746, %v1818
    %1820 = vmatprep.mubr.bf16.mxu0 %v128
    %1821 = vmatmul.mubr.bf16.gmra.mrb[0].mxu0 %v127
    %v1822 = vpop.f32.mrb[0].mxu0
    %v1823 = vadd.f32 %v1750, %v1822
    %v1824 = vpop.f32.mrb[0].mxu0
    %v1825 = vadd.f32 %v1752, %v1824
    %v1826 = vpop.f32.mrb[0].mxu0
    %v1827 = vadd.f32 %v1754, %v1826
    %v1828 = vpop.f32.mrb[0].mxu0
    %v1829 = vadd.f32 %v1756, %v1828
    %1830 = vdwg.mxu0
    %1831 = vmatprep.subr.bf16.mxu0 %v1110
    %1832 = vmatpush1.bf16.msra.mxu0 %v1109
    %1833 = vmatprep.subr.bf16.mxu0 0
    %1834 = vmatpush1.bf16.msra.mxu0 0
    %1835 = vmatprep.subr.bf16.mxu0 0
    %1836 = vmatpush1.bf16.msra.mxu0 0
    %1837 = vmatprep.subr.bf16.mxu0 0
    %1838 = vmatpush1.bf16.msra.mxu0 0
    %1839 = vmatprep.subr.bf16.mxu0 0
    %1840 = vmatpush1.bf16.msra.mxu0 0
    %1841 = vmatprep.subr.bf16.mxu0 0
    %1842 = vmatpush1.bf16.msra.mxu0 0
    %1843 = vmatprep.subr.bf16.mxu0 0
    %1844 = vmatpush1.bf16.msra.mxu0 0
    %1845 = vmatprep.subr.bf16.mxu0 0
    %1846 = vmatpush1.bf16.msra.mxu0 0
    %1847 = vmatprep.subr.bf16.mxu0 0
    %1848 = vmatpush1.bf16.msra.mxu0 0
    %1849 = vmatprep.subr.bf16.mxu0 0
    %1850 = vmatpush1.bf16.msra.mxu0 0
    %1851 = vmatprep.subr.bf16.mxu0 0
    %1852 = vmatpush1.bf16.msra.mxu0 0
    %1853 = vmatprep.subr.bf16.mxu0 0
    %1854 = vmatpush1.bf16.msra.mxu0 0
    %1855 = vmatprep.subr.bf16.mxu0 0
    %1856 = vmatpush1.bf16.msra.mxu0 0
    %1857 = vmatprep.subr.bf16.mxu0 0
    %1858 = vmatpush1.bf16.msra.mxu0 0
    %1859 = vmatprep.subr.bf16.mxu0 0
    %1860 = vmatpush1.bf16.msra.mxu0 0
    %1861 = vmatprep.subr.bf16.mxu0 0
    %1862 = vmatpush1.bf16.msra.mxu0 0
    %1863 = vmatprep.mubr.bf16.mxu0 0
    %1864 = vmatmul.mubr.bf16.gmra.mrb[0].mxu0 %v1309
    %v1865 = vpop.f32.mrb[0].mxu0
    %v1866 = vadd.f32 %v1793, %v1865
    %v1867 = vpop.f32.mrb[0].mxu0
    %v1868 = vadd.f32 %v1795, %v1867
    %v1869 = vpop.f32.mrb[0].mxu0
    %v1870 = vadd.f32 %v1797, %v1869
    %v1871 = vpop.f32.mrb[0].mxu0
    %v1872 = vadd.f32 %v1799, %v1871
    %1873 = vmatprep.mubr.bf16.mxu0 0
    %1874 = vmatmul.mubr.bf16.gmra.mrb[0].mxu0 %v1312
    %v1875 = vpop.f32.mrb[0].mxu0
    %v1876 = vadd.f32 %v1803, %v1875
    %v1877 = vpop.f32.mrb[0].mxu0
    %v1878 = vadd.f32 %v1805, %v1877
    %v1879 = vpop.f32.mrb[0].mxu0
    %v1880 = vadd.f32 %v1807, %v1879
    %v1881 = vpop.f32.mrb[0].mxu0
    %v1882 = vadd.f32 %v1809, %v1881
    %1883 = vmatprep.mubr.bf16.mxu0 0
    %1884 = vmatmul.mubr.bf16.gmra.mrb[0].mxu0 %v1315
    %v1885 = vpop.f32.mrb[0].mxu0
    %v1886 = vadd.f32 %v1813, %v1885
    %v1887 = vpop.f32.mrb[0].mxu0
    %v1888 = vadd.f32 %v1815, %v1887
    %v1889 = vpop.f32.mrb[0].mxu0
    %v1890 = vadd.f32 %v1817, %v1889
    %v1891 = vpop.f32.mrb[0].mxu0
    %v1892 = vadd.f32 %v1819, %v1891
    %1893 = vmatprep.mubr.bf16.mxu0 0
    %1894 = vmatmul.mubr.bf16.gmra.mrb[0].mxu0 %v1318
    %v1895 = vpop.f32.mrb[0].mxu0
    %v1896 = vadd.f32 %v1823, %v1895
    %v1897 = vpop.f32.mrb[0].mxu0
    %v1898 = vadd.f32 %v1825, %v1897
    %v1899 = vpop.f32.mrb[0].mxu0
    %v1900 = vadd.f32 %v1827, %v1899
    %v1901 = vpop.f32.mrb[0].mxu0
    %v1902 = vadd.f32 %v1829, %v1901
    %1903 = vdwg.mxu0
    %v1904 = vpack.c.bf16 %v1578, %v1574
    %v1905 = vpack.c.bf16 %v1580, %v1576
    %v1906 = vpack.c.bf16 %v1870, %v1866
    %v1907 = vpack.c.bf16 %v1872, %v1868
    %v1908 = vpack.c.bf16 %v1588, %v1584
    %v1909 = vpack.c.bf16 %v1590, %v1586
    %v1910 = vpack.c.bf16 %v1880, %v1876
    %v1911 = vpack.c.bf16 %v1882, %v1878
    %v1912 = vpack.c.bf16 %v1598, %v1594
    %v1913 = vpack.c.bf16 %v1600, %v1596
    %v1914 = vpack.c.bf16 %v1890, %v1886
    %v1915 = vpack.c.bf16 %v1892, %v1888
    %v1916 = vpack.c.bf16 %v1608, %v1604
    %v1917 = vpack.c.bf16 %v1610, %v1606
    %v1918 = vpack.c.bf16 %v1900, %v1896
    %v1919 = vpack.c.bf16 %v1902, %v1898
    %v1921 = vlaneseq
    %v1922 = vshrl.u32 %v1921, 7
    %v1923 = vsub.s32 0, %v1922
    %v1924 = vrot.slane %v326, %v1923
    %v1925 = vlaneseq
    %v1926 = vshrl.u32 %v1925, 7
    %v1927 = vsub.s32 1, %v1926
    %v1928 = vrot.slane %v326, %v1927
    %v1929 = vlaneseq
    %v1930 = vshrl.u32 %v1929, 7
    %v1931 = vsub.s32 2, %v1930
    %v1932 = vrot.slane %v326, %v1931
    %v1933 = vlaneseq
    %v1934 = vshrl.u32 %v1933, 7
    %v1935 = vsub.s32 3, %v1934
    %v1936 = vrot.slane %v326, %v1935
    %v1941 = vpack.c.bf16 %v1924, %v1924
    %v1942 = vpack.c.bf16 %v1928, %v1928
    %v1943 = vpack.c.bf16 %v1932, %v1932
    %v1944 = vpack.c.bf16 %v1936, %v1936
    %v1946 = vpack.i.b16 %v1941, %v1941
    %v1948 = vlaneseq
    %v1949 = vshrl.u32 %v1948, 7
    %v1950 = vsub.s32 0, %v1949
    %v1951 = vrot.slane %v1946, %v1950
    %v1953 = vpack.i.b16 %v1942, %v1942
    %v1955 = vlaneseq
    %v1956 = vshrl.u32 %v1955, 7
    %v1957 = vsub.s32 0, %v1956
    %v1958 = vrot.slane %v1953, %v1957
    %v1960 = vpack.i.b16 %v1943, %v1943
    %v1962 = vlaneseq
    %v1963 = vshrl.u32 %v1962, 7
    %v1964 = vsub.s32 0, %v1963
    %v1965 = vrot.slane %v1960, %v1964
    %v1967 = vpack.i.b16 %v1944, %v1944
    %v1969 = vlaneseq
    %v1970 = vshrl.u32 %v1969, 7
    %v1971 = vsub.s32 0, %v1970
    %v1972 = vrot.slane %v1967, %v1971
    %v1973 = vadd.bf16 %v1904, %v1951
    %v1974 = vadd.bf16 %v1905, %v1958
    %v1975 = vadd.bf16 %v1906, %v1965
    %v1976 = vadd.bf16 %v1907, %v1972
    %v1977 = vadd.bf16 %v1908, %v1951
    %v1978 = vadd.bf16 %v1909, %v1958
    %v1979 = vadd.bf16 %v1910, %v1965
    %v1980 = vadd.bf16 %v1911, %v1972
    %v1981 = vadd.bf16 %v1912, %v1951
    %v1982 = vadd.bf16 %v1913, %v1958
    %v1983 = vadd.bf16 %v1914, %v1965
    %v1984 = vadd.bf16 %v1915, %v1972
    %v1985 = vadd.bf16 %v1916, %v1951
    %v1986 = vadd.bf16 %v1917, %v1958
    %v1987 = vadd.bf16 %v1918, %v1965
    %v1988 = vadd.bf16 %v1919, %v1972
    %vm1989 = vcmp.gt.bf16.partialorder %v1973, 0
    %vm1990 = vcmp.gt.bf16.partialorder %v1974, 0
    %vm1991 = vcmp.gt.bf16.partialorder %v1975, 0
    %vm1992 = vcmp.gt.bf16.partialorder %v1976, 0
    %vm1993 = vcmp.gt.bf16.partialorder %v1977, 0
    %vm1994 = vcmp.gt.bf16.partialorder %v1978, 0
    %vm1995 = vcmp.gt.bf16.partialorder %v1979, 0
    %vm1996 = vcmp.gt.bf16.partialorder %v1980, 0
    %vm1997 = vcmp.gt.bf16.partialorder %v1981, 0
    %vm1998 = vcmp.gt.bf16.partialorder %v1982, 0
    %vm1999 = vcmp.gt.bf16.partialorder %v1983, 0
    %vm2000 = vcmp.gt.bf16.partialorder %v1984, 0
    %vm2001 = vcmp.gt.bf16.partialorder %v1985, 0
    %vm2002 = vcmp.gt.bf16.partialorder %v1986, 0
    %vm2003 = vcmp.gt.bf16.partialorder %v1987, 0
    %vm2004 = vcmp.gt.bf16.partialorder %v1988, 0
    %v2005 = vmul.bf16 %v1973, 1009007652
    %v2006 = vmul.bf16 %v1974, 1009007652
    %v2007 = vmul.bf16 %v1975, 1009007652
    %v2008 = vmul.bf16 %v1976, 1009007652
    %v2009 = vmul.bf16 %v1977, 1009007652
    %v2010 = vmul.bf16 %v1978, 1009007652
    %v2011 = vmul.bf16 %v1979, 1009007652
    %v2012 = vmul.bf16 %v1980, 1009007652
    %v2013 = vmul.bf16 %v1981, 1009007652
    %v2014 = vmul.bf16 %v1982, 1009007652
    %v2015 = vmul.bf16 %v1983, 1009007652
    %v2016 = vmul.bf16 %v1984, 1009007652
    %v2017 = vmul.bf16 %v1985, 1009007652
    %v2018 = vmul.bf16 %v1986, 1009007652
    %v2019 = vmul.bf16 %v1987, 1009007652
    %v2020 = vmul.bf16 %v1988, 1009007652
    %v2021 = vsel %vm1989, %v1973, %v2005
    %v2022 = vsel %vm1990, %v1974, %v2006
    %v2023 = vsel %vm1991, %v1975, %v2007
    %v2024 = vsel %vm1992, %v1976, %v2008
    %v2025 = vsel %vm1993, %v1977, %v2009
    %v2026 = vsel %vm1994, %v1978, %v2010
    %v2027 = vsel %vm1995, %v1979, %v2011
    %v2028 = vsel %vm1996, %v1980, %v2012
    %v2029 = vsel %vm1997, %v1981, %v2013
    %v2030 = vsel %vm1998, %v1982, %v2014
    %v2031 = vsel %vm1999, %v1983, %v2015
    %v2032 = vsel %vm2000, %v1984, %v2016
    %v2033 = vsel %vm2001, %v1985, %v2017
    %v2034 = vsel %vm2002, %v1986, %v2018
    %v2035 = vsel %vm2003, %v1987, %v2019
    %v2036 = vsel %vm2004, %v1988, %v2020
    %v2037 = vld [vmem:[%s2] sm:$0xff]
    %v2038 = vld [vmem:[%s2 + $0x8] sm:$0xff]
    %v2039 = vld [vmem:[%s2 + $0x10] sm:$0xff]
    %v2040 = vld [vmem:[%s2 + $0x18] sm:$0xff]
    %v2041 = vld [vmem:[%s2 + $0x20] sm:$0xff]
    %v2042 = vld [vmem:[%s2 + $0x28] sm:$0xff]
    %v2043 = vld [vmem:[%s2 + $0x30] sm:$0xff]
    %v2044 = vld [vmem:[%s2 + $0x38] sm:$0xff]
    %v2045 = vld [vmem:[%s2 + $0x40] sm:$0xff]
    %v2046 = vld [vmem:[%s2 + $0x48] sm:$0xff]
    %v2047 = vld [vmem:[%s2 + $0x50] sm:$0xff]
    %v2048 = vld [vmem:[%s2 + $0x58] sm:$0xff]
    %v2049 = vld [vmem:[%s2 + $0x60] sm:$0xff]
    %v2050 = vld [vmem:[%s2 + $0x68] sm:$0xff]
    %v2051 = vld [vmem:[%s2 + $0x70] sm:$0xff]
    %v2052 = vld [vmem:[%s2 + $0x78] sm:$0xff]
    %v2053 = vld [vmem:[%s2 + $0x80] sm:$0xff]
    %v2054 = vld [vmem:[%s2 + $0x88] sm:$0xff]
    %v2055 = vld [vmem:[%s2 + $0x90] sm:$0xff]
    %v2056 = vld [vmem:[%s2 + $0x98] sm:$0xff]
    %v2057 = vld [vmem:[%s2 + $0xa0] sm:$0xff]
    %v2058 = vld [vmem:[%s2 + $0xa8] sm:$0xff]
    %v2059 = vld [vmem:[%s2 + $0xb0] sm:$0xff]
    %v2060 = vld [vmem:[%s2 + $0xb8] sm:$0xff]
    %v2061 = vld [vmem:[%s2 + $0xc0] sm:$0xff]
    %v2062 = vld [vmem:[%s2 + $0xc8] sm:$0xff]
    %v2063 = vld [vmem:[%s2 + $0xd0] sm:$0xff]
    %v2064 = vld [vmem:[%s2 + $0xd8] sm:$0xff]
    %v2065 = vld [vmem:[%s2 + $0xe0] sm:$0xff]
    %v2066 = vld [vmem:[%s2 + $0xe8] sm:$0xff]
    %v2067 = vld [vmem:[%s2 + $0xf0] sm:$0xff]
    %v2068 = vld [vmem:[%s2 + $0xf8] sm:$0xff]
    %v2069 = vld [vmem:[%s2 + $0x100] sm:$0xff]
    %v2070 = vld [vmem:[%s2 + $0x108] sm:$0xff]
    %v2071 = vld [vmem:[%s2 + $0x110] sm:$0xff]
    %v2072 = vld [vmem:[%s2 + $0x118] sm:$0xff]
    %v2073 = vld [vmem:[%s2 + $0x120] sm:$0xff]
    %v2074 = vld [vmem:[%s2 + $0x128] sm:$0xff]
    %v2075 = vld [vmem:[%s2 + $0x130] sm:$0xff]
    %v2076 = vld [vmem:[%s2 + $0x138] sm:$0xff]
    %v2077 = vld [vmem:[%s2 + $0x140] sm:$0xff]
    %v2078 = vld [vmem:[%s2 + $0x148] sm:$0xff]
    %v2079 = vld [vmem:[%s2 + $0x150] sm:$0xff]
    %v2080 = vld [vmem:[%s2 + $0x158] sm:$0xff]
    %v2081 = vld [vmem:[%s2 + $0x160] sm:$0xff]
    %v2082 = vld [vmem:[%s2 + $0x168] sm:$0xff]
    %v2083 = vld [vmem:[%s2 + $0x170] sm:$0xff]
    %v2084 = vld [vmem:[%s2 + $0x178] sm:$0xff]
    %v2085 = vld [vmem:[%s2 + $0x180] sm:$0xff]
    %v2086 = vld [vmem:[%s2 + $0x188] sm:$0xff]
    %v2087 = vld [vmem:[%s2 + $0x190] sm:$0xff]
    %v2088 = vld [vmem:[%s2 + $0x198] sm:$0xff]
    %v2089 = vld [vmem:[%s2 + $0x1a0] sm:$0xff]
    %v2090 = vld [vmem:[%s2 + $0x1a8] sm:$0xff]
    %v2091 = vld [vmem:[%s2 + $0x1b0] sm:$0xff]
    %v2092 = vld [vmem:[%s2 + $0x1b8] sm:$0xff]
    %v2093 = vld [vmem:[%s2 + $0x1c0] sm:$0xff]
    %v2094 = vld [vmem:[%s2 + $0x1c8] sm:$0xff]
    %v2095 = vld [vmem:[%s2 + $0x1d0] sm:$0xff]
    %v2096 = vld [vmem:[%s2 + $0x1d8] sm:$0xff]
    %v2097 = vld [vmem:[%s2 + $0x1e0] sm:$0xff]
    %v2098 = vld [vmem:[%s2 + $0x1e8] sm:$0xff]
    %v2099 = vld [vmem:[%s2 + $0x1f0] sm:$0xff]
    %v2100 = vld [vmem:[%s2 + $0x1f8] sm:$0xff]
    %v2101 = vld [vmem:[%s11 + $0x4] sm:$0x3]
    %v2166 = vunpack.c.l.b16 %v2037
    %v2167 = vunpack.c.h.b16 %v2037
    %v2168 = vunpack.c.l.b16 %v2038
    %v2169 = vunpack.c.h.b16 %v2038
    %v2170 = vunpack.c.l.b16 %v2039
    %v2171 = vunpack.c.h.b16 %v2039
    %v2172 = vunpack.c.l.b16 %v2040
    %v2173 = vunpack.c.h.b16 %v2040
    %v2174 = vunpack.c.l.b16 %v2041
    %v2175 = vunpack.c.h.b16 %v2041
    %v2176 = vunpack.c.l.b16 %v2042
    %v2177 = vunpack.c.h.b16 %v2042
    %v2178 = vunpack.c.l.b16 %v2043
    %v2179 = vunpack.c.h.b16 %v2043
    %v2180 = vunpack.c.l.b16 %v2044
    %v2181 = vunpack.c.h.b16 %v2044
    %v2182 = vunpack.c.l.b16 %v2045
    %v2183 = vunpack.c.h.b16 %v2045
    %v2184 = vunpack.c.l.b16 %v2046
    %v2185 = vunpack.c.h.b16 %v2046
    %v2186 = vunpack.c.l.b16 %v2047
    %v2187 = vunpack.c.h.b16 %v2047
    %v2188 = vunpack.c.l.b16 %v2048
    %v2189 = vunpack.c.h.b16 %v2048
    %v2190 = vunpack.c.l.b16 %v2049
    %v2191 = vunpack.c.h.b16 %v2049
    %v2192 = vunpack.c.l.b16 %v2050
    %v2193 = vunpack.c.h.b16 %v2050
    %v2194 = vunpack.c.l.b16 %v2051
    %v2195 = vunpack.c.h.b16 %v2051
    %v2196 = vunpack.c.l.b16 %v2052
    %v2197 = vunpack.c.h.b16 %v2052
    %v2198 = vunpack.c.l.b16 %v2053
    %v2199 = vunpack.c.h.b16 %v2053
    %v2200 = vunpack.c.l.b16 %v2054
    %v2201 = vunpack.c.h.b16 %v2054
    %v2202 = vunpack.c.l.b16 %v2055
    %v2203 = vunpack.c.h.b16 %v2055
    %v2204 = vunpack.c.l.b16 %v2056
    %v2205 = vunpack.c.h.b16 %v2056
    %v2206 = vunpack.c.l.b16 %v2057
    %v2207 = vunpack.c.h.b16 %v2057
    %v2208 = vunpack.c.l.b16 %v2058
    %v2209 = vunpack.c.h.b16 %v2058
    %v2210 = vunpack.c.l.b16 %v2059
    %v2211 = vunpack.c.h.b16 %v2059
    %v2212 = vunpack.c.l.b16 %v2060
    %v2213 = vunpack.c.h.b16 %v2060
    %v2214 = vunpack.c.l.b16 %v2061
    %v2215 = vunpack.c.h.b16 %v2061
    %v2216 = vunpack.c.l.b16 %v2062
    %v2217 = vunpack.c.h.b16 %v2062
    %v2218 = vunpack.c.l.b16 %v2063
    %v2219 = vunpack.c.h.b16 %v2063
    %v2220 = vunpack.c.l.b16 %v2064
    %v2221 = vunpack.c.h.b16 %v2064
    %v2222 = vunpack.c.l.b16 %v2065
    %v2223 = vunpack.c.h.b16 %v2065
    %v2224 = vunpack.c.l.b16 %v2066
    %v2225 = vunpack.c.h.b16 %v2066
    %v2226 = vunpack.c.l.b16 %v2067
    %v2227 = vunpack.c.h.b16 %v2067
    %v2228 = vunpack.c.l.b16 %v2068
    %v2229 = vunpack.c.h.b16 %v2068
    %v2230 = vunpack.c.l.b16 %v2069
    %v2231 = vunpack.c.h.b16 %v2069
    %v2232 = vunpack.c.l.b16 %v2070
    %v2233 = vunpack.c.h.b16 %v2070
    %v2234 = vunpack.c.l.b16 %v2071
    %v2235 = vunpack.c.h.b16 %v2071
    %v2236 = vunpack.c.l.b16 %v2072
    %v2237 = vunpack.c.h.b16 %v2072
    %v2238 = vunpack.c.l.b16 %v2073
    %v2239 = vunpack.c.h.b16 %v2073
    %v2240 = vunpack.c.l.b16 %v2074
    %v2241 = vunpack.c.h.b16 %v2074
    %v2242 = vunpack.c.l.b16 %v2075
    %v2243 = vunpack.c.h.b16 %v2075
    %v2244 = vunpack.c.l.b16 %v2076
    %v2245 = vunpack.c.h.b16 %v2076
    %v2246 = vunpack.c.l.b16 %v2077
    %v2247 = vunpack.c.h.b16 %v2077
    %v2248 = vunpack.c.l.b16 %v2078
    %v2249 = vunpack.c.h.b16 %v2078
    %v2250 = vunpack.c.l.b16 %v2079
    %v2251 = vunpack.c.h.b16 %v2079
    %v2252 = vunpack.c.l.b16 %v2080
    %v2253 = vunpack.c.h.b16 %v2080
    %v2254 = vunpack.c.l.b16 %v2081
    %v2255 = vunpack.c.h.b16 %v2081
    %v2256 = vunpack.c.l.b16 %v2082
    %v2257 = vunpack.c.h.b16 %v2082
    %v2258 = vunpack.c.l.b16 %v2083
    %v2259 = vunpack.c.h.b16 %v2083
    %v2260 = vunpack.c.l.b16 %v2084
    %v2261 = vunpack.c.h.b16 %v2084
    %v2262 = vunpack.c.l.b16 %v2085
    %v2263 = vunpack.c.h.b16 %v2085
    %v2264 = vunpack.c.l.b16 %v2086
    %v2265 = vunpack.c.h.b16 %v2086
    %v2266 = vunpack.c.l.b16 %v2087
    %v2267 = vunpack.c.h.b16 %v2087
    %v2268 = vunpack.c.l.b16 %v2088
    %v2269 = vunpack.c.h.b16 %v2088
    %v2270 = vunpack.c.l.b16 %v2089
    %v2271 = vunpack.c.h.b16 %v2089
    %v2272 = vunpack.c.l.b16 %v2090
    %v2273 = vunpack.c.h.b16 %v2090
    %v2274 = vunpack.c.l.b16 %v2091
    %v2275 = vunpack.c.h.b16 %v2091
    %v2276 = vunpack.c.l.b16 %v2092
    %v2277 = vunpack.c.h.b16 %v2092
    %v2278 = vunpack.c.l.b16 %v2093
    %v2279 = vunpack.c.h.b16 %v2093
    %v2280 = vunpack.c.l.b16 %v2094
    %v2281 = vunpack.c.h.b16 %v2094
    %v2282 = vunpack.c.l.b16 %v2095
    %v2283 = vunpack.c.h.b16 %v2095
    %v2284 = vunpack.c.l.b16 %v2096
    %v2285 = vunpack.c.h.b16 %v2096
    %v2286 = vunpack.c.l.b16 %v2097
    %v2287 = vunpack.c.h.b16 %v2097
    %v2288 = vunpack.c.l.b16 %v2098
    %v2289 = vunpack.c.h.b16 %v2098
    %v2290 = vunpack.c.l.b16 %v2099
    %v2291 = vunpack.c.h.b16 %v2099
    %v2292 = vunpack.c.l.b16 %v2100
    %v2293 = vunpack.c.h.b16 %v2100
    %v2294 = vpack.c.b16 %v2168, %v2166
    %v2295 = vpack.c.b16 %v2169, %v2167
    %v2296 = vpack.c.b16 %v2172, %v2170
    %v2297 = vpack.c.b16 %v2173, %v2171
    %v2298 = vpack.c.b16 %v2176, %v2174
    %v2299 = vpack.c.b16 %v2177, %v2175
    %v2300 = vpack.c.b16 %v2180, %v2178
    %v2301 = vpack.c.b16 %v2181, %v2179
    %v2302 = vpack.c.b16 %v2184, %v2182
    %v2303 = vpack.c.b16 %v2185, %v2183
    %v2304 = vpack.c.b16 %v2188, %v2186
    %v2305 = vpack.c.b16 %v2189, %v2187
    %v2306 = vpack.c.b16 %v2192, %v2190
    %v2307 = vpack.c.b16 %v2193, %v2191
    %v2308 = vpack.c.b16 %v2196, %v2194
    %v2309 = vpack.c.b16 %v2197, %v2195
    %v2310 = vpack.c.b16 %v2200, %v2198
    %v2311 = vpack.c.b16 %v2201, %v2199
    %v2312 = vpack.c.b16 %v2204, %v2202
    %v2313 = vpack.c.b16 %v2205, %v2203
    %v2314 = vpack.c.b16 %v2208, %v2206
    %v2315 = vpack.c.b16 %v2209, %v2207
    %v2316 = vpack.c.b16 %v2212, %v2210
    %v2317 = vpack.c.b16 %v2213, %v2211
    %v2318 = vpack.c.b16 %v2216, %v2214
    %v2319 = vpack.c.b16 %v2217, %v2215
    %v2320 = vpack.c.b16 %v2220, %v2218
    %v2321 = vpack.c.b16 %v2221, %v2219
    %v2322 = vpack.c.b16 %v2224, %v2222
    %v2323 = vpack.c.b16 %v2225, %v2223
    %v2324 = vpack.c.b16 %v2228, %v2226
    %v2325 = vpack.c.b16 %v2229, %v2227
    %v2326 = vpack.c.b16 %v2232, %v2230
    %v2327 = vpack.c.b16 %v2233, %v2231
    %v2328 = vpack.c.b16 %v2236, %v2234
    %v2329 = vpack.c.b16 %v2237, %v2235
    %v2330 = vpack.c.b16 %v2240, %v2238
    %v2331 = vpack.c.b16 %v2241, %v2239
    %v2332 = vpack.c.b16 %v2244, %v2242
    %v2333 = vpack.c.b16 %v2245, %v2243
    %v2334 = vpack.c.b16 %v2248, %v2246
    %v2335 = vpack.c.b16 %v2249, %v2247
    %v2336 = vpack.c.b16 %v2252, %v2250
    %v2337 = vpack.c.b16 %v2253, %v2251
    %v2338 = vpack.c.b16 %v2256, %v2254
    %v2339 = vpack.c.b16 %v2257, %v2255
    %v2340 = vpack.c.b16 %v2260, %v2258
    %v2341 = vpack.c.b16 %v2261, %v2259
    %v2342 = vpack.c.b16 %v2264, %v2262
    %v2343 = vpack.c.b16 %v2265, %v2263
    %v2344 = vpack.c.b16 %v2268, %v2266
    %v2345 = vpack.c.b16 %v2269, %v2267
    %v2346 = vpack.c.b16 %v2272, %v2270
    %v2347 = vpack.c.b16 %v2273, %v2271
    %v2348 = vpack.c.b16 %v2276, %v2274
    %v2349 = vpack.c.b16 %v2277, %v2275
    %v2350 = vpack.c.b16 %v2280, %v2278
    %v2351 = vpack.c.b16 %v2281, %v2279
    %v2352 = vpack.c.b16 %v2284, %v2282
    %v2353 = vpack.c.b16 %v2285, %v2283
    %v2354 = vpack.c.b16 %v2288, %v2286
    %v2355 = vpack.c.b16 %v2289, %v2287
    %v2356 = vpack.c.b16 %v2292, %v2290
    %v2357 = vpack.c.b16 %v2293, %v2291
    %2422 = vmatprep.subr.bf16.mxu0 %v2295
    %2423 = vmatpush1.bf16.msra.mxu0 %v2294
    %2424 = vmatprep.subr.bf16.mxu0 %v2297
    %2425 = vmatpush1.bf16.msra.mxu0 %v2296
    %2426 = vmatprep.subr.bf16.mxu0 %v2299
    %2427 = vmatpush1.bf16.msra.mxu0 %v2298
    %2428 = vmatprep.subr.bf16.mxu0 %v2301
    %2429 = vmatpush1.bf16.msra.mxu0 %v2300
    %2430 = vmatprep.subr.bf16.mxu0 %v2303
    %2431 = vmatpush1.bf16.msra.mxu0 %v2302
    %2432 = vmatprep.subr.bf16.mxu0 %v2305
    %2433 = vmatpush1.bf16.msra.mxu0 %v2304
    %2434 = vmatprep.subr.bf16.mxu0 %v2307
    %2435 = vmatpush1.bf16.msra.mxu0 %v2306
    %2436 = vmatprep.subr.bf16.mxu0 %v2309
    %2437 = vmatpush1.bf16.msra.mxu0 %v2308
    %2438 = vmatprep.subr.bf16.mxu0 %v2311
    %2439 = vmatpush1.bf16.msra.mxu0 %v2310
    %2440 = vmatprep.subr.bf16.mxu0 %v2313
    %2441 = vmatpush1.bf16.msra.mxu0 %v2312
    %2442 = vmatprep.subr.bf16.mxu0 %v2315
    %2443 = vmatpush1.bf16.msra.mxu0 %v2314
    %2444 = vmatprep.subr.bf16.mxu0 %v2317
    %2445 = vmatpush1.bf16.msra.mxu0 %v2316
    %2446 = vmatprep.subr.bf16.mxu0 %v2319
    %2447 = vmatpush1.bf16.msra.mxu0 %v2318
    %2448 = vmatprep.subr.bf16.mxu0 %v2321
    %2449 = vmatpush1.bf16.msra.mxu0 %v2320
    %2450 = vmatprep.subr.bf16.mxu0 %v2323
    %2451 = vmatpush1.bf16.msra.mxu0 %v2322
    %2452 = vmatprep.subr.bf16.mxu0 %v2325
    %2453 = vmatpush1.bf16.msra.mxu0 %v2324
    %2454 = vmatprep.mubr.bf16.mxu0 %v2022
    %2455 = vmatmul.mubr.bf16.gmra.mrb[0].mxu0 %v2021
    %v2456 = vpop.f32.mrb[0].mxu0
    %v2457 = vadd.f32 0.0, %v2456
    %v2458 = vpop.f32.mrb[0].mxu0
    %v2459 = vadd.f32 0.0, %v2458
    %v2460 = vpop.f32.mrb[0].mxu0
    %v2461 = vadd.f32 0.0, %v2460
    %v2462 = vpop.f32.mrb[0].mxu0
    %v2463 = vadd.f32 0.0, %v2462
    %2464 = vmatprep.mubr.bf16.mxu0 %v2026
    %2465 = vmatmul.mubr.bf16.gmra.mrb[0].mxu0 %v2025
    %v2466 = vpop.f32.mrb[0].mxu0
    %v2467 = vadd.f32 0.0, %v2466
    %v2468 = vpop.f32.mrb[0].mxu0
    %v2469 = vadd.f32 0.0, %v2468
    %v2470 = vpop.f32.mrb[0].mxu0
    %v2471 = vadd.f32 0.0, %v2470
    %v2472 = vpop.f32.mrb[0].mxu0
    %v2473 = vadd.f32 0.0, %v2472
    %2474 = vmatprep.mubr.bf16.mxu0 %v2030
    %2475 = vmatmul.mubr.bf16.gmra.mrb[0].mxu0 %v2029
    %v2476 = vpop.f32.mrb[0].mxu0
    %v2477 = vadd.f32 0.0, %v2476
    %v2478 = vpop.f32.mrb[0].mxu0
    %v2479 = vadd.f32 0.0, %v2478
    %v2480 = vpop.f32.mrb[0].mxu0
    %v2481 = vadd.f32 0.0, %v2480
    %v2482 = vpop.f32.mrb[0].mxu0
    %v2483 = vadd.f32 0.0, %v2482
    %2484 = vmatprep.mubr.bf16.mxu0 %v2034
    %2485 = vmatmul.mubr.bf16.gmra.mrb[0].mxu0 %v2033
    %v2486 = vpop.f32.mrb[0].mxu0
    %v2487 = vadd.f32 0.0, %v2486
    %v2488 = vpop.f32.mrb[0].mxu0
    %v2489 = vadd.f32 0.0, %v2488
    %v2490 = vpop.f32.mrb[0].mxu0
    %v2491 = vadd.f32 0.0, %v2490
    %v2492 = vpop.f32.mrb[0].mxu0
    %v2493 = vadd.f32 0.0, %v2492
    %2494 = vdwg.mxu0
    %2495 = vmatprep.subr.bf16.mxu0 %v2327
    %2496 = vmatpush1.bf16.msra.mxu0 %v2326
    %2497 = vmatprep.subr.bf16.mxu0 %v2329
    %2498 = vmatpush1.bf16.msra.mxu0 %v2328
    %2499 = vmatprep.subr.bf16.mxu0 %v2331
    %2500 = vmatpush1.bf16.msra.mxu0 %v2330
    %2501 = vmatprep.subr.bf16.mxu0 %v2333
    %2502 = vmatpush1.bf16.msra.mxu0 %v2332
    %2503 = vmatprep.subr.bf16.mxu0 %v2335
    %2504 = vmatpush1.bf16.msra.mxu0 %v2334
    %2505 = vmatprep.subr.bf16.mxu0 %v2337
    %2506 = vmatpush1.bf16.msra.mxu0 %v2336
    %2507 = vmatprep.subr.bf16.mxu0 %v2339
    %2508 = vmatpush1.bf16.msra.mxu0 %v2338
    %2509 = vmatprep.subr.bf16.mxu0 %v2341
    %2510 = vmatpush1.bf16.msra.mxu0 %v2340
    %2511 = vmatprep.subr.bf16.mxu0 %v2343
    %2512 = vmatpush1.bf16.msra.mxu0 %v2342
    %2513 = vmatprep.subr.bf16.mxu0 %v2345
    %2514 = vmatpush1.bf16.msra.mxu0 %v2344
    %2515 = vmatprep.subr.bf16.mxu0 %v2347
    %2516 = vmatpush1.bf16.msra.mxu0 %v2346
    %2517 = vmatprep.subr.bf16.mxu0 %v2349
    %2518 = vmatpush1.bf16.msra.mxu0 %v2348
    %2519 = vmatprep.subr.bf16.mxu0 %v2351
    %2520 = vmatpush1.bf16.msra.mxu0 %v2350
    %2521 = vmatprep.subr.bf16.mxu0 %v2353
    %2522 = vmatpush1.bf16.msra.mxu0 %v2352
    %2523 = vmatprep.subr.bf16.mxu0 %v2355
    %2524 = vmatpush1.bf16.msra.mxu0 %v2354
    %2525 = vmatprep.subr.bf16.mxu0 %v2357
    %2526 = vmatpush1.bf16.msra.mxu0 %v2356
    %2527 = vmatprep.mubr.bf16.mxu0 %v2024
    %2528 = vmatmul.mubr.bf16.gmra.mrb[0].mxu0 %v2023
    %v2529 = vpop.f32.mrb[0].mxu0
    %v2530 = vadd.f32 %v2457, %v2529
    %v2531 = vpop.f32.mrb[0].mxu0
    %v2532 = vadd.f32 %v2459, %v2531
    %v2533 = vpop.f32.mrb[0].mxu0
    %v2534 = vadd.f32 %v2461, %v2533
    %v2535 = vpop.f32.mrb[0].mxu0
    %v2536 = vadd.f32 %v2463, %v2535
    %2537 = vmatprep.mubr.bf16.mxu0 %v2028
    %2538 = vmatmul.mubr.bf16.gmra.mrb[0].mxu0 %v2027
    %v2539 = vpop.f32.mrb[0].mxu0
    %v2540 = vadd.f32 %v2467, %v2539
    %v2541 = vpop.f32.mrb[0].mxu0
    %v2542 = vadd.f32 %v2469, %v2541
    %v2543 = vpop.f32.mrb[0].mxu0
    %v2544 = vadd.f32 %v2471, %v2543
    %v2545 = vpop.f32.mrb[0].mxu0
    %v2546 = vadd.f32 %v2473, %v2545
    %2547 = vmatprep.mubr.bf16.mxu0 %v2032
    %2548 = vmatmul.mubr.bf16.gmra.mrb[0].mxu0 %v2031
    %v2549 = vpop.f32.mrb[0].mxu0
    %v2550 = vadd.f32 %v2477, %v2549
    %v2551 = vpop.f32.mrb[0].mxu0
    %v2552 = vadd.f32 %v2479, %v2551
    %v2553 = vpop.f32.mrb[0].mxu0
    %v2554 = vadd.f32 %v2481, %v2553
    %v2555 = vpop.f32.mrb[0].mxu0
    %v2556 = vadd.f32 %v2483, %v2555
    %2557 = vmatprep.mubr.bf16.mxu0 %v2036
    %2558 = vmatmul.mubr.bf16.gmra.mrb[0].mxu0 %v2035
    %v2559 = vpop.f32.mrb[0].mxu0
    %v2560 = vadd.f32 %v2487, %v2559
    %v2561 = vpop.f32.mrb[0].mxu0
    %v2562 = vadd.f32 %v2489, %v2561
    %v2563 = vpop.f32.mrb[0].mxu0
    %v2564 = vadd.f32 %v2491, %v2563
    %v2565 = vpop.f32.mrb[0].mxu0
    %v2566 = vadd.f32 %v2493, %v2565
    %2567 = vdwg.mxu0
    %v2568 = vpack.c.bf16 %v2534, %v2530
    %v2569 = vpack.c.bf16 %v2536, %v2532
    %v2570 = vpack.c.bf16 %v2544, %v2540
    %v2571 = vpack.c.bf16 %v2546, %v2542
    %v2572 = vpack.c.bf16 %v2554, %v2550
    %v2573 = vpack.c.bf16 %v2556, %v2552
    %v2574 = vpack.c.bf16 %v2564, %v2560
    %v2575 = vpack.c.bf16 %v2566, %v2562
    %v2577 = vlaneseq
    %v2578 = vshrl.u32 %v2577, 7
    %v2579 = vsub.s32 0, %v2578
    %v2580 = vrot.slane %v2101, %v2579
    %v2581 = vlaneseq
    %v2582 = vshrl.u32 %v2581, 7
    %v2583 = vsub.s32 1, %v2582
    %v2584 = vrot.slane %v2101, %v2583
    %v2587 = vpack.c.bf16 %v2580, %v2580
    %v2588 = vpack.c.bf16 %v2584, %v2584
    %v2590 = vpack.i.b16 %v2587, %v2587
    %v2592 = vlaneseq
    %v2593 = vshrl.u32 %v2592, 7
    %v2594 = vsub.s32 0, %v2593
    %v2595 = vrot.slane %v2590, %v2594
    %v2597 = vpack.i.b16 %v2588, %v2588
    %v2599 = vlaneseq
    %v2600 = vshrl.u32 %v2599, 7
    %v2601 = vsub.s32 0, %v2600
    %v2602 = vrot.slane %v2597, %v2601
    %v2603 = vadd.bf16 %v2568, %v2595
    %v2604 = vadd.bf16 %v2569, %v2602
    %v2605 = vadd.bf16 %v2570, %v2595
    %v2606 = vadd.bf16 %v2571, %v2602
    %v2607 = vadd.bf16 %v2572, %v2595
    %v2608 = vadd.bf16 %v2573, %v2602
    %v2609 = vadd.bf16 %v2574, %v2595
    %v2610 = vadd.bf16 %v2575, %v2602
    %vm2611 = vcmp.gt.bf16.partialorder %v2603, 0
    %vm2612 = vcmp.gt.bf16.partialorder %v2604, 0
    %vm2613 = vcmp.gt.bf16.partialorder %v2605, 0
    %vm2614 = vcmp.gt.bf16.partialorder %v2606, 0
    %vm2615 = vcmp.gt.bf16.partialorder %v2607, 0
    %vm2616 = vcmp.gt.bf16.partialorder %v2608, 0
    %vm2617 = vcmp.gt.bf16.partialorder %v2609, 0
    %vm2618 = vcmp.gt.bf16.partialorder %v2610, 0
    %v2619 = vmul.bf16 %v2603, 1009007652
    %v2620 = vmul.bf16 %v2604, 1009007652
    %v2621 = vmul.bf16 %v2605, 1009007652
    %v2622 = vmul.bf16 %v2606, 1009007652
    %v2623 = vmul.bf16 %v2607, 1009007652
    %v2624 = vmul.bf16 %v2608, 1009007652
    %v2625 = vmul.bf16 %v2609, 1009007652
    %v2626 = vmul.bf16 %v2610, 1009007652
    %v2627 = vsel %vm2611, %v2603, %v2619
    %v2628 = vsel %vm2612, %v2604, %v2620
    %v2629 = vsel %vm2613, %v2605, %v2621
    %v2630 = vsel %vm2614, %v2606, %v2622
    %v2631 = vsel %vm2615, %v2607, %v2623
    %v2632 = vsel %vm2616, %v2608, %v2624
    %v2633 = vsel %vm2617, %v2609, %v2625
    %v2634 = vsel %vm2618, %v2610, %v2626
    %v2635 = vld [vmem:[%s3] sm:$0xf]
    %v2636 = vld [vmem:[%s3 + $0x4] sm:$0xf]
    %v2637 = vld [vmem:[%s3 + $0x8] sm:$0xf]
    %v2638 = vld [vmem:[%s3 + $0xc] sm:$0xf]
    %v2639 = vld [vmem:[%s3 + $0x10] sm:$0xf]
    %v2640 = vld [vmem:[%s3 + $0x14] sm:$0xf]
    %v2641 = vld [vmem:[%s3 + $0x18] sm:$0xf]
    %v2642 = vld [vmem:[%s3 + $0x1c] sm:$0xf]
    %v2643 = vld [vmem:[%s3 + $0x20] sm:$0xf]
    %v2644 = vld [vmem:[%s3 + $0x24] sm:$0xf]
    %v2645 = vld [vmem:[%s3 + $0x28] sm:$0xf]
    %v2646 = vld [vmem:[%s3 + $0x2c] sm:$0xf]
    %v2647 = vld [vmem:[%s3 + $0x30] sm:$0xf]
    %v2648 = vld [vmem:[%s3 + $0x34] sm:$0xf]
    %v2649 = vld [vmem:[%s3 + $0x38] sm:$0xf]
    %v2650 = vld [vmem:[%s3 + $0x3c] sm:$0xf]
    %v2651 = vld [vmem:[%s3 + $0x40] sm:$0xf]
    %v2652 = vld [vmem:[%s3 + $0x44] sm:$0xf]
    %v2653 = vld [vmem:[%s3 + $0x48] sm:$0xf]
    %v2654 = vld [vmem:[%s3 + $0x4c] sm:$0xf]
    %v2655 = vld [vmem:[%s3 + $0x50] sm:$0xf]
    %v2656 = vld [vmem:[%s3 + $0x54] sm:$0xf]
    %v2657 = vld [vmem:[%s3 + $0x58] sm:$0xf]
    %v2658 = vld [vmem:[%s3 + $0x5c] sm:$0xf]
    %v2659 = vld [vmem:[%s3 + $0x60] sm:$0xf]
    %v2660 = vld [vmem:[%s3 + $0x64] sm:$0xf]
    %v2661 = vld [vmem:[%s3 + $0x68] sm:$0xf]
    %v2662 = vld [vmem:[%s3 + $0x6c] sm:$0xf]
    %v2663 = vld [vmem:[%s3 + $0x70] sm:$0xf]
    %v2664 = vld [vmem:[%s3 + $0x74] sm:$0xf]
    %v2665 = vld [vmem:[%s3 + $0x78] sm:$0xf]
    %v2666 = vld [vmem:[%s3 + $0x7c] sm:$0xf]
    %v2667 = vld [vmem:[%s11 + $0x6] sm:$0x1]
    %v2700 = vunpack.c.l.b16 %v2635
    %v2701 = vunpack.c.l.b16 %v2636
    %v2702 = vunpack.c.l.b16 %v2637
    %v2703 = vunpack.c.l.b16 %v2638
    %v2704 = vunpack.c.l.b16 %v2639
    %v2705 = vunpack.c.l.b16 %v2640
    %v2706 = vunpack.c.l.b16 %v2641
    %v2707 = vunpack.c.l.b16 %v2642
    %v2708 = vunpack.c.l.b16 %v2643
    %v2709 = vunpack.c.l.b16 %v2644
    %v2710 = vunpack.c.l.b16 %v2645
    %v2711 = vunpack.c.l.b16 %v2646
    %v2712 = vunpack.c.l.b16 %v2647
    %v2713 = vunpack.c.l.b16 %v2648
    %v2714 = vunpack.c.l.b16 %v2649
    %v2715 = vunpack.c.l.b16 %v2650
    %v2716 = vunpack.c.l.b16 %v2651
    %v2717 = vunpack.c.l.b16 %v2652
    %v2718 = vunpack.c.l.b16 %v2653
    %v2719 = vunpack.c.l.b16 %v2654
    %v2720 = vunpack.c.l.b16 %v2655
    %v2721 = vunpack.c.l.b16 %v2656
    %v2722 = vunpack.c.l.b16 %v2657
    %v2723 = vunpack.c.l.b16 %v2658
    %v2724 = vunpack.c.l.b16 %v2659
    %v2725 = vunpack.c.l.b16 %v2660
    %v2726 = vunpack.c.l.b16 %v2661
    %v2727 = vunpack.c.l.b16 %v2662
    %v2728 = vunpack.c.l.b16 %v2663
    %v2729 = vunpack.c.l.b16 %v2664
    %v2730 = vunpack.c.l.b16 %v2665
    %v2731 = vunpack.c.l.b16 %v2666
    %v2732 = vpack.c.b16 %v2701, %v2700
    %v2733 = vpack.c.b16 %v2703, %v2702
    %v2734 = vpack.c.b16 %v2705, %v2704
    %v2735 = vpack.c.b16 %v2707, %v2706
    %v2736 = vpack.c.b16 %v2709, %v2708
    %v2737 = vpack.c.b16 %v2711, %v2710
    %v2738 = vpack.c.b16 %v2713, %v2712
    %v2739 = vpack.c.b16 %v2715, %v2714
    %v2740 = vpack.c.b16 %v2717, %v2716
    %v2741 = vpack.c.b16 %v2719, %v2718
    %v2742 = vpack.c.b16 %v2721, %v2720
    %v2743 = vpack.c.b16 %v2723, %v2722
    %v2744 = vpack.c.b16 %v2725, %v2724
    %v2745 = vpack.c.b16 %v2727, %v2726
    %v2746 = vpack.c.b16 %v2729, %v2728
    %v2747 = vpack.c.b16 %v2731, %v2730
    %2764 = vmatprep.subr.bf16.mxu0 0
    %2765 = vmatpush1.bf16.msra.mxu0 %v2732
    %2766 = vmatprep.subr.bf16.mxu0 0
    %2767 = vmatpush1.bf16.msra.mxu0 %v2733
    %2768 = vmatprep.subr.bf16.mxu0 0
    %2769 = vmatpush1.bf16.msra.mxu0 %v2734
    %2770 = vmatprep.subr.bf16.mxu0 0
    %2771 = vmatpush1.bf16.msra.mxu0 %v2735
    %2772 = vmatprep.subr.bf16.mxu0 0
    %2773 = vmatpush1.bf16.msra.mxu0 %v2736
    %2774 = vmatprep.subr.bf16.mxu0 0
    %2775 = vmatpush1.bf16.msra.mxu0 %v2737
    %2776 = vmatprep.subr.bf16.mxu0 0
    %2777 = vmatpush1.bf16.msra.mxu0 %v2738
    %2778 = vmatprep.subr.bf16.mxu0 0
    %2779 = vmatpush1.bf16.msra.mxu0 %v2739
    %2780 = vmatprep.subr.bf16.mxu0 0
    %2781 = vmatpush1.bf16.msra.mxu0 %v2740
    %2782 = vmatprep.subr.bf16.mxu0 0
    %2783 = vmatpush1.bf16.msra.mxu0 %v2741
    %2784 = vmatprep.subr.bf16.mxu0 0
    %2785 = vmatpush1.bf16.msra.mxu0 %v2742
    %2786 = vmatprep.subr.bf16.mxu0 0
    %2787 = vmatpush1.bf16.msra.mxu0 %v2743
    %2788 = vmatprep.subr.bf16.mxu0 0
    %2789 = vmatpush1.bf16.msra.mxu0 %v2744
    %2790 = vmatprep.subr.bf16.mxu0 0
    %2791 = vmatpush1.bf16.msra.mxu0 %v2745
    %2792 = vmatprep.subr.bf16.mxu0 0
    %2793 = vmatpush1.bf16.msra.mxu0 %v2746
    %2794 = vmatprep.subr.bf16.mxu0 0
    %2795 = vmatpush1.bf16.msra.mxu0 %v2747
    %2796 = vmatprep.mubr.bf16.mxu0 %v2628
    %2797 = vmatmul.mubr.bf16.gmra.mrb[0].mxu0 %v2627
    %v2798 = vpop.f32.mrb[0].mxu0
    %v2799 = vadd.f32 0.0, %v2798
    %v2800 = vpop.f32.mrb[0].mxu0
    %v2801 = vpop.f32.mrb[0].mxu0
    %v2802 = vadd.f32 0.0, %v2801
    %v2803 = vpop.f32.mrb[0].mxu0
    %2804 = vmatprep.mubr.bf16.mxu0 %v2630
    %2805 = vmatmul.mubr.bf16.gmra.mrb[0].mxu0 %v2629
    %v2806 = vpop.f32.mrb[0].mxu0
    %v2807 = vadd.f32 0.0, %v2806
    %v2808 = vpop.f32.mrb[0].mxu0
    %v2809 = vpop.f32.mrb[0].mxu0
    %v2810 = vadd.f32 0.0, %v2809
    %v2811 = vpop.f32.mrb[0].mxu0
    %2812 = vmatprep.mubr.bf16.mxu0 %v2632
    %2813 = vmatmul.mubr.bf16.gmra.mrb[0].mxu0 %v2631
    %v2814 = vpop.f32.mrb[0].mxu0
    %v2815 = vadd.f32 0.0, %v2814
    %v2816 = vpop.f32.mrb[0].mxu0
    %v2817 = vpop.f32.mrb[0].mxu0
    %v2818 = vadd.f32 0.0, %v2817
    %v2819 = vpop.f32.mrb[0].mxu0
    %2820 = vmatprep.mubr.bf16.mxu0 %v2634
    %2821 = vmatmul.mubr.bf16.gmra.mrb[0].mxu0 %v2633
    %v2822 = vpop.f32.mrb[0].mxu0
    %v2823 = vadd.f32 0.0, %v2822
    %v2824 = vpop.f32.mrb[0].mxu0
    %v2825 = vpop.f32.mrb[0].mxu0
    %v2826 = vadd.f32 0.0, %v2825
    %v2827 = vpop.f32.mrb[0].mxu0
    %2828 = vdwg.mxu0
    %v2829 = vpack.c.bf16 %v2802, %v2799
    %v2830 = vpack.c.bf16 %v2810, %v2807
    %v2831 = vpack.c.bf16 %v2818, %v2815
    %v2832 = vpack.c.bf16 %v2826, %v2823
    %v2833 = vpack.c.bf16 %v2667, %v2667
    %v2835 = vpack.i.b16 %v2833, %v2833
    %v2837 = vlaneseq
    %v2838 = vshrl.u32 %v2837, 7
    %v2839 = vsub.s32 0, %v2838
    %v2840 = vrot.slane %v2835, %v2839
    %v2841 = vadd.bf16 %v2829, %v2840
    %v2842 = vadd.bf16 %v2830, %v2840
    %v2843 = vadd.bf16 %v2831, %v2840
    %v2844 = vadd.bf16 %v2832, %v2840
    %vm2845 = vcmp.gt.bf16.partialorder %v2841, 0
    %vm2846 = vcmp.gt.bf16.partialorder %v2842, 0
    %vm2847 = vcmp.gt.bf16.partialorder %v2843, 0
    %vm2848 = vcmp.gt.bf16.partialorder %v2844, 0
    %v2849 = vmul.bf16 %v2841, 1009007652
    %v2850 = vmul.bf16 %v2842, 1009007652
    %v2851 = vmul.bf16 %v2843, 1009007652
    %v2852 = vmul.bf16 %v2844, 1009007652
    %v2853 = vsel %vm2845, %v2841, %v2849
    %v2854 = vsel %vm2846, %v2842, %v2850
    %v2855 = vsel %vm2847, %v2843, %v2851
    %v2856 = vsel %vm2848, %v2844, %v2852
    %v2857 = vld [vmem:[%s4] sm:$0xf]
    %v2858 = vld [vmem:[%s4 + $0x4] sm:$0xf]
    %v2859 = vld [vmem:[%s4 + $0x8] sm:$0xf]
    %v2860 = vld [vmem:[%s4 + $0xc] sm:$0xf]
    %v2861 = vld [vmem:[%s4 + $0x10] sm:$0xf]
    %v2862 = vld [vmem:[%s4 + $0x14] sm:$0xf]
    %v2863 = vld [vmem:[%s4 + $0x18] sm:$0xf]
    %v2864 = vld [vmem:[%s4 + $0x1c] sm:$0xf]
    %v2865 = vld [vmem:[%s4 + $0x20] sm:$0xf]
    %v2866 = vld [vmem:[%s4 + $0x24] sm:$0xf]
    %v2867 = vld [vmem:[%s4 + $0x28] sm:$0xf]
    %v2868 = vld [vmem:[%s4 + $0x2c] sm:$0xf]
    %v2869 = vld [vmem:[%s4 + $0x30] sm:$0xf]
    %v2870 = vld [vmem:[%s4 + $0x34] sm:$0xf]
    %v2871 = vld [vmem:[%s4 + $0x38] sm:$0xf]
    %v2872 = vld [vmem:[%s4 + $0x3c] sm:$0xf]
    %v2873 = vld [vmem:[%s11 + $0x7] sm:$0x1]
    %v2890 = vunpack.c.l.b16 %v2857
    %v2891 = vunpack.c.l.b16 %v2858
    %v2892 = vunpack.c.l.b16 %v2859
    %v2893 = vunpack.c.l.b16 %v2860
    %v2894 = vunpack.c.l.b16 %v2861
    %v2895 = vunpack.c.l.b16 %v2862
    %v2896 = vunpack.c.l.b16 %v2863
    %v2897 = vunpack.c.l.b16 %v2864
    %v2898 = vunpack.c.l.b16 %v2865
    %v2899 = vunpack.c.l.b16 %v2866
    %v2900 = vunpack.c.l.b16 %v2867
    %v2901 = vunpack.c.l.b16 %v2868
    %v2902 = vunpack.c.l.b16 %v2869
    %v2903 = vunpack.c.l.b16 %v2870
    %v2904 = vunpack.c.l.b16 %v2871
    %v2905 = vunpack.c.l.b16 %v2872
    %v2906 = vpack.c.b16 %v2891, %v2890
    %v2907 = vpack.c.b16 %v2893, %v2892
    %v2908 = vpack.c.b16 %v2895, %v2894
    %v2909 = vpack.c.b16 %v2897, %v2896
    %v2910 = vpack.c.b16 %v2899, %v2898
    %v2911 = vpack.c.b16 %v2901, %v2900
    %v2912 = vpack.c.b16 %v2903, %v2902
    %v2913 = vpack.c.b16 %v2905, %v2904
    %2922 = vmatprep.subr.bf16.mxu0 0
    %2923 = vmatpush1.bf16.msra.mxu0 %v2906
    %2924 = vmatprep.subr.bf16.mxu0 0
    %2925 = vmatpush1.bf16.msra.mxu0 %v2907
    %2926 = vmatprep.subr.bf16.mxu0 0
    %2927 = vmatpush1.bf16.msra.mxu0 %v2908
    %2928 = vmatprep.subr.bf16.mxu0 0
    %2929 = vmatpush1.bf16.msra.mxu0 %v2909
    %2930 = vmatprep.subr.bf16.mxu0 0
    %2931 = vmatpush1.bf16.msra.mxu0 %v2910
    %2932 = vmatprep.subr.bf16.mxu0 0
    %2933 = vmatpush1.bf16.msra.mxu0 %v2911
    %2934 = vmatprep.subr.bf16.mxu0 0
    %2935 = vmatpush1.bf16.msra.mxu0 %v2912
    %2936 = vmatprep.subr.bf16.mxu0 0
    %2937 = vmatpush1.bf16.msra.mxu0 %v2913
    %2938 = vmatprep.subr.bf16.mxu0 0
    %2939 = vmatpush1.bf16.msra.mxu0 0
    %2940 = vmatprep.subr.bf16.mxu0 0
    %2941 = vmatpush1.bf16.msra.mxu0 0
    %2942 = vmatprep.subr.bf16.mxu0 0
    %2943 = vmatpush1.bf16.msra.mxu0 0
    %2944 = vmatprep.subr.bf16.mxu0 0
    %2945 = vmatpush1.bf16.msra.mxu0 0
    %2946 = vmatprep.subr.bf16.mxu0 0
    %2947 = vmatpush1.bf16.msra.mxu0 0
    %2948 = vmatprep.subr.bf16.mxu0 0
    %2949 = vmatpush1.bf16.msra.mxu0 0
    %2950 = vmatprep.subr.bf16.mxu0 0
    %2951 = vmatpush1.bf16.msra.mxu0 0
    %2952 = vmatprep.subr.bf16.mxu0 0
    %2953 = vmatpush1.bf16.msra.mxu0 0
    %2954 = vmatprep.mubr.bf16.mxu0 0
    %2955 = vmatmul.mubr.bf16.gmra.mrb[0].mxu0 %v2853
    %v2956 = vpop.f32.mrb[0].mxu0
    %v2957 = vadd.f32 0.0, %v2956
    %v2958 = vpop.f32.mrb[0].mxu0
    %v2959 = vpop.f32.mrb[0].mxu0
    %v2960 = vadd.f32 0.0, %v2959
    %v2961 = vpop.f32.mrb[0].mxu0
    %2962 = vmatprep.mubr.bf16.mxu0 0
    %2963 = vmatmul.mubr.bf16.gmra.mrb[0].mxu0 %v2854
    %v2964 = vpop.f32.mrb[0].mxu0
    %v2965 = vadd.f32 0.0, %v2964
    %v2966 = vpop.f32.mrb[0].mxu0
    %v2967 = vpop.f32.mrb[0].mxu0
    %v2968 = vadd.f32 0.0, %v2967
    %v2969 = vpop.f32.mrb[0].mxu0
    %2970 = vmatprep.mubr.bf16.mxu0 0
    %2971 = vmatmul.mubr.bf16.gmra.mrb[0].mxu0 %v2855
    %v2972 = vpop.f32.mrb[0].mxu0
    %v2973 = vadd.f32 0.0, %v2972
    %v2974 = vpop.f32.mrb[0].mxu0
    %v2975 = vpop.f32.mrb[0].mxu0
    %v2976 = vadd.f32 0.0, %v2975
    %v2977 = vpop.f32.mrb[0].mxu0
    %2978 = vmatprep.mubr.bf16.mxu0 0
    %2979 = vmatmul.mubr.bf16.gmra.mrb[0].mxu0 %v2856
    %v2980 = vpop.f32.mrb[0].mxu0
    %v2981 = vadd.f32 0.0, %v2980
    %v2982 = vpop.f32.mrb[0].mxu0
    %v2983 = vpop.f32.mrb[0].mxu0
    %v2984 = vadd.f32 0.0, %v2983
    %v2985 = vpop.f32.mrb[0].mxu0
    %2986 = vdwg.mxu0
    %v2987 = vpack.c.bf16 %v2960, %v2957
    %v2988 = vpack.c.bf16 %v2968, %v2965
    %v2989 = vpack.c.bf16 %v2976, %v2973
    %v2990 = vpack.c.bf16 %v2984, %v2981
    %v2991 = vpack.c.bf16 %v2873, %v2873
    %v2993 = vpack.i.b16 %v2991, %v2991
    %v2995 = vlaneseq
    %v2996 = vshrl.u32 %v2995, 7
    %v2997 = vsub.s32 0, %v2996
    %v2998 = vrot.slane %v2993, %v2997
    %v2999 = vadd.bf16 %v2987, %v2998
    %v3000 = vadd.bf16 %v2988, %v2998
    %v3001 = vadd.bf16 %v2989, %v2998
    %v3002 = vadd.bf16 %v2990, %v2998
    %vm3003 = vcmp.gt.bf16.partialorder %v2999, 0
    %vm3004 = vcmp.gt.bf16.partialorder %v3000, 0
    %vm3005 = vcmp.gt.bf16.partialorder %v3001, 0
    %vm3006 = vcmp.gt.bf16.partialorder %v3002, 0
    %v3007 = vmul.bf16 %v2999, 1009007652
    %v3008 = vmul.bf16 %v3000, 1009007652
    %v3009 = vmul.bf16 %v3001, 1009007652
    %v3010 = vmul.bf16 %v3002, 1009007652
    %v3011 = vsel %vm3003, %v2999, %v3007
    %v3012 = vsel %vm3004, %v3000, %v3008
    %v3013 = vsel %vm3005, %v3001, %v3009
    %v3014 = vsel %vm3006, %v3002, %v3010
    %v3015 = vld [vmem:[%s5] sm:$0xf]
    %v3016 = vld [vmem:[%s5 + $0x4] sm:$0xf]
    %v3017 = vld [vmem:[%s5 + $0x8] sm:$0xf]
    %v3018 = vld [vmem:[%s5 + $0xc] sm:$0xf]
    %v3019 = vld [vmem:[%s5 + $0x10] sm:$0xf]
    %v3020 = vld [vmem:[%s5 + $0x14] sm:$0xf]
    %v3021 = vld [vmem:[%s5 + $0x18] sm:$0xf]
    %v3022 = vld [vmem:[%s5 + $0x1c] sm:$0xf]
    %v3023 = vld [vmem:[%s11 + $0x7] sm:$0x3]
    %v3025 = vlaneseq
    %v3026 = vshrl.u32 %v3025, 7
    %v3027 = vsub.s32 0, %v3026
    %v3028 = vrot.slane %v3023, %v3027
    %v3029 = vlaneseq
    %v3030 = vshrl.u32 %v3029, 7
    %v3031 = vsub.s32 1, %v3030
    %v3032 = vrot.slane %v3023, %v3031
    %v3041 = vunpack.c.l.b16 %v3015
    %v3042 = vunpack.c.l.b16 %v3016
    %v3043 = vunpack.c.l.b16 %v3017
    %v3044 = vunpack.c.l.b16 %v3018
    %v3045 = vunpack.c.l.b16 %v3019
    %v3046 = vunpack.c.l.b16 %v3020
    %v3047 = vunpack.c.l.b16 %v3021
    %v3048 = vunpack.c.l.b16 %v3022
    %v3049 = vpack.c.b16 %v3042, %v3041
    %v3050 = vpack.c.b16 %v3044, %v3043
    %v3051 = vpack.c.b16 %v3046, %v3045
    %v3052 = vpack.c.b16 %v3048, %v3047
    %3057 = vrot.lane.b32.xlu0 %v3028, 64
    %v3058 = vpop.permute.xlu0 %3057
    %3059 = vrot.lane.b32.xlu0 %v3032, 64
    %v3060 = vpop.permute.xlu0 %3059
    %vm3061 = vcmask 523264
    %v3062 = vsel %vm3061, %v3058, %v3060
    %v3065 = vsel %vm3061, %v3011, 0
    %v3068 = vsel %vm3061, %v3012, 0
    %v3071 = vsel %vm3061, %v3013, 0
    %v3074 = vsel %vm3061, %v3014, 0
    %3076 = vmatprep.subr.bf16.mxu0 0
    %3077 = vmatpush1.bf16.msra.mxu0 %v3049
    %3078 = vmatprep.subr.bf16.mxu0 0
    %3079 = vmatpush1.bf16.msra.mxu0 %v3050
    %3080 = vmatprep.subr.bf16.mxu0 0
    %3081 = vmatpush1.bf16.msra.mxu0 %v3051
    %3082 = vmatprep.subr.bf16.mxu0 0
    %3083 = vmatpush1.bf16.msra.mxu0 %v3052
    %3084 = vmatprep.subr.bf16.mxu0 0
    %3085 = vmatpush1.bf16.msra.mxu0 0
    %3086 = vmatprep.subr.bf16.mxu0 0
    %3087 = vmatpush1.bf16.msra.mxu0 0
    %3088 = vmatprep.subr.bf16.mxu0 0
    %3089 = vmatpush1.bf16.msra.mxu0 0
    %3090 = vmatprep.subr.bf16.mxu0 0
    %3091 = vmatpush1.bf16.msra.mxu0 0
    %3092 = vmatprep.subr.bf16.mxu0 0
    %3093 = vmatpush1.bf16.msra.mxu0 0
    %3094 = vmatprep.subr.bf16.mxu0 0
    %3095 = vmatpush1.bf16.msra.mxu0 0
    %3096 = vmatprep.subr.bf16.mxu0 0
    %3097 = vmatpush1.bf16.msra.mxu0 0
    %3098 = vmatprep.subr.bf16.mxu0 0
    %3099 = vmatpush1.bf16.msra.mxu0 0
    %3100 = vmatprep.subr.bf16.mxu0 0
    %3101 = vmatpush1.bf16.msra.mxu0 0
    %3102 = vmatprep.subr.bf16.mxu0 0
    %3103 = vmatpush1.bf16.msra.mxu0 0
    %3104 = vmatprep.subr.bf16.mxu0 0
    %3105 = vmatpush1.bf16.msra.mxu0 0
    %3106 = vmatprep.subr.bf16.mxu0 0
    %3107 = vmatpush1.bf16.msra.mxu0 0
    %3108 = vmatprep.mubr.bf16.mxu0 0
    %3109 = vmatmul.mubr.bf16.gmra.mrb[0].mxu0 %v3065
    %v3110 = vpop.f32.mrb[0].mxu0
    %v3111 = vadd.f32 %v3062, %v3110
    %v3112 = vpop.f32.mrb[0].mxu0
    %v3113 = vpop.f32.mrb[0].mxu0
    %v3114 = vadd.f32 %v3062, %v3113
    %v3115 = vpop.f32.mrb[0].mxu0
    %3116 = vmatprep.mubr.bf16.mxu0 0
    %3117 = vmatmul.mubr.bf16.gmra.mrb[0].mxu0 %v3068
    %v3118 = vpop.f32.mrb[0].mxu0
    %v3119 = vadd.f32 %v3062, %v3118
    %v3120 = vpop.f32.mrb[0].mxu0
    %v3121 = vpop.f32.mrb[0].mxu0
    %v3122 = vadd.f32 %v3062, %v3121
    %v3123 = vpop.f32.mrb[0].mxu0
    %3124 = vmatprep.mubr.bf16.mxu0 0
    %3125 = vmatmul.mubr.bf16.gmra.mrb[0].mxu0 %v3071
    %v3126 = vpop.f32.mrb[0].mxu0
    %v3127 = vadd.f32 %v3062, %v3126
    %v3128 = vpop.f32.mrb[0].mxu0
    %v3129 = vpop.f32.mrb[0].mxu0
    %v3130 = vadd.f32 %v3062, %v3129
    %v3131 = vpop.f32.mrb[0].mxu0
    %3132 = vmatprep.mubr.bf16.mxu0 0
    %3133 = vmatmul.mubr.bf16.gmra.mrb[0].mxu0 %v3074
    %v3134 = vpop.f32.mrb[0].mxu0
    %v3135 = vadd.f32 %v3062, %v3134
    %v3136 = vpop.f32.mrb[0].mxu0
    %v3137 = vpop.f32.mrb[0].mxu0
    %v3138 = vadd.f32 %v3062, %v3137
    %v3139 = vpop.f32.mrb[0].mxu0
    %3140 = vdwg.mxu0
    %3141 = vst [vmem:[%s13] sm:$0xff] %v3111
    %3142 = vst [vmem:[%s13 + $0x8] sm:$0xff] %v3114
    %3143 = vst [vmem:[%s13 + $0x10] sm:$0xff] %v3119
    %3144 = vst [vmem:[%s13 + $0x18] sm:$0xff] %v3122
    %3145 = vst [vmem:[%s13 + $0x20] sm:$0xff] %v3127
    %3146 = vst [vmem:[%s13 + $0x28] sm:$0xff] %v3130
    %3147 = vst [vmem:[%s13 + $0x30] sm:$0xff] %v3135
    %3148 = vst [vmem:[%s13 + $0x38] sm:$0xff] %v3138
    %v3149 = vpack.c.bf16 %v3114, %v3111
    %v3150 = vpack.c.bf16 %v3122, %v3119
    %v3151 = vpack.c.bf16 %v3130, %v3127
    %v3152 = vpack.c.bf16 %v3138, %v3135
    %v3153 = vld [vmem:[%s6] sm:$0xf]
    %v3154 = vld [vmem:[%s6 + $0x4] sm:$0xf]
    %v3155 = vld [vmem:[%s6 + $0x8] sm:$0xf]
    %v3156 = vld [vmem:[%s6 + $0xc] sm:$0xf]
    %v3157 = vld [vmem:[%s6 + $0x10] sm:$0xf]
    %v3158 = vld [vmem:[%s6 + $0x14] sm:$0xf]
    %v3159 = vld [vmem:[%s6 + $0x18] sm:$0xf]
    %v3160 = vld [vmem:[%s6 + $0x1c] sm:$0xf]
    %v3161 = vld [vmem:[%s6 + $0x20] sm:$0xf]
    %v3162 = vld [vmem:[%s6 + $0x24] sm:$0xf]
    %v3163 = vld [vmem:[%s6 + $0x28] sm:$0xf]
    %v3164 = vld [vmem:[%s6 + $0x2c] sm:$0xf]
    %v3165 = vld [vmem:[%s6 + $0x30] sm:$0xf]
    %v3166 = vld [vmem:[%s6 + $0x34] sm:$0xf]
    %v3167 = vld [vmem:[%s6 + $0x38] sm:$0xf]
    %v3168 = vld [vmem:[%s6 + $0x3c] sm:$0xf]
    %v3169 = vld [vmem:[%s11 + $0x8] sm:$0x1]
    %v3186 = vunpack.c.l.b16 %v3153
    %v3187 = vunpack.c.l.b16 %v3154
    %v3188 = vunpack.c.l.b16 %v3155
    %v3189 = vunpack.c.l.b16 %v3156
    %v3190 = vunpack.c.l.b16 %v3157
    %v3191 = vunpack.c.l.b16 %v3158
    %v3192 = vunpack.c.l.b16 %v3159
    %v3193 = vunpack.c.l.b16 %v3160
    %v3194 = vunpack.c.l.b16 %v3161
    %v3195 = vunpack.c.l.b16 %v3162
    %v3196 = vunpack.c.l.b16 %v3163
    %v3197 = vunpack.c.l.b16 %v3164
    %v3198 = vunpack.c.l.b16 %v3165
    %v3199 = vunpack.c.l.b16 %v3166
    %v3200 = vunpack.c.l.b16 %v3167
    %v3201 = vunpack.c.l.b16 %v3168
    %v3202 = vpack.c.b16 %v3187, %v3186
    %v3203 = vpack.c.b16 %v3189, %v3188
    %v3204 = vpack.c.b16 %v3191, %v3190
    %v3205 = vpack.c.b16 %v3193, %v3192
    %v3206 = vpack.c.b16 %v3195, %v3194
    %v3207 = vpack.c.b16 %v3197, %v3196
    %v3208 = vpack.c.b16 %v3199, %v3198
    %v3209 = vpack.c.b16 %v3201, %v3200
    %3218 = vmatprep.subr.bf16.mxu0 0
    %3219 = vmatpush1.bf16.msra.mxu0 %v3202
    %3220 = vmatprep.subr.bf16.mxu0 0
    %3221 = vmatpush1.bf16.msra.mxu0 %v3203
    %3222 = vmatprep.subr.bf16.mxu0 0
    %3223 = vmatpush1.bf16.msra.mxu0 %v3204
    %3224 = vmatprep.subr.bf16.mxu0 0
    %3225 = vmatpush1.bf16.msra.mxu0 %v3205
    %3226 = vmatprep.subr.bf16.mxu0 0
    %3227 = vmatpush1.bf16.msra.mxu0 %v3206
    %3228 = vmatprep.subr.bf16.mxu0 0
    %3229 = vmatpush1.bf16.msra.mxu0 %v3207
    %3230 = vmatprep.subr.bf16.mxu0 0
    %3231 = vmatpush1.bf16.msra.mxu0 %v3208
    %3232 = vmatprep.subr.bf16.mxu0 0
    %3233 = vmatpush1.bf16.msra.mxu0 %v3209
    %3234 = vmatprep.subr.bf16.mxu0 0
    %3235 = vmatpush1.bf16.msra.mxu0 0
    %3236 = vmatprep.subr.bf16.mxu0 0
    %3237 = vmatpush1.bf16.msra.mxu0 0
    %3238 = vmatprep.subr.bf16.mxu0 0
    %3239 = vmatpush1.bf16.msra.mxu0 0
    %3240 = vmatprep.subr.bf16.mxu0 0
    %3241 = vmatpush1.bf16.msra.mxu0 0
    %3242 = vmatprep.subr.bf16.mxu0 0
    %3243 = vmatpush1.bf16.msra.mxu0 0
    %3244 = vmatprep.subr.bf16.mxu0 0
    %3245 = vmatpush1.bf16.msra.mxu0 0
    %3246 = vmatprep.subr.bf16.mxu0 0
    %3247 = vmatpush1.bf16.msra.mxu0 0
    %3248 = vmatprep.subr.bf16.mxu0 0
    %3249 = vmatpush1.bf16.msra.mxu0 0
    %3250 = vmatprep.mubr.bf16.mxu0 0
    %3251 = vmatmul.mubr.bf16.gmra.mrb[0].mxu0 %v3149
    %v3252 = vpop.f32.mrb[0].mxu0
    %v3253 = vadd.f32 0.0, %v3252
    %v3254 = vpop.f32.mrb[0].mxu0
    %v3255 = vpop.f32.mrb[0].mxu0
    %v3256 = vadd.f32 0.0, %v3255
    %v3257 = vpop.f32.mrb[0].mxu0
    %3258 = vmatprep.mubr.bf16.mxu0 0
    %3259 = vmatmul.mubr.bf16.gmra.mrb[0].mxu0 %v3150
    %v3260 = vpop.f32.mrb[0].mxu0
    %v3261 = vadd.f32 0.0, %v3260
    %v3262 = vpop.f32.mrb[0].mxu0
    %v3263 = vpop.f32.mrb[0].mxu0
    %v3264 = vadd.f32 0.0, %v3263
    %v3265 = vpop.f32.mrb[0].mxu0
    %3266 = vmatprep.mubr.bf16.mxu0 0
    %3267 = vmatmul.mubr.bf16.gmra.mrb[0].mxu0 %v3151
    %v3268 = vpop.f32.mrb[0].mxu0
    %v3269 = vadd.f32 0.0, %v3268
    %v3270 = vpop.f32.mrb[0].mxu0
    %v3271 = vpop.f32.mrb[0].mxu0
    %v3272 = vadd.f32 0.0, %v3271
    %v3273 = vpop.f32.mrb[0].mxu0
    %3274 = vmatprep.mubr.bf16.mxu0 0
    %3275 = vmatmul.mubr.bf16.gmra.mrb[0].mxu0 %v3152
    %v3276 = vpop.f32.mrb[0].mxu0
    %v3277 = vadd.f32 0.0, %v3276
    %v3278 = vpop.f32.mrb[0].mxu0
    %v3279 = vpop.f32.mrb[0].mxu0
    %v3280 = vadd.f32 0.0, %v3279
    %v3281 = vpop.f32.mrb[0].mxu0
    %3282 = vdwg.mxu0
    %v3283 = vpack.c.bf16 %v3256, %v3253
    %v3284 = vpack.c.bf16 %v3264, %v3261
    %v3285 = vpack.c.bf16 %v3272, %v3269
    %v3286 = vpack.c.bf16 %v3280, %v3277
    %v3287 = vpack.c.bf16 %v3169, %v3169
    %v3289 = vpack.i.b16 %v3287, %v3287
    %v3291 = vlaneseq
    %v3292 = vshrl.u32 %v3291, 7
    %v3293 = vsub.s32 0, %v3292
    %v3294 = vrot.slane %v3289, %v3293
    %3296 = vrot.lane.b32.xlu0 %v3294, 64
    %v3297 = vpop.permute.xlu0 %3296
    %v3299 = vadd.bf16 %v3283, %v3297
    %v3300 = vadd.bf16 %v3284, %v3297
    %v3301 = vadd.bf16 %v3285, %v3297
    %v3302 = vadd.bf16 %v3286, %v3297
    %vm3303 = vcmp.gt.bf16.partialorder %v3299, 0
    %vm3304 = vcmp.gt.bf16.partialorder %v3300, 0
    %vm3305 = vcmp.gt.bf16.partialorder %v3301, 0
    %vm3306 = vcmp.gt.bf16.partialorder %v3302, 0
    %v3307 = vmul.bf16 %v3299, 1009007652
    %v3308 = vmul.bf16 %v3300, 1009007652
    %v3309 = vmul.bf16 %v3301, 1009007652
    %v3310 = vmul.bf16 %v3302, 1009007652
    %v3311 = vsel %vm3303, %v3299, %v3307
    %v3312 = vsel %vm3304, %v3300, %v3308
    %v3313 = vsel %vm3305, %v3301, %v3309
    %v3314 = vsel %vm3306, %v3302, %v3310
    %v3315 = vld [vmem:[%s7] sm:$0xf]
    %v3316 = vld [vmem:[%s7 + $0x4] sm:$0xf]
    %v3317 = vld [vmem:[%s7 + $0x8] sm:$0xf]
    %v3318 = vld [vmem:[%s7 + $0xc] sm:$0xf]
    %v3319 = vld [vmem:[%s7 + $0x10] sm:$0xf]
    %v3320 = vld [vmem:[%s7 + $0x14] sm:$0xf]
    %v3321 = vld [vmem:[%s7 + $0x18] sm:$0xf]
    %v3322 = vld [vmem:[%s7 + $0x1c] sm:$0xf]
    %v3323 = vld [vmem:[%s11 + $0x9] sm:$0x1]
    %v3332 = vunpack.c.l.b16 %v3315
    %v3333 = vunpack.c.l.b16 %v3316
    %v3334 = vunpack.c.l.b16 %v3317
    %v3335 = vunpack.c.l.b16 %v3318
    %v3336 = vunpack.c.l.b16 %v3319
    %v3337 = vunpack.c.l.b16 %v3320
    %v3338 = vunpack.c.l.b16 %v3321
    %v3339 = vunpack.c.l.b16 %v3322
    %v3340 = vpack.c.b16 %v3333, %v3332
    %v3341 = vpack.c.b16 %v3335, %v3334
    %v3342 = vpack.c.b16 %v3337, %v3336
    %v3343 = vpack.c.b16 %v3339, %v3338
    %v3349 = vsel %vm3061, %v3311, 0
    %v3352 = vsel %vm3061, %v3312, 0
    %v3355 = vsel %vm3061, %v3313, 0
    %v3358 = vsel %vm3061, %v3314, 0
    %3360 = vmatprep.subr.bf16.mxu0 0
    %3361 = vmatpush1.bf16.msra.mxu0 %v3340
    %3362 = vmatprep.subr.bf16.mxu0 0
    %3363 = vmatpush1.bf16.msra.mxu0 %v3341
    %3364 = vmatprep.subr.bf16.mxu0 0
    %3365 = vmatpush1.bf16.msra.mxu0 %v3342
    %3366 = vmatprep.subr.bf16.mxu0 0
    %3367 = vmatpush1.bf16.msra.mxu0 %v3343
    %3368 = vmatprep.subr.bf16.mxu0 0
    %3369 = vmatpush1.bf16.msra.mxu0 0
    %3370 = vmatprep.subr.bf16.mxu0 0
    %3371 = vmatpush1.bf16.msra.mxu0 0
    %3372 = vmatprep.subr.bf16.mxu0 0
    %3373 = vmatpush1.bf16.msra.mxu0 0
    %3374 = vmatprep.subr.bf16.mxu0 0
    %3375 = vmatpush1.bf16.msra.mxu0 0
    %3376 = vmatprep.subr.bf16.mxu0 0
    %3377 = vmatpush1.bf16.msra.mxu0 0
    %3378 = vmatprep.subr.bf16.mxu0 0
    %3379 = vmatpush1.bf16.msra.mxu0 0
    %3380 = vmatprep.subr.bf16.mxu0 0
    %3381 = vmatpush1.bf16.msra.mxu0 0
    %3382 = vmatprep.subr.bf16.mxu0 0
    %3383 = vmatpush1.bf16.msra.mxu0 0
    %3384 = vmatprep.subr.bf16.mxu0 0
    %3385 = vmatpush1.bf16.msra.mxu0 0
    %3386 = vmatprep.subr.bf16.mxu0 0
    %3387 = vmatpush1.bf16.msra.mxu0 0
    %3388 = vmatprep.subr.bf16.mxu0 0
    %3389 = vmatpush1.bf16.msra.mxu0 0
    %3390 = vmatprep.subr.bf16.mxu0 0
    %3391 = vmatpush1.bf16.msra.mxu0 0
    %3392 = vmatprep.mubr.bf16.mxu0 0
    %3393 = vmatmul.mubr.bf16.gmra.mrb[0].mxu0 %v3349
    %v3394 = vpop.f32.mrb[0].mxu0
    %v3395 = vadd.f32 0.0, %v3394
    %v3396 = vpop.f32.mrb[0].mxu0
    %v3397 = vpop.f32.mrb[0].mxu0
    %v3398 = vadd.f32 0.0, %v3397
    %v3399 = vpop.f32.mrb[0].mxu0
    %3400 = vmatprep.mubr.bf16.mxu0 0
    %3401 = vmatmul.mubr.bf16.gmra.mrb[0].mxu0 %v3352
    %v3402 = vpop.f32.mrb[0].mxu0
    %v3403 = vadd.f32 0.0, %v3402
    %v3404 = vpop.f32.mrb[0].mxu0
    %v3405 = vpop.f32.mrb[0].mxu0
    %v3406 = vadd.f32 0.0, %v3405
    %v3407 = vpop.f32.mrb[0].mxu0
    %3408 = vmatprep.mubr.bf16.mxu0 0
    %3409 = vmatmul.mubr.bf16.gmra.mrb[0].mxu0 %v3355
    %v3410 = vpop.f32.mrb[0].mxu0
    %v3411 = vadd.f32 0.0, %v3410
    %v3412 = vpop.f32.mrb[0].mxu0
    %v3413 = vpop.f32.mrb[0].mxu0
    %v3414 = vadd.f32 0.0, %v3413
    %v3415 = vpop.f32.mrb[0].mxu0
    %3416 = vmatprep.mubr.bf16.mxu0 0
    %3417 = vmatmul.mubr.bf16.gmra.mrb[0].mxu0 %v3358
    %v3418 = vpop.f32.mrb[0].mxu0
    %v3419 = vadd.f32 0.0, %v3418
    %v3420 = vpop.f32.mrb[0].mxu0
    %v3421 = vpop.f32.mrb[0].mxu0
    %v3422 = vadd.f32 0.0, %v3421
    %v3423 = vpop.f32.mrb[0].mxu0
    %3424 = vdwg.mxu0
    %v3425 = vpack.c.bf16 %v3398, %v3395
    %v3426 = vpack.c.bf16 %v3406, %v3403
    %v3427 = vpack.c.bf16 %v3414, %v3411
    %v3428 = vpack.c.bf16 %v3422, %v3419
    %v3429 = vpack.c.bf16 %v3323, %v3323
    %v3431 = vpack.i.b16 %v3429, %v3429
    %v3433 = vlaneseq
    %v3434 = vshrl.u32 %v3433, 7
    %v3435 = vsub.s32 0, %v3434
    %v3436 = vrot.slane %v3431, %v3435
    %v3437 = vadd.bf16 %v3425, %v3436
    %v3438 = vadd.bf16 %v3426, %v3436
    %v3439 = vadd.bf16 %v3427, %v3436
    %v3440 = vadd.bf16 %v3428, %v3436
    %vm3441 = vcmp.gt.bf16.partialorder %v3437, 0
    %vm3442 = vcmp.gt.bf16.partialorder %v3438, 0
    %vm3443 = vcmp.gt.bf16.partialorder %v3439, 0
    %vm3444 = vcmp.gt.bf16.partialorder %v3440, 0
    %v3445 = vmul.bf16 %v3437, 1009007652
    %v3446 = vmul.bf16 %v3438, 1009007652
    %v3447 = vmul.bf16 %v3439, 1009007652
    %v3448 = vmul.bf16 %v3440, 1009007652
    %v3449 = vsel %vm3441, %v3437, %v3445
    %v3450 = vsel %vm3442, %v3438, %v3446
    %v3451 = vsel %vm3443, %v3439, %v3447
    %v3452 = vsel %vm3444, %v3440, %v3448
    %v3453 = vld [vmem:[%s8] sm:$0xff]
    %v3454 = vld [vmem:[%s8 + $0x8] sm:$0xff]
    %v3455 = vld [vmem:[%s8 + $0x10] sm:$0xff]
    %v3456 = vld [vmem:[%s8 + $0x18] sm:$0xff]
    %v3457 = vld [vmem:[%s8 + $0x20] sm:$0xff]
    %v3458 = vld [vmem:[%s8 + $0x28] sm:$0xff]
    %v3459 = vld [vmem:[%s8 + $0x30] sm:$0xff]
    %v3460 = vld [vmem:[%s8 + $0x38] sm:$0xff]
    %v3461 = vld [vmem:[%s8 + $0x40] sm:$0xff]
    %v3462 = vld [vmem:[%s8 + $0x48] sm:$0xff]
    %v3463 = vld [vmem:[%s8 + $0x50] sm:$0xff]
    %v3464 = vld [vmem:[%s8 + $0x58] sm:$0xff]
    %v3465 = vld [vmem:[%s8 + $0x60] sm:$0xff]
    %v3466 = vld [vmem:[%s8 + $0x68] sm:$0xff]
    %v3467 = vld [vmem:[%s8 + $0x70] sm:$0xff]
    %v3468 = vld [vmem:[%s8 + $0x78] sm:$0xff]
    %v3469 = vld [vmem:[%s11 + $0xa] sm:$0x3]
    %v3486 = vunpack.c.l.b16 %v3453
    %v3487 = vunpack.c.h.b16 %v3453
    %v3488 = vunpack.c.l.b16 %v3454
    %v3489 = vunpack.c.h.b16 %v3454
    %v3490 = vunpack.c.l.b16 %v3455
    %v3491 = vunpack.c.h.b16 %v3455
    %v3492 = vunpack.c.l.b16 %v3456
    %v3493 = vunpack.c.h.b16 %v3456
    %v3494 = vunpack.c.l.b16 %v3457
    %v3495 = vunpack.c.h.b16 %v3457
    %v3496 = vunpack.c.l.b16 %v3458
    %v3497 = vunpack.c.h.b16 %v3458
    %v3498 = vunpack.c.l.b16 %v3459
    %v3499 = vunpack.c.h.b16 %v3459
    %v3500 = vunpack.c.l.b16 %v3460
    %v3501 = vunpack.c.h.b16 %v3460
    %v3502 = vunpack.c.l.b16 %v3461
    %v3503 = vunpack.c.h.b16 %v3461
    %v3504 = vunpack.c.l.b16 %v3462
    %v3505 = vunpack.c.h.b16 %v3462
    %v3506 = vunpack.c.l.b16 %v3463
    %v3507 = vunpack.c.h.b16 %v3463
    %v3508 = vunpack.c.l.b16 %v3464
    %v3509 = vunpack.c.h.b16 %v3464
    %v3510 = vunpack.c.l.b16 %v3465
    %v3511 = vunpack.c.h.b16 %v3465
    %v3512 = vunpack.c.l.b16 %v3466
    %v3513 = vunpack.c.h.b16 %v3466
    %v3514 = vunpack.c.l.b16 %v3467
    %v3515 = vunpack.c.h.b16 %v3467
    %v3516 = vunpack.c.l.b16 %v3468
    %v3517 = vunpack.c.h.b16 %v3468
    %v3518 = vpack.c.b16 %v3488, %v3486
    %v3519 = vpack.c.b16 %v3489, %v3487
    %v3520 = vpack.c.b16 %v3492, %v3490
    %v3521 = vpack.c.b16 %v3493, %v3491
    %v3522 = vpack.c.b16 %v3496, %v3494
    %v3523 = vpack.c.b16 %v3497, %v3495
    %v3524 = vpack.c.b16 %v3500, %v3498
    %v3525 = vpack.c.b16 %v3501, %v3499
    %v3526 = vpack.c.b16 %v3504, %v3502
    %v3527 = vpack.c.b16 %v3505, %v3503
    %v3528 = vpack.c.b16 %v3508, %v3506
    %v3529 = vpack.c.b16 %v3509, %v3507
    %v3530 = vpack.c.b16 %v3512, %v3510
    %v3531 = vpack.c.b16 %v3513, %v3511
    %v3532 = vpack.c.b16 %v3516, %v3514
    %v3533 = vpack.c.b16 %v3517, %v3515
    %3550 = vmatprep.subr.bf16.mxu0 %v3519
    %3551 = vmatpush1.bf16.msra.mxu0 %v3518
    %3552 = vmatprep.subr.bf16.mxu0 %v3521
    %3553 = vmatpush1.bf16.msra.mxu0 %v3520
    %3554 = vmatprep.subr.bf16.mxu0 %v3523
    %3555 = vmatpush1.bf16.msra.mxu0 %v3522
    %3556 = vmatprep.subr.bf16.mxu0 %v3525
    %3557 = vmatpush1.bf16.msra.mxu0 %v3524
    %3558 = vmatprep.subr.bf16.mxu0 %v3527
    %3559 = vmatpush1.bf16.msra.mxu0 %v3526
    %3560 = vmatprep.subr.bf16.mxu0 %v3529
    %3561 = vmatpush1.bf16.msra.mxu0 %v3528
    %3562 = vmatprep.subr.bf16.mxu0 %v3531
    %3563 = vmatpush1.bf16.msra.mxu0 %v3530
    %3564 = vmatprep.subr.bf16.mxu0 %v3533
    %3565 = vmatpush1.bf16.msra.mxu0 %v3532
    %3566 = vmatprep.subr.bf16.mxu0 0
    %3567 = vmatpush1.bf16.msra.mxu0 0
    %3568 = vmatprep.subr.bf16.mxu0 0
    %3569 = vmatpush1.bf16.msra.mxu0 0
    %3570 = vmatprep.subr.bf16.mxu0 0
    %3571 = vmatpush1.bf16.msra.mxu0 0
    %3572 = vmatprep.subr.bf16.mxu0 0
    %3573 = vmatpush1.bf16.msra.mxu0 0
    %3574 = vmatprep.subr.bf16.mxu0 0
    %3575 = vmatpush1.bf16.msra.mxu0 0
    %3576 = vmatprep.subr.bf16.mxu0 0
    %3577 = vmatpush1.bf16.msra.mxu0 0
    %3578 = vmatprep.subr.bf16.mxu0 0
    %3579 = vmatpush1.bf16.msra.mxu0 0
    %3580 = vmatprep.subr.bf16.mxu0 0
    %3581 = vmatpush1.bf16.msra.mxu0 0
    %3582 = vmatprep.mubr.bf16.mxu0 0
    %3583 = vmatmul.mubr.bf16.gmra.mrb[0].mxu0 %v3449
    %v3584 = vpop.f32.mrb[0].mxu0
    %v3585 = vadd.f32 0.0, %v3584
    %v3586 = vpop.f32.mrb[0].mxu0
    %v3587 = vadd.f32 0.0, %v3586
    %v3588 = vpop.f32.mrb[0].mxu0
    %v3589 = vadd.f32 0.0, %v3588
    %v3590 = vpop.f32.mrb[0].mxu0
    %v3591 = vadd.f32 0.0, %v3590
    %3592 = vmatprep.mubr.bf16.mxu0 0
    %3593 = vmatmul.mubr.bf16.gmra.mrb[0].mxu0 %v3450
    %v3594 = vpop.f32.mrb[0].mxu0
    %v3595 = vadd.f32 0.0, %v3594
    %v3596 = vpop.f32.mrb[0].mxu0
    %v3597 = vadd.f32 0.0, %v3596
    %v3598 = vpop.f32.mrb[0].mxu0
    %v3599 = vadd.f32 0.0, %v3598
    %v3600 = vpop.f32.mrb[0].mxu0
    %v3601 = vadd.f32 0.0, %v3600
    %3602 = vmatprep.mubr.bf16.mxu0 0
    %3603 = vmatmul.mubr.bf16.gmra.mrb[0].mxu0 %v3451
    %v3604 = vpop.f32.mrb[0].mxu0
    %v3605 = vadd.f32 0.0, %v3604
    %v3606 = vpop.f32.mrb[0].mxu0
    %v3607 = vadd.f32 0.0, %v3606
    %v3608 = vpop.f32.mrb[0].mxu0
    %v3609 = vadd.f32 0.0, %v3608
    %v3610 = vpop.f32.mrb[0].mxu0
    %v3611 = vadd.f32 0.0, %v3610
    %3612 = vmatprep.mubr.bf16.mxu0 0
    %3613 = vmatmul.mubr.bf16.gmra.mrb[0].mxu0 %v3452
    %v3614 = vpop.f32.mrb[0].mxu0
    %v3615 = vadd.f32 0.0, %v3614
    %v3616 = vpop.f32.mrb[0].mxu0
    %v3617 = vadd.f32 0.0, %v3616
    %v3618 = vpop.f32.mrb[0].mxu0
    %v3619 = vadd.f32 0.0, %v3618
    %v3620 = vpop.f32.mrb[0].mxu0
    %v3621 = vadd.f32 0.0, %v3620
    %3622 = vdwg.mxu0
    %v3623 = vpack.c.bf16 %v3589, %v3585
    %v3624 = vpack.c.bf16 %v3591, %v3587
    %v3625 = vpack.c.bf16 %v3599, %v3595
    %v3626 = vpack.c.bf16 %v3601, %v3597
    %v3627 = vpack.c.bf16 %v3609, %v3605
    %v3628 = vpack.c.bf16 %v3611, %v3607
    %v3629 = vpack.c.bf16 %v3619, %v3615
    %v3630 = vpack.c.bf16 %v3621, %v3617
    %v3632 = vlaneseq
    %v3633 = vshrl.u32 %v3632, 7
    %v3634 = vsub.s32 0, %v3633
    %v3635 = vrot.slane %v3469, %v3634
    %v3636 = vlaneseq
    %v3637 = vshrl.u32 %v3636, 7
    %v3638 = vsub.s32 1, %v3637
    %v3639 = vrot.slane %v3469, %v3638
    %v3642 = vpack.c.bf16 %v3635, %v3635
    %v3643 = vpack.c.bf16 %v3639, %v3639
    %v3645 = vpack.i.b16 %v3642, %v3642
    %v3647 = vlaneseq
    %v3648 = vshrl.u32 %v3647, 7
    %v3649 = vsub.s32 0, %v3648
    %v3650 = vrot.slane %v3645, %v3649
    %v3652 = vpack.i.b16 %v3643, %v3643
    %v3654 = vlaneseq
    %v3655 = vshrl.u32 %v3654, 7
    %v3656 = vsub.s32 0, %v3655
    %v3657 = vrot.slane %v3652, %v3656
    %v3658 = vadd.bf16 %v3623, %v3650
    %v3659 = vadd.bf16 %v3624, %v3657
    %v3660 = vadd.bf16 %v3625, %v3650
    %v3661 = vadd.bf16 %v3626, %v3657
    %v3662 = vadd.bf16 %v3627, %v3650
    %v3663 = vadd.bf16 %v3628, %v3657
    %v3664 = vadd.bf16 %v3629, %v3650
    %v3665 = vadd.bf16 %v3630, %v3657
    %vm3666 = vcmp.gt.bf16.partialorder %v3658, 0
    %vm3667 = vcmp.gt.bf16.partialorder %v3659, 0
    %vm3668 = vcmp.gt.bf16.partialorder %v3660, 0
    %vm3669 = vcmp.gt.bf16.partialorder %v3661, 0
    %vm3670 = vcmp.gt.bf16.partialorder %v3662, 0
    %vm3671 = vcmp.gt.bf16.partialorder %v3663, 0
    %vm3672 = vcmp.gt.bf16.partialorder %v3664, 0
    %vm3673 = vcmp.gt.bf16.partialorder %v3665, 0
    %v3674 = vmul.bf16 %v3658, 1009007652
    %v3675 = vmul.bf16 %v3659, 1009007652
    %v3676 = vmul.bf16 %v3660, 1009007652
    %v3677 = vmul.bf16 %v3661, 1009007652
    %v3678 = vmul.bf16 %v3662, 1009007652
    %v3679 = vmul.bf16 %v3663, 1009007652
    %v3680 = vmul.bf16 %v3664, 1009007652
    %v3681 = vmul.bf16 %v3665, 1009007652
    %v3682 = vsel %vm3666, %v3658, %v3674
    %v3683 = vsel %vm3667, %v3659, %v3675
    %v3684 = vsel %vm3668, %v3660, %v3676
    %v3685 = vsel %vm3669, %v3661, %v3677
    %v3686 = vsel %vm3670, %v3662, %v3678
    %v3687 = vsel %vm3671, %v3663, %v3679
    %v3688 = vsel %vm3672, %v3664, %v3680
    %v3689 = vsel %vm3673, %v3665, %v3681
    %v3690 = vld [vmem:[%s9] sm:$0xff]
    %v3691 = vld [vmem:[%s9 + $0x8] sm:$0xff]
    %v3692 = vld [vmem:[%s9 + $0x10] sm:$0xff]
    %v3693 = vld [vmem:[%s9 + $0x18] sm:$0xff]
    %v3694 = vld [vmem:[%s9 + $0x20] sm:$0xff]
    %v3695 = vld [vmem:[%s9 + $0x28] sm:$0xff]
    %v3696 = vld [vmem:[%s9 + $0x30] sm:$0xff]
    %v3697 = vld [vmem:[%s9 + $0x38] sm:$0xff]
    %v3698 = vld [vmem:[%s9 + $0x40] sm:$0xff]
    %v3699 = vld [vmem:[%s9 + $0x48] sm:$0xff]
    %v3700 = vld [vmem:[%s9 + $0x50] sm:$0xff]
    %v3701 = vld [vmem:[%s9 + $0x58] sm:$0xff]
    %v3702 = vld [vmem:[%s9 + $0x60] sm:$0xff]
    %v3703 = vld [vmem:[%s9 + $0x68] sm:$0xff]
    %v3704 = vld [vmem:[%s9 + $0x70] sm:$0xff]
    %v3705 = vld [vmem:[%s9 + $0x78] sm:$0xff]
    %v3706 = vld [vmem:[%s9 + $0x80] sm:$0xff]
    %v3707 = vld [vmem:[%s9 + $0x88] sm:$0xff]
    %v3708 = vld [vmem:[%s9 + $0x90] sm:$0xff]
    %v3709 = vld [vmem:[%s9 + $0x98] sm:$0xff]
    %v3710 = vld [vmem:[%s9 + $0xa0] sm:$0xff]
    %v3711 = vld [vmem:[%s9 + $0xa8] sm:$0xff]
    %v3712 = vld [vmem:[%s9 + $0xb0] sm:$0xff]
    %v3713 = vld [vmem:[%s9 + $0xb8] sm:$0xff]
    %v3714 = vld [vmem:[%s9 + $0xc0] sm:$0xff]
    %v3715 = vld [vmem:[%s9 + $0xc8] sm:$0xff]
    %v3716 = vld [vmem:[%s9 + $0xd0] sm:$0xff]
    %v3717 = vld [vmem:[%s9 + $0xd8] sm:$0xff]
    %v3718 = vld [vmem:[%s9 + $0xe0] sm:$0xff]
    %v3719 = vld [vmem:[%s9 + $0xe8] sm:$0xff]
    %v3720 = vld [vmem:[%s9 + $0xf0] sm:$0xff]
    %v3721 = vld [vmem:[%s9 + $0xf8] sm:$0xff]
    %v3722 = vld [vmem:[%s9 + $0x100] sm:$0xff]
    %v3723 = vld [vmem:[%s9 + $0x108] sm:$0xff]
    %v3724 = vld [vmem:[%s9 + $0x110] sm:$0xff]
    %v3725 = vld [vmem:[%s9 + $0x118] sm:$0xff]
    %v3726 = vld [vmem:[%s9 + $0x120] sm:$0xff]
    %v3727 = vld [vmem:[%s9 + $0x128] sm:$0xff]
    %v3728 = vld [vmem:[%s9 + $0x130] sm:$0xff]
    %v3729 = vld [vmem:[%s9 + $0x138] sm:$0xff]
    %v3730 = vld [vmem:[%s9 + $0x140] sm:$0xff]
    %v3731 = vld [vmem:[%s9 + $0x148] sm:$0xff]
    %v3732 = vld [vmem:[%s9 + $0x150] sm:$0xff]
    %v3733 = vld [vmem:[%s9 + $0x158] sm:$0xff]
    %v3734 = vld [vmem:[%s9 + $0x160] sm:$0xff]
    %v3735 = vld [vmem:[%s9 + $0x168] sm:$0xff]
    %v3736 = vld [vmem:[%s9 + $0x170] sm:$0xff]
    %v3737 = vld [vmem:[%s9 + $0x178] sm:$0xff]
    %v3738 = vld [vmem:[%s9 + $0x180] sm:$0xff]
    %v3739 = vld [vmem:[%s9 + $0x188] sm:$0xff]
    %v3740 = vld [vmem:[%s9 + $0x190] sm:$0xff]
    %v3741 = vld [vmem:[%s9 + $0x198] sm:$0xff]
    %v3742 = vld [vmem:[%s9 + $0x1a0] sm:$0xff]
    %v3743 = vld [vmem:[%s9 + $0x1a8] sm:$0xff]
    %v3744 = vld [vmem:[%s9 + $0x1b0] sm:$0xff]
    %v3745 = vld [vmem:[%s9 + $0x1b8] sm:$0xff]
    %v3746 = vld [vmem:[%s9 + $0x1c0] sm:$0xff]
    %v3747 = vld [vmem:[%s9 + $0x1c8] sm:$0xff]
    %v3748 = vld [vmem:[%s9 + $0x1d0] sm:$0xff]
    %v3749 = vld [vmem:[%s9 + $0x1d8] sm:$0xff]
    %v3750 = vld [vmem:[%s9 + $0x1e0] sm:$0xff]
    %v3751 = vld [vmem:[%s9 + $0x1e8] sm:$0xff]
    %v3752 = vld [vmem:[%s9 + $0x1f0] sm:$0xff]
    %v3753 = vld [vmem:[%s9 + $0x1f8] sm:$0xff]
    %v3754 = vld [vmem:[%s11 + $0xc] sm:$0xf]
    %v3819 = vunpack.c.l.b16 %v3690
    %v3820 = vunpack.c.h.b16 %v3690
    %v3821 = vunpack.c.l.b16 %v3691
    %v3822 = vunpack.c.h.b16 %v3691
    %v3823 = vunpack.c.l.b16 %v3692
    %v3824 = vunpack.c.h.b16 %v3692
    %v3825 = vunpack.c.l.b16 %v3693
    %v3826 = vunpack.c.h.b16 %v3693
    %v3827 = vunpack.c.l.b16 %v3694
    %v3828 = vunpack.c.h.b16 %v3694
    %v3829 = vunpack.c.l.b16 %v3695
    %v3830 = vunpack.c.h.b16 %v3695
    %v3831 = vunpack.c.l.b16 %v3696
    %v3832 = vunpack.c.h.b16 %v3696
    %v3833 = vunpack.c.l.b16 %v3697
    %v3834 = vunpack.c.h.b16 %v3697
    %v3835 = vunpack.c.l.b16 %v3698
    %v3836 = vunpack.c.h.b16 %v3698
    %v3837 = vunpack.c.l.b16 %v3699
    %v3838 = vunpack.c.h.b16 %v3699
    %v3839 = vunpack.c.l.b16 %v3700
    %v3840 = vunpack.c.h.b16 %v3700
    %v3841 = vunpack.c.l.b16 %v3701
    %v3842 = vunpack.c.h.b16 %v3701
    %v3843 = vunpack.c.l.b16 %v3702
    %v3844 = vunpack.c.h.b16 %v3702
    %v3845 = vunpack.c.l.b16 %v3703
    %v3846 = vunpack.c.h.b16 %v3703
    %v3847 = vunpack.c.l.b16 %v3704
    %v3848 = vunpack.c.h.b16 %v3704
    %v3849 = vunpack.c.l.b16 %v3705
    %v3850 = vunpack.c.h.b16 %v3705
    %v3851 = vunpack.c.l.b16 %v3706
    %v3852 = vunpack.c.h.b16 %v3706
    %v3853 = vunpack.c.l.b16 %v3707
    %v3854 = vunpack.c.h.b16 %v3707
    %v3855 = vunpack.c.l.b16 %v3708
    %v3856 = vunpack.c.h.b16 %v3708
    %v3857 = vunpack.c.l.b16 %v3709
    %v3858 = vunpack.c.h.b16 %v3709
    %v3859 = vunpack.c.l.b16 %v3710
    %v3860 = vunpack.c.h.b16 %v3710
    %v3861 = vunpack.c.l.b16 %v3711
    %v3862 = vunpack.c.h.b16 %v3711
    %v3863 = vunpack.c.l.b16 %v3712
    %v3864 = vunpack.c.h.b16 %v3712
    %v3865 = vunpack.c.l.b16 %v3713
    %v3866 = vunpack.c.h.b16 %v3713
    %v3867 = vunpack.c.l.b16 %v3714
    %v3868 = vunpack.c.h.b16 %v3714
    %v3869 = vunpack.c.l.b16 %v3715
    %v3870 = vunpack.c.h.b16 %v3715
    %v3871 = vunpack.c.l.b16 %v3716
    %v3872 = vunpack.c.h.b16 %v3716
    %v3873 = vunpack.c.l.b16 %v3717
    %v3874 = vunpack.c.h.b16 %v3717
    %v3875 = vunpack.c.l.b16 %v3718
    %v3876 = vunpack.c.h.b16 %v3718
    %v3877 = vunpack.c.l.b16 %v3719
    %v3878 = vunpack.c.h.b16 %v3719
    %v3879 = vunpack.c.l.b16 %v3720
    %v3880 = vunpack.c.h.b16 %v3720
    %v3881 = vunpack.c.l.b16 %v3721
    %v3882 = vunpack.c.h.b16 %v3721
    %v3883 = vunpack.c.l.b16 %v3722
    %v3884 = vunpack.c.h.b16 %v3722
    %v3885 = vunpack.c.l.b16 %v3723
    %v3886 = vunpack.c.h.b16 %v3723
    %v3887 = vunpack.c.l.b16 %v3724
    %v3888 = vunpack.c.h.b16 %v3724
    %v3889 = vunpack.c.l.b16 %v3725
    %v3890 = vunpack.c.h.b16 %v3725
    %v3891 = vunpack.c.l.b16 %v3726
    %v3892 = vunpack.c.h.b16 %v3726
    %v3893 = vunpack.c.l.b16 %v3727
    %v3894 = vunpack.c.h.b16 %v3727
    %v3895 = vunpack.c.l.b16 %v3728
    %v3896 = vunpack.c.h.b16 %v3728
    %v3897 = vunpack.c.l.b16 %v3729
    %v3898 = vunpack.c.h.b16 %v3729
    %v3899 = vunpack.c.l.b16 %v3730
    %v3900 = vunpack.c.h.b16 %v3730
    %v3901 = vunpack.c.l.b16 %v3731
    %v3902 = vunpack.c.h.b16 %v3731
    %v3903 = vunpack.c.l.b16 %v3732
    %v3904 = vunpack.c.h.b16 %v3732
    %v3905 = vunpack.c.l.b16 %v3733
    %v3906 = vunpack.c.h.b16 %v3733
    %v3907 = vunpack.c.l.b16 %v3734
    %v3908 = vunpack.c.h.b16 %v3734
    %v3909 = vunpack.c.l.b16 %v3735
    %v3910 = vunpack.c.h.b16 %v3735
    %v3911 = vunpack.c.l.b16 %v3736
    %v3912 = vunpack.c.h.b16 %v3736
    %v3913 = vunpack.c.l.b16 %v3737
    %v3914 = vunpack.c.h.b16 %v3737
    %v3915 = vunpack.c.l.b16 %v3738
    %v3916 = vunpack.c.h.b16 %v3738
    %v3917 = vunpack.c.l.b16 %v3739
    %v3918 = vunpack.c.h.b16 %v3739
    %v3919 = vunpack.c.l.b16 %v3740
    %v3920 = vunpack.c.h.b16 %v3740
    %v3921 = vunpack.c.l.b16 %v3741
    %v3922 = vunpack.c.h.b16 %v3741
    %v3923 = vunpack.c.l.b16 %v3742
    %v3924 = vunpack.c.h.b16 %v3742
    %v3925 = vunpack.c.l.b16 %v3743
    %v3926 = vunpack.c.h.b16 %v3743
    %v3927 = vunpack.c.l.b16 %v3744
    %v3928 = vunpack.c.h.b16 %v3744
    %v3929 = vunpack.c.l.b16 %v3745
    %v3930 = vunpack.c.h.b16 %v3745
    %v3931 = vunpack.c.l.b16 %v3746
    %v3932 = vunpack.c.h.b16 %v3746
    %v3933 = vunpack.c.l.b16 %v3747
    %v3934 = vunpack.c.h.b16 %v3747
    %v3935 = vunpack.c.l.b16 %v3748
    %v3936 = vunpack.c.h.b16 %v3748
    %v3937 = vunpack.c.l.b16 %v3749
    %v3938 = vunpack.c.h.b16 %v3749
    %v3939 = vunpack.c.l.b16 %v3750
    %v3940 = vunpack.c.h.b16 %v3750
    %v3941 = vunpack.c.l.b16 %v3751
    %v3942 = vunpack.c.h.b16 %v3751
    %v3943 = vunpack.c.l.b16 %v3752
    %v3944 = vunpack.c.h.b16 %v3752
    %v3945 = vunpack.c.l.b16 %v3753
    %v3946 = vunpack.c.h.b16 %v3753
    %v3947 = vpack.c.b16 %v3823, %v3819
    %v3948 = vpack.c.b16 %v3824, %v3820
    %v3949 = vpack.c.b16 %v3825, %v3821
    %v3950 = vpack.c.b16 %v3826, %v3822
    %v3951 = vpack.c.b16 %v3831, %v3827
    %v3952 = vpack.c.b16 %v3832, %v3828
    %v3953 = vpack.c.b16 %v3833, %v3829
    %v3954 = vpack.c.b16 %v3834, %v3830
    %v3955 = vpack.c.b16 %v3839, %v3835
    %v3956 = vpack.c.b16 %v3840, %v3836
    %v3957 = vpack.c.b16 %v3841, %v3837
    %v3958 = vpack.c.b16 %v3842, %v3838
    %v3959 = vpack.c.b16 %v3847, %v3843
    %v3960 = vpack.c.b16 %v3848, %v3844
    %v3961 = vpack.c.b16 %v3849, %v3845
    %v3962 = vpack.c.b16 %v3850, %v3846
    %v3963 = vpack.c.b16 %v3855, %v3851
    %v3964 = vpack.c.b16 %v3856, %v3852
    %v3965 = vpack.c.b16 %v3857, %v3853
    %v3966 = vpack.c.b16 %v3858, %v3854
    %v3967 = vpack.c.b16 %v3863, %v3859
    %v3968 = vpack.c.b16 %v3864, %v3860
    %v3969 = vpack.c.b16 %v3865, %v3861
    %v3970 = vpack.c.b16 %v3866, %v3862
    %v3971 = vpack.c.b16 %v3871, %v3867
    %v3972 = vpack.c.b16 %v3872, %v3868
    %v3973 = vpack.c.b16 %v3873, %v3869
    %v3974 = vpack.c.b16 %v3874, %v3870
    %v3975 = vpack.c.b16 %v3879, %v3875
    %v3976 = vpack.c.b16 %v3880, %v3876
    %v3977 = vpack.c.b16 %v3881, %v3877
    %v3978 = vpack.c.b16 %v3882, %v3878
    %v3979 = vpack.c.b16 %v3887, %v3883
    %v3980 = vpack.c.b16 %v3888, %v3884
    %v3981 = vpack.c.b16 %v3889, %v3885
    %v3982 = vpack.c.b16 %v3890, %v3886
    %v3983 = vpack.c.b16 %v3895, %v3891
    %v3984 = vpack.c.b16 %v3896, %v3892
    %v3985 = vpack.c.b16 %v3897, %v3893
    %v3986 = vpack.c.b16 %v3898, %v3894
    %v3987 = vpack.c.b16 %v3903, %v3899
    %v3988 = vpack.c.b16 %v3904, %v3900
    %v3989 = vpack.c.b16 %v3905, %v3901
    %v3990 = vpack.c.b16 %v3906, %v3902
    %v3991 = vpack.c.b16 %v3911, %v3907
    %v3992 = vpack.c.b16 %v3912, %v3908
    %v3993 = vpack.c.b16 %v3913, %v3909
    %v3994 = vpack.c.b16 %v3914, %v3910
    %v3995 = vpack.c.b16 %v3919, %v3915
    %v3996 = vpack.c.b16 %v3920, %v3916
    %v3997 = vpack.c.b16 %v3921, %v3917
    %v3998 = vpack.c.b16 %v3922, %v3918
    %v3999 = vpack.c.b16 %v3927, %v3923
    %v4000 = vpack.c.b16 %v3928, %v3924
    %v4001 = vpack.c.b16 %v3929, %v3925
    %v4002 = vpack.c.b16 %v3930, %v3926
    %v4003 = vpack.c.b16 %v3935, %v3931
    %v4004 = vpack.c.b16 %v3936, %v3932
    %v4005 = vpack.c.b16 %v3937, %v3933
    %v4006 = vpack.c.b16 %v3938, %v3934
    %v4007 = vpack.c.b16 %v3943, %v3939
    %v4008 = vpack.c.b16 %v3944, %v3940
    %v4009 = vpack.c.b16 %v3945, %v3941
    %v4010 = vpack.c.b16 %v3946, %v3942
    %4075 = vmatprep.subr.bf16.mxu0 %v3948
    %4076 = vmatpush1.bf16.msra.mxu0 %v3947
    %4077 = vmatprep.subr.bf16.mxu0 %v3952
    %4078 = vmatpush1.bf16.msra.mxu0 %v3951
    %4079 = vmatprep.subr.bf16.mxu0 %v3956
    %4080 = vmatpush1.bf16.msra.mxu0 %v3955
    %4081 = vmatprep.subr.bf16.mxu0 %v3960
    %4082 = vmatpush1.bf16.msra.mxu0 %v3959
    %4083 = vmatprep.subr.bf16.mxu0 %v3964
    %4084 = vmatpush1.bf16.msra.mxu0 %v3963
    %4085 = vmatprep.subr.bf16.mxu0 %v3968
    %4086 = vmatpush1.bf16.msra.mxu0 %v3967
    %4087 = vmatprep.subr.bf16.mxu0 %v3972
    %4088 = vmatpush1.bf16.msra.mxu0 %v3971
    %4089 = vmatprep.subr.bf16.mxu0 %v3976
    %4090 = vmatpush1.bf16.msra.mxu0 %v3975
    %4091 = vmatprep.subr.bf16.mxu0 %v3980
    %4092 = vmatpush1.bf16.msra.mxu0 %v3979
    %4093 = vmatprep.subr.bf16.mxu0 %v3984
    %4094 = vmatpush1.bf16.msra.mxu0 %v3983
    %4095 = vmatprep.subr.bf16.mxu0 %v3988
    %4096 = vmatpush1.bf16.msra.mxu0 %v3987
    %4097 = vmatprep.subr.bf16.mxu0 %v3992
    %4098 = vmatpush1.bf16.msra.mxu0 %v3991
    %4099 = vmatprep.subr.bf16.mxu0 %v3996
    %4100 = vmatpush1.bf16.msra.mxu0 %v3995
    %4101 = vmatprep.subr.bf16.mxu0 %v4000
    %4102 = vmatpush1.bf16.msra.mxu0 %v3999
    %4103 = vmatprep.subr.bf16.mxu0 %v4004
    %4104 = vmatpush1.bf16.msra.mxu0 %v4003
    %4105 = vmatprep.subr.bf16.mxu0 %v4008
    %4106 = vmatpush1.bf16.msra.mxu0 %v4007
    %4107 = vmatprep.mubr.bf16.mxu0 %v3683
    %4108 = vmatmul.mubr.bf16.gmra.mrb[0].mxu0 %v3682
    %v4109 = vpop.f32.mrb[0].mxu0
    %v4110 = vadd.f32 0.0, %v4109
    %v4111 = vpop.f32.mrb[0].mxu0
    %v4112 = vadd.f32 0.0, %v4111
    %v4113 = vpop.f32.mrb[0].mxu0
    %v4114 = vadd.f32 0.0, %v4113
    %v4115 = vpop.f32.mrb[0].mxu0
    %v4116 = vadd.f32 0.0, %v4115
    %4117 = vmatprep.mubr.bf16.mxu0 %v3685
    %4118 = vmatmul.mubr.bf16.gmra.mrb[0].mxu0 %v3684
    %v4119 = vpop.f32.mrb[0].mxu0
    %v4120 = vadd.f32 0.0, %v4119
    %v4121 = vpop.f32.mrb[0].mxu0
    %v4122 = vadd.f32 0.0, %v4121
    %v4123 = vpop.f32.mrb[0].mxu0
    %v4124 = vadd.f32 0.0, %v4123
    %v4125 = vpop.f32.mrb[0].mxu0
    %v4126 = vadd.f32 0.0, %v4125
    %4127 = vmatprep.mubr.bf16.mxu0 %v3687
    %4128 = vmatmul.mubr.bf16.gmra.mrb[0].mxu0 %v3686
    %v4129 = vpop.f32.mrb[0].mxu0
    %v4130 = vadd.f32 0.0, %v4129
    %v4131 = vpop.f32.mrb[0].mxu0
    %v4132 = vadd.f32 0.0, %v4131
    %v4133 = vpop.f32.mrb[0].mxu0
    %v4134 = vadd.f32 0.0, %v4133
    %v4135 = vpop.f32.mrb[0].mxu0
    %v4136 = vadd.f32 0.0, %v4135
    %4137 = vmatprep.mubr.bf16.mxu0 %v3689
    %4138 = vmatmul.mubr.bf16.gmra.mrb[0].mxu0 %v3688
    %v4139 = vpop.f32.mrb[0].mxu0
    %v4140 = vadd.f32 0.0, %v4139
    %v4141 = vpop.f32.mrb[0].mxu0
    %v4142 = vadd.f32 0.0, %v4141
    %v4143 = vpop.f32.mrb[0].mxu0
    %v4144 = vadd.f32 0.0, %v4143
    %v4145 = vpop.f32.mrb[0].mxu0
    %v4146 = vadd.f32 0.0, %v4145
    %4147 = vdwg.mxu0
    %4148 = vmatprep.subr.bf16.mxu0 %v3950
    %4149 = vmatpush1.bf16.msra.mxu0 %v3949
    %4150 = vmatprep.subr.bf16.mxu0 %v3954
    %4151 = vmatpush1.bf16.msra.mxu0 %v3953
    %4152 = vmatprep.subr.bf16.mxu0 %v3958
    %4153 = vmatpush1.bf16.msra.mxu0 %v3957
    %4154 = vmatprep.subr.bf16.mxu0 %v3962
    %4155 = vmatpush1.bf16.msra.mxu0 %v3961
    %4156 = vmatprep.subr.bf16.mxu0 %v3966
    %4157 = vmatpush1.bf16.msra.mxu0 %v3965
    %4158 = vmatprep.subr.bf16.mxu0 %v3970
    %4159 = vmatpush1.bf16.msra.mxu0 %v3969
    %4160 = vmatprep.subr.bf16.mxu0 %v3974
    %4161 = vmatpush1.bf16.msra.mxu0 %v3973
    %4162 = vmatprep.subr.bf16.mxu0 %v3978
    %4163 = vmatpush1.bf16.msra.mxu0 %v3977
    %4164 = vmatprep.subr.bf16.mxu0 %v3982
    %4165 = vmatpush1.bf16.msra.mxu0 %v3981
    %4166 = vmatprep.subr.bf16.mxu0 %v3986
    %4167 = vmatpush1.bf16.msra.mxu0 %v3985
    %4168 = vmatprep.subr.bf16.mxu0 %v3990
    %4169 = vmatpush1.bf16.msra.mxu0 %v3989
    %4170 = vmatprep.subr.bf16.mxu0 %v3994
    %4171 = vmatpush1.bf16.msra.mxu0 %v3993
    %4172 = vmatprep.subr.bf16.mxu0 %v3998
    %4173 = vmatpush1.bf16.msra.mxu0 %v3997
    %4174 = vmatprep.subr.bf16.mxu0 %v4002
    %4175 = vmatpush1.bf16.msra.mxu0 %v4001
    %4176 = vmatprep.subr.bf16.mxu0 %v4006
    %4177 = vmatpush1.bf16.msra.mxu0 %v4005
    %4178 = vmatprep.subr.bf16.mxu0 %v4010
    %4179 = vmatpush1.bf16.msra.mxu0 %v4009
    %4180 = vmatprep.mubr.bf16.mxu0 %v3683
    %4181 = vmatmul.mubr.bf16.gmra.mrb[0].mxu0 %v3682
    %v4182 = vpop.f32.mrb[0].mxu0
    %v4183 = vadd.f32 0.0, %v4182
    %v4184 = vpop.f32.mrb[0].mxu0
    %v4185 = vadd.f32 0.0, %v4184
    %v4186 = vpop.f32.mrb[0].mxu0
    %v4187 = vadd.f32 0.0, %v4186
    %v4188 = vpop.f32.mrb[0].mxu0
    %v4189 = vadd.f32 0.0, %v4188
    %4190 = vmatprep.mubr.bf16.mxu0 %v3685
    %4191 = vmatmul.mubr.bf16.gmra.mrb[0].mxu0 %v3684
    %v4192 = vpop.f32.mrb[0].mxu0
    %v4193 = vadd.f32 0.0, %v4192
    %v4194 = vpop.f32.mrb[0].mxu0
    %v4195 = vadd.f32 0.0, %v4194
    %v4196 = vpop.f32.mrb[0].mxu0
    %v4197 = vadd.f32 0.0, %v4196
    %v4198 = vpop.f32.mrb[0].mxu0
    %v4199 = vadd.f32 0.0, %v4198
    %4200 = vmatprep.mubr.bf16.mxu0 %v3687
    %4201 = vmatmul.mubr.bf16.gmra.mrb[0].mxu0 %v3686
    %v4202 = vpop.f32.mrb[0].mxu0
    %v4203 = vadd.f32 0.0, %v4202
    %v4204 = vpop.f32.mrb[0].mxu0
    %v4205 = vadd.f32 0.0, %v4204
    %v4206 = vpop.f32.mrb[0].mxu0
    %v4207 = vadd.f32 0.0, %v4206
    %v4208 = vpop.f32.mrb[0].mxu0
    %v4209 = vadd.f32 0.0, %v4208
    %4210 = vmatprep.mubr.bf16.mxu0 %v3689
    %4211 = vmatmul.mubr.bf16.gmra.mrb[0].mxu0 %v3688
    %v4212 = vpop.f32.mrb[0].mxu0
    %v4213 = vadd.f32 0.0, %v4212
    %v4214 = vpop.f32.mrb[0].mxu0
    %v4215 = vadd.f32 0.0, %v4214
    %v4216 = vpop.f32.mrb[0].mxu0
    %v4217 = vadd.f32 0.0, %v4216
    %v4218 = vpop.f32.mrb[0].mxu0
    %v4219 = vadd.f32 0.0, %v4218
    %4220 = vdwg.mxu0
    %v4221 = vpack.c.bf16 %v4114, %v4110
    %v4222 = vpack.c.bf16 %v4116, %v4112
    %v4223 = vpack.c.bf16 %v4187, %v4183
    %v4224 = vpack.c.bf16 %v4189, %v4185
    %v4225 = vpack.c.bf16 %v4124, %v4120
    %v4226 = vpack.c.bf16 %v4126, %v4122
    %v4227 = vpack.c.bf16 %v4197, %v4193
    %v4228 = vpack.c.bf16 %v4199, %v4195
    %v4229 = vpack.c.bf16 %v4134, %v4130
    %v4230 = vpack.c.bf16 %v4136, %v4132
    %v4231 = vpack.c.bf16 %v4207, %v4203
    %v4232 = vpack.c.bf16 %v4209, %v4205
    %v4233 = vpack.c.bf16 %v4144, %v4140
    %v4234 = vpack.c.bf16 %v4146, %v4142
    %v4235 = vpack.c.bf16 %v4217, %v4213
    %v4236 = vpack.c.bf16 %v4219, %v4215
    %v4238 = vlaneseq
    %v4239 = vshrl.u32 %v4238, 7
    %v4240 = vsub.s32 0, %v4239
    %v4241 = vrot.slane %v3754, %v4240
    %v4242 = vlaneseq
    %v4243 = vshrl.u32 %v4242, 7
    %v4244 = vsub.s32 1, %v4243
    %v4245 = vrot.slane %v3754, %v4244
    %v4246 = vlaneseq
    %v4247 = vshrl.u32 %v4246, 7
    %v4248 = vsub.s32 2, %v4247
    %v4249 = vrot.slane %v3754, %v4248
    %v4250 = vlaneseq
    %v4251 = vshrl.u32 %v4250, 7
    %v4252 = vsub.s32 3, %v4251
    %v4253 = vrot.slane %v3754, %v4252
    %v4258 = vpack.c.bf16 %v4241, %v4241
    %v4259 = vpack.c.bf16 %v4245, %v4245
    %v4260 = vpack.c.bf16 %v4249, %v4249
    %v4261 = vpack.c.bf16 %v4253, %v4253
    %v4263 = vpack.i.b16 %v4258, %v4258
    %v4265 = vlaneseq
    %v4266 = vshrl.u32 %v4265, 7
    %v4267 = vsub.s32 0, %v4266
    %v4268 = vrot.slane %v4263, %v4267
    %v4270 = vpack.i.b16 %v4259, %v4259
    %v4272 = vlaneseq
    %v4273 = vshrl.u32 %v4272, 7
    %v4274 = vsub.s32 0, %v4273
    %v4275 = vrot.slane %v4270, %v4274
    %v4277 = vpack.i.b16 %v4260, %v4260
    %v4279 = vlaneseq
    %v4280 = vshrl.u32 %v4279, 7
    %v4281 = vsub.s32 0, %v4280
    %v4282 = vrot.slane %v4277, %v4281
    %v4284 = vpack.i.b16 %v4261, %v4261
    %v4286 = vlaneseq
    %v4287 = vshrl.u32 %v4286, 7
    %v4288 = vsub.s32 0, %v4287
    %v4289 = vrot.slane %v4284, %v4288
    %v4290 = vadd.bf16 %v4221, %v4268
    %v4291 = vadd.bf16 %v4222, %v4275
    %v4292 = vadd.bf16 %v4223, %v4282
    %v4293 = vadd.bf16 %v4224, %v4289
    %v4294 = vadd.bf16 %v4225, %v4268
    %v4295 = vadd.bf16 %v4226, %v4275
    %v4296 = vadd.bf16 %v4227, %v4282
    %v4297 = vadd.bf16 %v4228, %v4289
    %v4298 = vadd.bf16 %v4229, %v4268
    %v4299 = vadd.bf16 %v4230, %v4275
    %v4300 = vadd.bf16 %v4231, %v4282
    %v4301 = vadd.bf16 %v4232, %v4289
    %v4302 = vadd.bf16 %v4233, %v4268
    %v4303 = vadd.bf16 %v4234, %v4275
    %v4304 = vadd.bf16 %v4235, %v4282
    %v4305 = vadd.bf16 %v4236, %v4289
    %vm4306 = vcmp.gt.bf16.partialorder %v4290, 0
    %vm4307 = vcmp.gt.bf16.partialorder %v4291, 0
    %vm4308 = vcmp.gt.bf16.partialorder %v4292, 0
    %vm4309 = vcmp.gt.bf16.partialorder %v4293, 0
    %vm4310 = vcmp.gt.bf16.partialorder %v4294, 0
    %vm4311 = vcmp.gt.bf16.partialorder %v4295, 0
    %vm4312 = vcmp.gt.bf16.partialorder %v4296, 0
    %vm4313 = vcmp.gt.bf16.partialorder %v4297, 0
    %vm4314 = vcmp.gt.bf16.partialorder %v4298, 0
    %vm4315 = vcmp.gt.bf16.partialorder %v4299, 0
    %vm4316 = vcmp.gt.bf16.partialorder %v4300, 0
    %vm4317 = vcmp.gt.bf16.partialorder %v4301, 0
    %vm4318 = vcmp.gt.bf16.partialorder %v4302, 0
    %vm4319 = vcmp.gt.bf16.partialorder %v4303, 0
    %vm4320 = vcmp.gt.bf16.partialorder %v4304, 0
    %vm4321 = vcmp.gt.bf16.partialorder %v4305, 0
    %v4322 = vmul.bf16 %v4290, 1009007652
    %v4323 = vmul.bf16 %v4291, 1009007652
    %v4324 = vmul.bf16 %v4292, 1009007652
    %v4325 = vmul.bf16 %v4293, 1009007652
    %v4326 = vmul.bf16 %v4294, 1009007652
    %v4327 = vmul.bf16 %v4295, 1009007652
    %v4328 = vmul.bf16 %v4296, 1009007652
    %v4329 = vmul.bf16 %v4297, 1009007652
    %v4330 = vmul.bf16 %v4298, 1009007652
    %v4331 = vmul.bf16 %v4299, 1009007652
    %v4332 = vmul.bf16 %v4300, 1009007652
    %v4333 = vmul.bf16 %v4301, 1009007652
    %v4334 = vmul.bf16 %v4302, 1009007652
    %v4335 = vmul.bf16 %v4303, 1009007652
    %v4336 = vmul.bf16 %v4304, 1009007652
    %v4337 = vmul.bf16 %v4305, 1009007652
    %v4338 = vsel %vm4306, %v4290, %v4322
    %v4339 = vsel %vm4307, %v4291, %v4323
    %v4340 = vsel %vm4308, %v4292, %v4324
    %v4341 = vsel %vm4309, %v4293, %v4325
    %v4342 = vsel %vm4310, %v4294, %v4326
    %v4343 = vsel %vm4311, %v4295, %v4327
    %v4344 = vsel %vm4312, %v4296, %v4328
    %v4345 = vsel %vm4313, %v4297, %v4329
    %v4346 = vsel %vm4314, %v4298, %v4330
    %v4347 = vsel %vm4315, %v4299, %v4331
    %v4348 = vsel %vm4316, %v4300, %v4332
    %v4349 = vsel %vm4317, %v4301, %v4333
    %v4350 = vsel %vm4318, %v4302, %v4334
    %v4351 = vsel %vm4319, %v4303, %v4335
    %v4352 = vsel %vm4320, %v4304, %v4336
    %v4353 = vsel %vm4321, %v4305, %v4337
    %v4354 = vld [vmem:[%s10] sm:$0xff]
    %v4355 = vld [vmem:[%s10 + $0x8] sm:$0xff]
    %v4356 = vld [vmem:[%s10 + $0x10] sm:$0xff]
    %v4357 = vld [vmem:[%s10 + $0x18] sm:$0xf]
    %v4358 = vld [vmem:[%s10 + $0x1c] sm:$0xff]
    %v4359 = vld [vmem:[%s10 + $0x24] sm:$0xff]
    %v4360 = vld [vmem:[%s10 + $0x2c] sm:$0xff]
    %v4361 = vld [vmem:[%s10 + $0x34] sm:$0xf]
    %v4362 = vld [vmem:[%s10 + $0x38] sm:$0xff]
    %v4363 = vld [vmem:[%s10 + $0x40] sm:$0xff]
    %v4364 = vld [vmem:[%s10 + $0x48] sm:$0xff]
    %v4365 = vld [vmem:[%s10 + $0x50] sm:$0xf]
    %v4366 = vld [vmem:[%s10 + $0x54] sm:$0xff]
    %v4367 = vld [vmem:[%s10 + $0x5c] sm:$0xff]
    %v4368 = vld [vmem:[%s10 + $0x64] sm:$0xff]
    %v4369 = vld [vmem:[%s10 + $0x6c] sm:$0xf]
    %v4370 = vld [vmem:[%s10 + $0x70] sm:$0xff]
    %v4371 = vld [vmem:[%s10 + $0x78] sm:$0xff]
    %v4372 = vld [vmem:[%s10 + $0x80] sm:$0xff]
    %v4373 = vld [vmem:[%s10 + $0x88] sm:$0xf]
    %v4374 = vld [vmem:[%s10 + $0x8c] sm:$0xff]
    %v4375 = vld [vmem:[%s10 + $0x94] sm:$0xff]
    %v4376 = vld [vmem:[%s10 + $0x9c] sm:$0xff]
    %v4377 = vld [vmem:[%s10 + $0xa4] sm:$0xf]
    %v4378 = vld [vmem:[%s10 + $0xa8] sm:$0xff]
    %v4379 = vld [vmem:[%s10 + $0xb0] sm:$0xff]
    %v4380 = vld [vmem:[%s10 + $0xb8] sm:$0xff]
    %v4381 = vld [vmem:[%s10 + $0xc0] sm:$0xf]
    %v4382 = vld [vmem:[%s10 + $0xc4] sm:$0xff]
    %v4383 = vld [vmem:[%s10 + $0xcc] sm:$0xff]
    %v4384 = vld [vmem:[%s10 + $0xd4] sm:$0xff]
    %v4385 = vld [vmem:[%s10 + $0xdc] sm:$0xf]
    %v4386 = vld [vmem:[%s10 + $0xe0] sm:$0xff]
    %v4387 = vld [vmem:[%s10 + $0xe8] sm:$0xff]
    %v4388 = vld [vmem:[%s10 + $0xf0] sm:$0xff]
    %v4389 = vld [vmem:[%s10 + $0xf8] sm:$0xf]
    %v4390 = vld [vmem:[%s10 + $0xfc] sm:$0xff]
    %v4391 = vld [vmem:[%s10 + $0x104] sm:$0xff]
    %v4392 = vld [vmem:[%s10 + $0x10c] sm:$0xff]
    %v4393 = vld [vmem:[%s10 + $0x114] sm:$0xf]
    %v4394 = vld [vmem:[%s10 + $0x118] sm:$0xff]
    %v4395 = vld [vmem:[%s10 + $0x120] sm:$0xff]
    %v4396 = vld [vmem:[%s10 + $0x128] sm:$0xff]
    %v4397 = vld [vmem:[%s10 + $0x130] sm:$0xf]
    %v4398 = vld [vmem:[%s10 + $0x134] sm:$0xff]
    %v4399 = vld [vmem:[%s10 + $0x13c] sm:$0xff]
    %v4400 = vld [vmem:[%s10 + $0x144] sm:$0xff]
    %v4401 = vld [vmem:[%s10 + $0x14c] sm:$0xf]
    %v4402 = vld [vmem:[%s10 + $0x150] sm:$0xff]
    %v4403 = vld [vmem:[%s10 + $0x158] sm:$0xff]
    %v4404 = vld [vmem:[%s10 + $0x160] sm:$0xff]
    %v4405 = vld [vmem:[%s10 + $0x168] sm:$0xf]
    %v4406 = vld [vmem:[%s10 + $0x16c] sm:$0xff]
    %v4407 = vld [vmem:[%s10 + $0x174] sm:$0xff]
    %v4408 = vld [vmem:[%s10 + $0x17c] sm:$0xff]
    %v4409 = vld [vmem:[%s10 + $0x184] sm:$0xf]
    %v4410 = vld [vmem:[%s10 + $0x188] sm:$0xff]
    %v4411 = vld [vmem:[%s10 + $0x190] sm:$0xff]
    %v4412 = vld [vmem:[%s10 + $0x198] sm:$0xff]
    %v4413 = vld [vmem:[%s10 + $0x1a0] sm:$0xf]
    %v4414 = vld [vmem:[%s10 + $0x1a4] sm:$0xff]
    %v4415 = vld [vmem:[%s10 + $0x1ac] sm:$0xff]
    %v4416 = vld [vmem:[%s10 + $0x1b4] sm:$0xff]
    %v4417 = vld [vmem:[%s10 + $0x1bc] sm:$0xf]
    %v4418 = vld [vmem:[%s10 + $0x1c0] sm:$0xff]
    %v4419 = vld [vmem:[%s10 + $0x1c8] sm:$0xff]
    %v4420 = vld [vmem:[%s10 + $0x1d0] sm:$0xff]
    %v4421 = vld [vmem:[%s10 + $0x1d8] sm:$0xf]
    %v4422 = vld [vmem:[%s10 + $0x1dc] sm:$0xff]
    %v4423 = vld [vmem:[%s10 + $0x1e4] sm:$0xff]
    %v4424 = vld [vmem:[%s10 + $0x1ec] sm:$0xff]
    %v4425 = vld [vmem:[%s10 + $0x1f4] sm:$0xf]
    %v4426 = vld [vmem:[%s10 + $0x1f8] sm:$0xff]
    %v4427 = vld [vmem:[%s10 + $0x200] sm:$0xff]
    %v4428 = vld [vmem:[%s10 + $0x208] sm:$0xff]
    %v4429 = vld [vmem:[%s10 + $0x210] sm:$0xf]
    %v4430 = vld [vmem:[%s10 + $0x214] sm:$0xff]
    %v4431 = vld [vmem:[%s10 + $0x21c] sm:$0xff]
    %v4432 = vld [vmem:[%s10 + $0x224] sm:$0xff]
    %v4433 = vld [vmem:[%s10 + $0x22c] sm:$0xf]
    %v4434 = vld [vmem:[%s10 + $0x230] sm:$0xff]
    %v4435 = vld [vmem:[%s10 + $0x238] sm:$0xff]
    %v4436 = vld [vmem:[%s10 + $0x240] sm:$0xff]
    %v4437 = vld [vmem:[%s10 + $0x248] sm:$0xf]
    %v4438 = vld [vmem:[%s10 + $0x24c] sm:$0xff]
    %v4439 = vld [vmem:[%s10 + $0x254] sm:$0xff]
    %v4440 = vld [vmem:[%s10 + $0x25c] sm:$0xff]
    %v4441 = vld [vmem:[%s10 + $0x264] sm:$0xf]
    %v4442 = vld [vmem:[%s10 + $0x268] sm:$0xff]
    %v4443 = vld [vmem:[%s10 + $0x270] sm:$0xff]
    %v4444 = vld [vmem:[%s10 + $0x278] sm:$0xff]
    %v4445 = vld [vmem:[%s10 + $0x280] sm:$0xf]
    %v4446 = vld [vmem:[%s10 + $0x284] sm:$0xff]
    %v4447 = vld [vmem:[%s10 + $0x28c] sm:$0xff]
    %v4448 = vld [vmem:[%s10 + $0x294] sm:$0xff]
    %v4449 = vld [vmem:[%s10 + $0x29c] sm:$0xf]
    %v4450 = vld [vmem:[%s10 + $0x2a0] sm:$0xff]
    %v4451 = vld [vmem:[%s10 + $0x2a8] sm:$0xff]
    %v4452 = vld [vmem:[%s10 + $0x2b0] sm:$0xff]
    %v4453 = vld [vmem:[%s10 + $0x2b8] sm:$0xf]
    %v4454 = vld [vmem:[%s10 + $0x2bc] sm:$0xff]
    %v4455 = vld [vmem:[%s10 + $0x2c4] sm:$0xff]
    %v4456 = vld [vmem:[%s10 + $0x2cc] sm:$0xff]
    %v4457 = vld [vmem:[%s10 + $0x2d4] sm:$0xf]
    %v4458 = vld [vmem:[%s10 + $0x2d8] sm:$0xff]
    %v4459 = vld [vmem:[%s10 + $0x2e0] sm:$0xff]
    %v4460 = vld [vmem:[%s10 + $0x2e8] sm:$0xff]
    %v4461 = vld [vmem:[%s10 + $0x2f0] sm:$0xf]
    %v4462 = vld [vmem:[%s10 + $0x2f4] sm:$0xff]
    %v4463 = vld [vmem:[%s10 + $0x2fc] sm:$0xff]
    %v4464 = vld [vmem:[%s10 + $0x304] sm:$0xff]
    %v4465 = vld [vmem:[%s10 + $0x30c] sm:$0xf]
    %v4466 = vld [vmem:[%s10 + $0x310] sm:$0xff]
    %v4467 = vld [vmem:[%s10 + $0x318] sm:$0xff]
    %v4468 = vld [vmem:[%s10 + $0x320] sm:$0xff]
    %v4469 = vld [vmem:[%s10 + $0x328] sm:$0xf]
    %v4470 = vld [vmem:[%s10 + $0x32c] sm:$0xff]
    %v4471 = vld [vmem:[%s10 + $0x334] sm:$0xff]
    %v4472 = vld [vmem:[%s10 + $0x33c] sm:$0xff]
    %v4473 = vld [vmem:[%s10 + $0x344] sm:$0xf]
    %v4474 = vld [vmem:[%s10 + $0x348] sm:$0xff]
    %v4475 = vld [vmem:[%s10 + $0x350] sm:$0xff]
    %v4476 = vld [vmem:[%s10 + $0x358] sm:$0xff]
    %v4477 = vld [vmem:[%s10 + $0x360] sm:$0xf]
    %v4478 = vld [vmem:[%s10 + $0x364] sm:$0xff]
    %v4479 = vld [vmem:[%s10 + $0x36c] sm:$0xff]
    %v4480 = vld [vmem:[%s10 + $0x374] sm:$0xff]
    %v4481 = vld [vmem:[%s10 + $0x37c] sm:$0xf]
    %v4482 = vld [vmem:[%s10 + $0x380] sm:$0xff]
    %v4483 = vld [vmem:[%s10 + $0x388] sm:$0xff]
    %v4484 = vld [vmem:[%s10 + $0x390] sm:$0xff]
    %v4485 = vld [vmem:[%s10 + $0x398] sm:$0xf]
    %v4486 = vld [vmem:[%s10 + $0x39c] sm:$0xff]
    %v4487 = vld [vmem:[%s10 + $0x3a4] sm:$0xff]
    %v4488 = vld [vmem:[%s10 + $0x3ac] sm:$0xff]
    %v4489 = vld [vmem:[%s10 + $0x3b4] sm:$0xf]
    %v4490 = vld [vmem:[%s10 + $0x3b8] sm:$0xff]
    %v4491 = vld [vmem:[%s10 + $0x3c0] sm:$0xff]
    %v4492 = vld [vmem:[%s10 + $0x3c8] sm:$0xff]
    %v4493 = vld [vmem:[%s10 + $0x3d0] sm:$0xf]
    %v4494 = vld [vmem:[%s10 + $0x3d4] sm:$0xff]
    %v4495 = vld [vmem:[%s10 + $0x3dc] sm:$0xff]
    %v4496 = vld [vmem:[%s10 + $0x3e4] sm:$0xff]
    %v4497 = vld [vmem:[%s10 + $0x3ec] sm:$0xf]
    %v4498 = vld [vmem:[%s10 + $0x3f0] sm:$0xff]
    %v4499 = vld [vmem:[%s10 + $0x3f8] sm:$0xff]
    %v4500 = vld [vmem:[%s10 + $0x400] sm:$0xff]
    %v4501 = vld [vmem:[%s10 + $0x408] sm:$0xf]
    %v4502 = vld [vmem:[%s10 + $0x40c] sm:$0xff]
    %v4503 = vld [vmem:[%s10 + $0x414] sm:$0xff]
    %v4504 = vld [vmem:[%s10 + $0x41c] sm:$0xff]
    %v4505 = vld [vmem:[%s10 + $0x424] sm:$0xf]
    %v4506 = vld [vmem:[%s10 + $0x428] sm:$0xff]
    %v4507 = vld [vmem:[%s10 + $0x430] sm:$0xff]
    %v4508 = vld [vmem:[%s10 + $0x438] sm:$0xff]
    %v4509 = vld [vmem:[%s10 + $0x440] sm:$0xf]
    %v4510 = vld [vmem:[%s10 + $0x444] sm:$0xff]
    %v4511 = vld [vmem:[%s10 + $0x44c] sm:$0xff]
    %v4512 = vld [vmem:[%s10 + $0x454] sm:$0xff]
    %v4513 = vld [vmem:[%s10 + $0x45c] sm:$0xf]
    %v4514 = vld [vmem:[%s10 + $0x460] sm:$0xff]
    %v4515 = vld [vmem:[%s10 + $0x468] sm:$0xff]
    %v4516 = vld [vmem:[%s10 + $0x470] sm:$0xff]
    %v4517 = vld [vmem:[%s10 + $0x478] sm:$0xf]
    %v4518 = vld [vmem:[%s10 + $0x47c] sm:$0xff]
    %v4519 = vld [vmem:[%s10 + $0x484] sm:$0xff]
    %v4520 = vld [vmem:[%s10 + $0x48c] sm:$0xff]
    %v4521 = vld [vmem:[%s10 + $0x494] sm:$0xf]
    %v4522 = vld [vmem:[%s10 + $0x498] sm:$0xff]
    %v4523 = vld [vmem:[%s10 + $0x4a0] sm:$0xff]
    %v4524 = vld [vmem:[%s10 + $0x4a8] sm:$0xff]
    %v4525 = vld [vmem:[%s10 + $0x4b0] sm:$0xf]
    %v4526 = vld [vmem:[%s10 + $0x4b4] sm:$0xff]
    %v4527 = vld [vmem:[%s10 + $0x4bc] sm:$0xff]
    %v4528 = vld [vmem:[%s10 + $0x4c4] sm:$0xff]
    %v4529 = vld [vmem:[%s10 + $0x4cc] sm:$0xf]
    %v4530 = vld [vmem:[%s10 + $0x4d0] sm:$0xff]
    %v4531 = vld [vmem:[%s10 + $0x4d8] sm:$0xff]
    %v4532 = vld [vmem:[%s10 + $0x4e0] sm:$0xff]
    %v4533 = vld [vmem:[%s10 + $0x4e8] sm:$0xf]
    %v4534 = vld [vmem:[%s10 + $0x4ec] sm:$0xff]
    %v4535 = vld [vmem:[%s10 + $0x4f4] sm:$0xff]
    %v4536 = vld [vmem:[%s10 + $0x4fc] sm:$0xff]
    %v4537 = vld [vmem:[%s10 + $0x504] sm:$0xf]
    %v4538 = vld [vmem:[%s10 + $0x508] sm:$0xff]
    %v4539 = vld [vmem:[%s10 + $0x510] sm:$0xff]
    %v4540 = vld [vmem:[%s10 + $0x518] sm:$0xff]
    %v4541 = vld [vmem:[%s10 + $0x520] sm:$0xf]
    %v4542 = vld [vmem:[%s10 + $0x524] sm:$0xff]
    %v4543 = vld [vmem:[%s10 + $0x52c] sm:$0xff]
    %v4544 = vld [vmem:[%s10 + $0x534] sm:$0xff]
    %v4545 = vld [vmem:[%s10 + $0x53c] sm:$0xf]
    %v4546 = vld [vmem:[%s10 + $0x540] sm:$0xff]
    %v4547 = vld [vmem:[%s10 + $0x548] sm:$0xff]
    %v4548 = vld [vmem:[%s10 + $0x550] sm:$0xff]
    %v4549 = vld [vmem:[%s10 + $0x558] sm:$0xf]
    %v4550 = vld [vmem:[%s10 + $0x55c] sm:$0xff]
    %v4551 = vld [vmem:[%s10 + $0x564] sm:$0xff]
    %v4552 = vld [vmem:[%s10 + $0x56c] sm:$0xff]
    %v4553 = vld [vmem:[%s10 + $0x574] sm:$0xf]
    %v4554 = vld [vmem:[%s10 + $0x578] sm:$0xff]
    %v4555 = vld [vmem:[%s10 + $0x580] sm:$0xff]
    %v4556 = vld [vmem:[%s10 + $0x588] sm:$0xff]
    %v4557 = vld [vmem:[%s10 + $0x590] sm:$0xf]
    %v4558 = vld [vmem:[%s10 + $0x594] sm:$0xff]
    %v4559 = vld [vmem:[%s10 + $0x59c] sm:$0xff]
    %v4560 = vld [vmem:[%s10 + $0x5a4] sm:$0xff]
    %v4561 = vld [vmem:[%s10 + $0x5ac] sm:$0xf]
    %v4562 = vld [vmem:[%s10 + $0x5b0] sm:$0xff]
    %v4563 = vld [vmem:[%s10 + $0x5b8] sm:$0xff]
    %v4564 = vld [vmem:[%s10 + $0x5c0] sm:$0xff]
    %v4565 = vld [vmem:[%s10 + $0x5c8] sm:$0xf]
    %v4566 = vld [vmem:[%s10 + $0x5cc] sm:$0xff]
    %v4567 = vld [vmem:[%s10 + $0x5d4] sm:$0xff]
    %v4568 = vld [vmem:[%s10 + $0x5dc] sm:$0xff]
    %v4569 = vld [vmem:[%s10 + $0x5e4] sm:$0xf]
    %v4570 = vld [vmem:[%s10 + $0x5e8] sm:$0xff]
    %v4571 = vld [vmem:[%s10 + $0x5f0] sm:$0xff]
    %v4572 = vld [vmem:[%s10 + $0x5f8] sm:$0xff]
    %v4573 = vld [vmem:[%s10 + $0x600] sm:$0xf]
    %v4574 = vld [vmem:[%s10 + $0x604] sm:$0xff]
    %v4575 = vld [vmem:[%s10 + $0x60c] sm:$0xff]
    %v4576 = vld [vmem:[%s10 + $0x614] sm:$0xff]
    %v4577 = vld [vmem:[%s10 + $0x61c] sm:$0xf]
    %v4578 = vld [vmem:[%s10 + $0x620] sm:$0xff]
    %v4579 = vld [vmem:[%s10 + $0x628] sm:$0xff]
    %v4580 = vld [vmem:[%s10 + $0x630] sm:$0xff]
    %v4581 = vld [vmem:[%s10 + $0x638] sm:$0xf]
    %v4582 = vld [vmem:[%s10 + $0x63c] sm:$0xff]
    %v4583 = vld [vmem:[%s10 + $0x644] sm:$0xff]
    %v4584 = vld [vmem:[%s10 + $0x64c] sm:$0xff]
    %v4585 = vld [vmem:[%s10 + $0x654] sm:$0xf]
    %v4586 = vld [vmem:[%s10 + $0x658] sm:$0xff]
    %v4587 = vld [vmem:[%s10 + $0x660] sm:$0xff]
    %v4588 = vld [vmem:[%s10 + $0x668] sm:$0xff]
    %v4589 = vld [vmem:[%s10 + $0x670] sm:$0xf]
    %v4590 = vld [vmem:[%s10 + $0x674] sm:$0xff]
    %v4591 = vld [vmem:[%s10 + $0x67c] sm:$0xff]
    %v4592 = vld [vmem:[%s10 + $0x684] sm:$0xff]
    %v4593 = vld [vmem:[%s10 + $0x68c] sm:$0xf]
    %v4594 = vld [vmem:[%s10 + $0x690] sm:$0xff]
    %v4595 = vld [vmem:[%s10 + $0x698] sm:$0xff]
    %v4596 = vld [vmem:[%s10 + $0x6a0] sm:$0xff]
    %v4597 = vld [vmem:[%s10 + $0x6a8] sm:$0xf]
    %v4598 = vld [vmem:[%s10 + $0x6ac] sm:$0xff]
    %v4599 = vld [vmem:[%s10 + $0x6b4] sm:$0xff]
    %v4600 = vld [vmem:[%s10 + $0x6bc] sm:$0xff]
    %v4601 = vld [vmem:[%s10 + $0x6c4] sm:$0xf]
    %v4602 = vld [vmem:[%s10 + $0x6c8] sm:$0xff]
    %v4603 = vld [vmem:[%s10 + $0x6d0] sm:$0xff]
    %v4604 = vld [vmem:[%s10 + $0x6d8] sm:$0xff]
    %v4605 = vld [vmem:[%s10 + $0x6e0] sm:$0xf]
    %v4606 = vld [vmem:[%s10 + $0x6e4] sm:$0xff]
    %v4607 = vld [vmem:[%s10 + $0x6ec] sm:$0xff]
    %v4608 = vld [vmem:[%s10 + $0x6f4] sm:$0xff]
    %v4609 = vld [vmem:[%s10 + $0x6fc] sm:$0xf]
    %v4610 = vld [vmem:[%s11 + $0x10] sm:$0x7f]
    %v4612 = vlaneseq
    %v4613 = vshrl.u32 %v4612, 7
    %v4614 = vsub.s32 0, %v4613
    %v4615 = vrot.slane %v4610, %v4614
    %v4616 = vlaneseq
    %v4617 = vshrl.u32 %v4616, 7
    %v4618 = vsub.s32 1, %v4617
    %v4619 = vrot.slane %v4610, %v4618
    %v4620 = vlaneseq
    %v4621 = vshrl.u32 %v4620, 7
    %v4622 = vsub.s32 2, %v4621
    %v4623 = vrot.slane %v4610, %v4622
    %v4624 = vlaneseq
    %v4625 = vshrl.u32 %v4624, 7
    %v4626 = vsub.s32 3, %v4625
    %v4627 = vrot.slane %v4610, %v4626
    %v4628 = vlaneseq
    %v4629 = vshrl.u32 %v4628, 7
    %v4630 = vsub.s32 4, %v4629
    %v4631 = vrot.slane %v4610, %v4630
    %v4632 = vlaneseq
    %v4633 = vshrl.u32 %v4632, 7
    %v4634 = vsub.s32 5, %v4633
    %v4635 = vrot.slane %v4610, %v4634
    %v4636 = vlaneseq
    %v4637 = vshrl.u32 %v4636, 7
    %v4638 = vsub.s32 6, %v4637
    %v4639 = vrot.slane %v4610, %v4638
    %v4903 = vunpack.c.l.b16 %v4354
    %v4904 = vunpack.c.h.b16 %v4354
    %v4905 = vunpack.c.l.b16 %v4355
    %v4906 = vunpack.c.h.b16 %v4355
    %v4907 = vunpack.c.l.b16 %v4356
    %v4908 = vunpack.c.h.b16 %v4356
    %v4909 = vunpack.c.l.b16 %v4357
    %v4910 = vunpack.c.l.b16 %v4358
    %v4911 = vunpack.c.h.b16 %v4358
    %v4912 = vunpack.c.l.b16 %v4359
    %v4913 = vunpack.c.h.b16 %v4359
    %v4914 = vunpack.c.l.b16 %v4360
    %v4915 = vunpack.c.h.b16 %v4360
    %v4916 = vunpack.c.l.b16 %v4361
    %v4917 = vunpack.c.l.b16 %v4362
    %v4918 = vunpack.c.h.b16 %v4362
    %v4919 = vunpack.c.l.b16 %v4363
    %v4920 = vunpack.c.h.b16 %v4363
    %v4921 = vunpack.c.l.b16 %v4364
    %v4922 = vunpack.c.h.b16 %v4364
    %v4923 = vunpack.c.l.b16 %v4365
    %v4924 = vunpack.c.l.b16 %v4366
    %v4925 = vunpack.c.h.b16 %v4366
    %v4926 = vunpack.c.l.b16 %v4367
    %v4927 = vunpack.c.h.b16 %v4367
    %v4928 = vunpack.c.l.b16 %v4368
    %v4929 = vunpack.c.h.b16 %v4368
    %v4930 = vunpack.c.l.b16 %v4369
    %v4931 = vunpack.c.l.b16 %v4370
    %v4932 = vunpack.c.h.b16 %v4370
    %v4933 = vunpack.c.l.b16 %v4371
    %v4934 = vunpack.c.h.b16 %v4371
    %v4935 = vunpack.c.l.b16 %v4372
    %v4936 = vunpack.c.h.b16 %v4372
    %v4937 = vunpack.c.l.b16 %v4373
    %v4938 = vunpack.c.l.b16 %v4374
    %v4939 = vunpack.c.h.b16 %v4374
    %v4940 = vunpack.c.l.b16 %v4375
    %v4941 = vunpack.c.h.b16 %v4375
    %v4942 = vunpack.c.l.b16 %v4376
    %v4943 = vunpack.c.h.b16 %v4376
    %v4944 = vunpack.c.l.b16 %v4377
    %v4945 = vunpack.c.l.b16 %v4378
    %v4946 = vunpack.c.h.b16 %v4378
    %v4947 = vunpack.c.l.b16 %v4379
    %v4948 = vunpack.c.h.b16 %v4379
    %v4949 = vunpack.c.l.b16 %v4380
    %v4950 = vunpack.c.h.b16 %v4380
    %v4951 = vunpack.c.l.b16 %v4381
    %v4952 = vunpack.c.l.b16 %v4382
    %v4953 = vunpack.c.h.b16 %v4382
    %v4954 = vunpack.c.l.b16 %v4383
    %v4955 = vunpack.c.h.b16 %v4383
    %v4956 = vunpack.c.l.b16 %v4384
    %v4957 = vunpack.c.h.b16 %v4384
    %v4958 = vunpack.c.l.b16 %v4385
    %v4959 = vunpack.c.l.b16 %v4386
    %v4960 = vunpack.c.h.b16 %v4386
    %v4961 = vunpack.c.l.b16 %v4387
    %v4962 = vunpack.c.h.b16 %v4387
    %v4963 = vunpack.c.l.b16 %v4388
    %v4964 = vunpack.c.h.b16 %v4388
    %v4965 = vunpack.c.l.b16 %v4389
    %v4966 = vunpack.c.l.b16 %v4390
    %v4967 = vunpack.c.h.b16 %v4390
    %v4968 = vunpack.c.l.b16 %v4391
    %v4969 = vunpack.c.h.b16 %v4391
    %v4970 = vunpack.c.l.b16 %v4392
    %v4971 = vunpack.c.h.b16 %v4392
    %v4972 = vunpack.c.l.b16 %v4393
    %v4973 = vunpack.c.l.b16 %v4394
    %v4974 = vunpack.c.h.b16 %v4394
    %v4975 = vunpack.c.l.b16 %v4395
    %v4976 = vunpack.c.h.b16 %v4395
    %v4977 = vunpack.c.l.b16 %v4396
    %v4978 = vunpack.c.h.b16 %v4396
    %v4979 = vunpack.c.l.b16 %v4397
    %v4980 = vunpack.c.l.b16 %v4398
    %v4981 = vunpack.c.h.b16 %v4398
    %v4982 = vunpack.c.l.b16 %v4399
    %v4983 = vunpack.c.h.b16 %v4399
    %v4984 = vunpack.c.l.b16 %v4400
    %v4985 = vunpack.c.h.b16 %v4400
    %v4986 = vunpack.c.l.b16 %v4401
    %v4987 = vunpack.c.l.b16 %v4402
    %v4988 = vunpack.c.h.b16 %v4402
    %v4989 = vunpack.c.l.b16 %v4403
    %v4990 = vunpack.c.h.b16 %v4403
    %v4991 = vunpack.c.l.b16 %v4404
    %v4992 = vunpack.c.h.b16 %v4404
    %v4993 = vunpack.c.l.b16 %v4405
    %v4994 = vunpack.c.l.b16 %v4406
    %v4995 = vunpack.c.h.b16 %v4406
    %v4996 = vunpack.c.l.b16 %v4407
    %v4997 = vunpack.c.h.b16 %v4407
    %v4998 = vunpack.c.l.b16 %v4408
    %v4999 = vunpack.c.h.b16 %v4408
    %v5000 = vunpack.c.l.b16 %v4409
    %v5001 = vunpack.c.l.b16 %v4410
    %v5002 = vunpack.c.h.b16 %v4410
    %v5003 = vunpack.c.l.b16 %v4411
    %v5004 = vunpack.c.h.b16 %v4411
    %v5005 = vunpack.c.l.b16 %v4412
    %v5006 = vunpack.c.h.b16 %v4412
    %v5007 = vunpack.c.l.b16 %v4413
    %v5008 = vunpack.c.l.b16 %v4414
    %v5009 = vunpack.c.h.b16 %v4414
    %v5010 = vunpack.c.l.b16 %v4415
    %v5011 = vunpack.c.h.b16 %v4415
    %v5012 = vunpack.c.l.b16 %v4416
    %v5013 = vunpack.c.h.b16 %v4416
    %v5014 = vunpack.c.l.b16 %v4417
    %v5015 = vunpack.c.l.b16 %v4418
    %v5016 = vunpack.c.h.b16 %v4418
    %v5017 = vunpack.c.l.b16 %v4419
    %v5018 = vunpack.c.h.b16 %v4419
    %v5019 = vunpack.c.l.b16 %v4420
    %v5020 = vunpack.c.h.b16 %v4420
    %v5021 = vunpack.c.l.b16 %v4421
    %v5022 = vunpack.c.l.b16 %v4422
    %v5023 = vunpack.c.h.b16 %v4422
    %v5024 = vunpack.c.l.b16 %v4423
    %v5025 = vunpack.c.h.b16 %v4423
    %v5026 = vunpack.c.l.b16 %v4424
    %v5027 = vunpack.c.h.b16 %v4424
    %v5028 = vunpack.c.l.b16 %v4425
    %v5029 = vunpack.c.l.b16 %v4426
    %v5030 = vunpack.c.h.b16 %v4426
    %v5031 = vunpack.c.l.b16 %v4427
    %v5032 = vunpack.c.h.b16 %v4427
    %v5033 = vunpack.c.l.b16 %v4428
    %v5034 = vunpack.c.h.b16 %v4428
    %v5035 = vunpack.c.l.b16 %v4429
    %v5036 = vunpack.c.l.b16 %v4430
    %v5037 = vunpack.c.h.b16 %v4430
    %v5038 = vunpack.c.l.b16 %v4431
    %v5039 = vunpack.c.h.b16 %v4431
    %v5040 = vunpack.c.l.b16 %v4432
    %v5041 = vunpack.c.h.b16 %v4432
    %v5042 = vunpack.c.l.b16 %v4433
    %v5043 = vunpack.c.l.b16 %v4434
    %v5044 = vunpack.c.h.b16 %v4434
    %v5045 = vunpack.c.l.b16 %v4435
    %v5046 = vunpack.c.h.b16 %v4435
    %v5047 = vunpack.c.l.b16 %v4436
    %v5048 = vunpack.c.h.b16 %v4436
    %v5049 = vunpack.c.l.b16 %v4437
    %v5050 = vunpack.c.l.b16 %v4438
    %v5051 = vunpack.c.h.b16 %v4438
    %v5052 = vunpack.c.l.b16 %v4439
    %v5053 = vunpack.c.h.b16 %v4439
    %v5054 = vunpack.c.l.b16 %v4440
    %v5055 = vunpack.c.h.b16 %v4440
    %v5056 = vunpack.c.l.b16 %v4441
    %v5057 = vunpack.c.l.b16 %v4442
    %v5058 = vunpack.c.h.b16 %v4442
    %v5059 = vunpack.c.l.b16 %v4443
    %v5060 = vunpack.c.h.b16 %v4443
    %v5061 = vunpack.c.l.b16 %v4444
    %v5062 = vunpack.c.h.b16 %v4444
    %v5063 = vunpack.c.l.b16 %v4445
    %v5064 = vunpack.c.l.b16 %v4446
    %v5065 = vunpack.c.h.b16 %v4446
    %v5066 = vunpack.c.l.b16 %v4447
    %v5067 = vunpack.c.h.b16 %v4447
    %v5068 = vunpack.c.l.b16 %v4448
    %v5069 = vunpack.c.h.b16 %v4448
    %v5070 = vunpack.c.l.b16 %v4449
    %v5071 = vunpack.c.l.b16 %v4450
    %v5072 = vunpack.c.h.b16 %v4450
    %v5073 = vunpack.c.l.b16 %v4451
    %v5074 = vunpack.c.h.b16 %v4451
    %v5075 = vunpack.c.l.b16 %v4452
    %v5076 = vunpack.c.h.b16 %v4452
    %v5077 = vunpack.c.l.b16 %v4453
    %v5078 = vunpack.c.l.b16 %v4454
    %v5079 = vunpack.c.h.b16 %v4454
    %v5080 = vunpack.c.l.b16 %v4455
    %v5081 = vunpack.c.h.b16 %v4455
    %v5082 = vunpack.c.l.b16 %v4456
    %v5083 = vunpack.c.h.b16 %v4456
    %v5084 = vunpack.c.l.b16 %v4457
    %v5085 = vunpack.c.l.b16 %v4458
    %v5086 = vunpack.c.h.b16 %v4458
    %v5087 = vunpack.c.l.b16 %v4459
    %v5088 = vunpack.c.h.b16 %v4459
    %v5089 = vunpack.c.l.b16 %v4460
    %v5090 = vunpack.c.h.b16 %v4460
    %v5091 = vunpack.c.l.b16 %v4461
    %v5092 = vunpack.c.l.b16 %v4462
    %v5093 = vunpack.c.h.b16 %v4462
    %v5094 = vunpack.c.l.b16 %v4463
    %v5095 = vunpack.c.h.b16 %v4463
    %v5096 = vunpack.c.l.b16 %v4464
    %v5097 = vunpack.c.h.b16 %v4464
    %v5098 = vunpack.c.l.b16 %v4465
    %v5099 = vunpack.c.l.b16 %v4466
    %v5100 = vunpack.c.h.b16 %v4466
    %v5101 = vunpack.c.l.b16 %v4467
    %v5102 = vunpack.c.h.b16 %v4467
    %v5103 = vunpack.c.l.b16 %v4468
    %v5104 = vunpack.c.h.b16 %v4468
    %v5105 = vunpack.c.l.b16 %v4469
    %v5106 = vunpack.c.l.b16 %v4470
    %v5107 = vunpack.c.h.b16 %v4470
    %v5108 = vunpack.c.l.b16 %v4471
    %v5109 = vunpack.c.h.b16 %v4471
    %v5110 = vunpack.c.l.b16 %v4472
    %v5111 = vunpack.c.h.b16 %v4472
    %v5112 = vunpack.c.l.b16 %v4473
    %v5113 = vunpack.c.l.b16 %v4474
    %v5114 = vunpack.c.h.b16 %v4474
    %v5115 = vunpack.c.l.b16 %v4475
    %v5116 = vunpack.c.h.b16 %v4475
    %v5117 = vunpack.c.l.b16 %v4476
    %v5118 = vunpack.c.h.b16 %v4476
    %v5119 = vunpack.c.l.b16 %v4477
    %v5120 = vunpack.c.l.b16 %v4478
    %v5121 = vunpack.c.h.b16 %v4478
    %v5122 = vunpack.c.l.b16 %v4479
    %v5123 = vunpack.c.h.b16 %v4479
    %v5124 = vunpack.c.l.b16 %v4480
    %v5125 = vunpack.c.h.b16 %v4480
    %v5126 = vunpack.c.l.b16 %v4481
    %v5127 = vunpack.c.l.b16 %v4482
    %v5128 = vunpack.c.h.b16 %v4482
    %v5129 = vunpack.c.l.b16 %v4483
    %v5130 = vunpack.c.h.b16 %v4483
    %v5131 = vunpack.c.l.b16 %v4484
    %v5132 = vunpack.c.h.b16 %v4484
    %v5133 = vunpack.c.l.b16 %v4485
    %v5134 = vunpack.c.l.b16 %v4486
    %v5135 = vunpack.c.h.b16 %v4486
    %v5136 = vunpack.c.l.b16 %v4487
    %v5137 = vunpack.c.h.b16 %v4487
    %v5138 = vunpack.c.l.b16 %v4488
    %v5139 = vunpack.c.h.b16 %v4488
    %v5140 = vunpack.c.l.b16 %v4489
    %v5141 = vunpack.c.l.b16 %v4490
    %v5142 = vunpack.c.h.b16 %v4490
    %v5143 = vunpack.c.l.b16 %v4491
    %v5144 = vunpack.c.h.b16 %v4491
    %v5145 = vunpack.c.l.b16 %v4492
    %v5146 = vunpack.c.h.b16 %v4492
    %v5147 = vunpack.c.l.b16 %v4493
    %v5148 = vunpack.c.l.b16 %v4494
    %v5149 = vunpack.c.h.b16 %v4494
    %v5150 = vunpack.c.l.b16 %v4495
    %v5151 = vunpack.c.h.b16 %v4495
    %v5152 = vunpack.c.l.b16 %v4496
    %v5153 = vunpack.c.h.b16 %v4496
    %v5154 = vunpack.c.l.b16 %v4497
    %v5155 = vunpack.c.l.b16 %v4498
    %v5156 = vunpack.c.h.b16 %v4498
    %v5157 = vunpack.c.l.b16 %v4499
    %v5158 = vunpack.c.h.b16 %v4499
    %v5159 = vunpack.c.l.b16 %v4500
    %v5160 = vunpack.c.h.b16 %v4500
    %v5161 = vunpack.c.l.b16 %v4501
    %v5162 = vunpack.c.l.b16 %v4502
    %v5163 = vunpack.c.h.b16 %v4502
    %v5164 = vunpack.c.l.b16 %v4503
    %v5165 = vunpack.c.h.b16 %v4503
    %v5166 = vunpack.c.l.b16 %v4504
    %v5167 = vunpack.c.h.b16 %v4504
    %v5168 = vunpack.c.l.b16 %v4505
    %v5169 = vunpack.c.l.b16 %v4506
    %v5170 = vunpack.c.h.b16 %v4506
    %v5171 = vunpack.c.l.b16 %v4507
    %v5172 = vunpack.c.h.b16 %v4507
    %v5173 = vunpack.c.l.b16 %v4508
    %v5174 = vunpack.c.h.b16 %v4508
    %v5175 = vunpack.c.l.b16 %v4509
    %v5176 = vunpack.c.l.b16 %v4510
    %v5177 = vunpack.c.h.b16 %v4510
    %v5178 = vunpack.c.l.b16 %v4511
    %v5179 = vunpack.c.h.b16 %v4511
    %v5180 = vunpack.c.l.b16 %v4512
    %v5181 = vunpack.c.h.b16 %v4512
    %v5182 = vunpack.c.l.b16 %v4513
    %v5183 = vunpack.c.l.b16 %v4514
    %v5184 = vunpack.c.h.b16 %v4514
    %v5185 = vunpack.c.l.b16 %v4515
    %v5186 = vunpack.c.h.b16 %v4515
    %v5187 = vunpack.c.l.b16 %v4516
    %v5188 = vunpack.c.h.b16 %v4516
    %v5189 = vunpack.c.l.b16 %v4517
    %v5190 = vunpack.c.l.b16 %v4518
    %v5191 = vunpack.c.h.b16 %v4518
    %v5192 = vunpack.c.l.b16 %v4519
    %v5193 = vunpack.c.h.b16 %v4519
    %v5194 = vunpack.c.l.b16 %v4520
    %v5195 = vunpack.c.h.b16 %v4520
    %v5196 = vunpack.c.l.b16 %v4521
    %v5197 = vunpack.c.l.b16 %v4522
    %v5198 = vunpack.c.h.b16 %v4522
    %v5199 = vunpack.c.l.b16 %v4523
    %v5200 = vunpack.c.h.b16 %v4523
    %v5201 = vunpack.c.l.b16 %v4524
    %v5202 = vunpack.c.h.b16 %v4524
    %v5203 = vunpack.c.l.b16 %v4525
    %v5204 = vunpack.c.l.b16 %v4526
    %v5205 = vunpack.c.h.b16 %v4526
    %v5206 = vunpack.c.l.b16 %v4527
    %v5207 = vunpack.c.h.b16 %v4527
    %v5208 = vunpack.c.l.b16 %v4528
    %v5209 = vunpack.c.h.b16 %v4528
    %v5210 = vunpack.c.l.b16 %v4529
    %v5211 = vunpack.c.l.b16 %v4530
    %v5212 = vunpack.c.h.b16 %v4530
    %v5213 = vunpack.c.l.b16 %v4531
    %v5214 = vunpack.c.h.b16 %v4531
    %v5215 = vunpack.c.l.b16 %v4532
    %v5216 = vunpack.c.h.b16 %v4532
    %v5217 = vunpack.c.l.b16 %v4533
    %v5218 = vunpack.c.l.b16 %v4534
    %v5219 = vunpack.c.h.b16 %v4534
    %v5220 = vunpack.c.l.b16 %v4535
    %v5221 = vunpack.c.h.b16 %v4535
    %v5222 = vunpack.c.l.b16 %v4536
    %v5223 = vunpack.c.h.b16 %v4536
    %v5224 = vunpack.c.l.b16 %v4537
    %v5225 = vunpack.c.l.b16 %v4538
    %v5226 = vunpack.c.h.b16 %v4538
    %v5227 = vunpack.c.l.b16 %v4539
    %v5228 = vunpack.c.h.b16 %v4539
    %v5229 = vunpack.c.l.b16 %v4540
    %v5230 = vunpack.c.h.b16 %v4540
    %v5231 = vunpack.c.l.b16 %v4541
    %v5232 = vunpack.c.l.b16 %v4542
    %v5233 = vunpack.c.h.b16 %v4542
    %v5234 = vunpack.c.l.b16 %v4543
    %v5235 = vunpack.c.h.b16 %v4543
    %v5236 = vunpack.c.l.b16 %v4544
    %v5237 = vunpack.c.h.b16 %v4544
    %v5238 = vunpack.c.l.b16 %v4545
    %v5239 = vunpack.c.l.b16 %v4546
    %v5240 = vunpack.c.h.b16 %v4546
    %v5241 = vunpack.c.l.b16 %v4547
    %v5242 = vunpack.c.h.b16 %v4547
    %v5243 = vunpack.c.l.b16 %v4548
    %v5244 = vunpack.c.h.b16 %v4548
    %v5245 = vunpack.c.l.b16 %v4549
    %v5246 = vunpack.c.l.b16 %v4550
    %v5247 = vunpack.c.h.b16 %v4550
    %v5248 = vunpack.c.l.b16 %v4551
    %v5249 = vunpack.c.h.b16 %v4551
    %v5250 = vunpack.c.l.b16 %v4552
    %v5251 = vunpack.c.h.b16 %v4552
    %v5252 = vunpack.c.l.b16 %v4553
    %v5253 = vunpack.c.l.b16 %v4554
    %v5254 = vunpack.c.h.b16 %v4554
    %v5255 = vunpack.c.l.b16 %v4555
    %v5256 = vunpack.c.h.b16 %v4555
    %v5257 = vunpack.c.l.b16 %v4556
    %v5258 = vunpack.c.h.b16 %v4556
    %v5259 = vunpack.c.l.b16 %v4557
    %v5260 = vunpack.c.l.b16 %v4558
    %v5261 = vunpack.c.h.b16 %v4558
    %v5262 = vunpack.c.l.b16 %v4559
    %v5263 = vunpack.c.h.b16 %v4559
    %v5264 = vunpack.c.l.b16 %v4560
    %v5265 = vunpack.c.h.b16 %v4560
    %v5266 = vunpack.c.l.b16 %v4561
    %v5267 = vunpack.c.l.b16 %v4562
    %v5268 = vunpack.c.h.b16 %v4562
    %v5269 = vunpack.c.l.b16 %v4563
    %v5270 = vunpack.c.h.b16 %v4563
    %v5271 = vunpack.c.l.b16 %v4564
    %v5272 = vunpack.c.h.b16 %v4564
    %v5273 = vunpack.c.l.b16 %v4565
    %v5274 = vunpack.c.l.b16 %v4566
    %v5275 = vunpack.c.h.b16 %v4566
    %v5276 = vunpack.c.l.b16 %v4567
    %v5277 = vunpack.c.h.b16 %v4567
    %v5278 = vunpack.c.l.b16 %v4568
    %v5279 = vunpack.c.h.b16 %v4568
    %v5280 = vunpack.c.l.b16 %v4569
    %v5281 = vunpack.c.l.b16 %v4570
    %v5282 = vunpack.c.h.b16 %v4570
    %v5283 = vunpack.c.l.b16 %v4571
    %v5284 = vunpack.c.h.b16 %v4571
    %v5285 = vunpack.c.l.b16 %v4572
    %v5286 = vunpack.c.h.b16 %v4572
    %v5287 = vunpack.c.l.b16 %v4573
    %v5288 = vunpack.c.l.b16 %v4574
    %v5289 = vunpack.c.h.b16 %v4574
    %v5290 = vunpack.c.l.b16 %v4575
    %v5291 = vunpack.c.h.b16 %v4575
    %v5292 = vunpack.c.l.b16 %v4576
    %v5293 = vunpack.c.h.b16 %v4576
    %v5294 = vunpack.c.l.b16 %v4577
    %v5295 = vunpack.c.l.b16 %v4578
    %v5296 = vunpack.c.h.b16 %v4578
    %v5297 = vunpack.c.l.b16 %v4579
    %v5298 = vunpack.c.h.b16 %v4579
    %v5299 = vunpack.c.l.b16 %v4580
    %v5300 = vunpack.c.h.b16 %v4580
    %v5301 = vunpack.c.l.b16 %v4581
    %v5302 = vunpack.c.l.b16 %v4582
    %v5303 = vunpack.c.h.b16 %v4582
    %v5304 = vunpack.c.l.b16 %v4583
    %v5305 = vunpack.c.h.b16 %v4583
    %v5306 = vunpack.c.l.b16 %v4584
    %v5307 = vunpack.c.h.b16 %v4584
    %v5308 = vunpack.c.l.b16 %v4585
    %v5309 = vunpack.c.l.b16 %v4586
    %v5310 = vunpack.c.h.b16 %v4586
    %v5311 = vunpack.c.l.b16 %v4587
    %v5312 = vunpack.c.h.b16 %v4587
    %v5313 = vunpack.c.l.b16 %v4588
    %v5314 = vunpack.c.h.b16 %v4588
    %v5315 = vunpack.c.l.b16 %v4589
    %v5316 = vunpack.c.l.b16 %v4590
    %v5317 = vunpack.c.h.b16 %v4590
    %v5318 = vunpack.c.l.b16 %v4591
    %v5319 = vunpack.c.h.b16 %v4591
    %v5320 = vunpack.c.l.b16 %v4592
    %v5321 = vunpack.c.h.b16 %v4592
    %v5322 = vunpack.c.l.b16 %v4593
    %v5323 = vunpack.c.l.b16 %v4594
    %v5324 = vunpack.c.h.b16 %v4594
    %v5325 = vunpack.c.l.b16 %v4595
    %v5326 = vunpack.c.h.b16 %v4595
    %v5327 = vunpack.c.l.b16 %v4596
    %v5328 = vunpack.c.h.b16 %v4596
    %v5329 = vunpack.c.l.b16 %v4597
    %v5330 = vunpack.c.l.b16 %v4598
    %v5331 = vunpack.c.h.b16 %v4598
    %v5332 = vunpack.c.l.b16 %v4599
    %v5333 = vunpack.c.h.b16 %v4599
    %v5334 = vunpack.c.l.b16 %v4600
    %v5335 = vunpack.c.h.b16 %v4600
    %v5336 = vunpack.c.l.b16 %v4601
    %v5337 = vunpack.c.l.b16 %v4602
    %v5338 = vunpack.c.h.b16 %v4602
    %v5339 = vunpack.c.l.b16 %v4603
    %v5340 = vunpack.c.h.b16 %v4603
    %v5341 = vunpack.c.l.b16 %v4604
    %v5342 = vunpack.c.h.b16 %v4604
    %v5343 = vunpack.c.l.b16 %v4605
    %v5344 = vunpack.c.l.b16 %v4606
    %v5345 = vunpack.c.h.b16 %v4606
    %v5346 = vunpack.c.l.b16 %v4607
    %v5347 = vunpack.c.h.b16 %v4607
    %v5348 = vunpack.c.l.b16 %v4608
    %v5349 = vunpack.c.h.b16 %v4608
    %v5350 = vunpack.c.l.b16 %v4609
    %v5351 = vpack.c.b16 %v4910, %v4903
    %v5352 = vpack.c.b16 %v4911, %v4904
    %v5353 = vpack.c.b16 %v4912, %v4905
    %v5354 = vpack.c.b16 %v4913, %v4906
    %v5355 = vpack.c.b16 %v4914, %v4907
    %v5356 = vpack.c.b16 %v4915, %v4908
    %v5357 = vpack.c.b16 %v4916, %v4909
    %v5358 = vpack.c.b16 %v4924, %v4917
    %v5359 = vpack.c.b16 %v4925, %v4918
    %v5360 = vpack.c.b16 %v4926, %v4919
    %v5361 = vpack.c.b16 %v4927, %v4920
    %v5362 = vpack.c.b16 %v4928, %v4921
    %v5363 = vpack.c.b16 %v4929, %v4922
    %v5364 = vpack.c.b16 %v4930, %v4923
    %v5365 = vpack.c.b16 %v4938, %v4931
    %v5366 = vpack.c.b16 %v4939, %v4932
    %v5367 = vpack.c.b16 %v4940, %v4933
    %v5368 = vpack.c.b16 %v4941, %v4934
    %v5369 = vpack.c.b16 %v4942, %v4935
    %v5370 = vpack.c.b16 %v4943, %v4936
    %v5371 = vpack.c.b16 %v4944, %v4937
    %v5372 = vpack.c.b16 %v4952, %v4945
    %v5373 = vpack.c.b16 %v4953, %v4946
    %v5374 = vpack.c.b16 %v4954, %v4947
    %v5375 = vpack.c.b16 %v4955, %v4948
    %v5376 = vpack.c.b16 %v4956, %v4949
    %v5377 = vpack.c.b16 %v4957, %v4950
    %v5378 = vpack.c.b16 %v4958, %v4951
    %v5379 = vpack.c.b16 %v4966, %v4959
    %v5380 = vpack.c.b16 %v4967, %v4960
    %v5381 = vpack.c.b16 %v4968, %v4961
    %v5382 = vpack.c.b16 %v4969, %v4962
    %v5383 = vpack.c.b16 %v4970, %v4963
    %v5384 = vpack.c.b16 %v4971, %v4964
    %v5385 = vpack.c.b16 %v4972, %v4965
    %v5386 = vpack.c.b16 %v4980, %v4973
    %v5387 = vpack.c.b16 %v4981, %v4974
    %v5388 = vpack.c.b16 %v4982, %v4975
    %v5389 = vpack.c.b16 %v4983, %v4976
    %v5390 = vpack.c.b16 %v4984, %v4977
    %v5391 = vpack.c.b16 %v4985, %v4978
    %v5392 = vpack.c.b16 %v4986, %v4979
    %v5393 = vpack.c.b16 %v4994, %v4987
    %v5394 = vpack.c.b16 %v4995, %v4988
    %v5395 = vpack.c.b16 %v4996, %v4989
    %v5396 = vpack.c.b16 %v4997, %v4990
    %v5397 = vpack.c.b16 %v4998, %v4991
    %v5398 = vpack.c.b16 %v4999, %v4992
    %v5399 = vpack.c.b16 %v5000, %v4993
    %v5400 = vpack.c.b16 %v5008, %v5001
    %v5401 = vpack.c.b16 %v5009, %v5002
    %v5402 = vpack.c.b16 %v5010, %v5003
    %v5403 = vpack.c.b16 %v5011, %v5004
    %v5404 = vpack.c.b16 %v5012, %v5005
    %v5405 = vpack.c.b16 %v5013, %v5006
    %v5406 = vpack.c.b16 %v5014, %v5007
    %v5407 = vpack.c.b16 %v5022, %v5015
    %v5408 = vpack.c.b16 %v5023, %v5016
    %v5409 = vpack.c.b16 %v5024, %v5017
    %v5410 = vpack.c.b16 %v5025, %v5018
    %v5411 = vpack.c.b16 %v5026, %v5019
    %v5412 = vpack.c.b16 %v5027, %v5020
    %v5413 = vpack.c.b16 %v5028, %v5021
    %v5414 = vpack.c.b16 %v5036, %v5029
    %v5415 = vpack.c.b16 %v5037, %v5030
    %v5416 = vpack.c.b16 %v5038, %v5031
    %v5417 = vpack.c.b16 %v5039, %v5032
    %v5418 = vpack.c.b16 %v5040, %v5033
    %v5419 = vpack.c.b16 %v5041, %v5034
    %v5420 = vpack.c.b16 %v5042, %v5035
    %v5421 = vpack.c.b16 %v5050, %v5043
    %v5422 = vpack.c.b16 %v5051, %v5044
    %v5423 = vpack.c.b16 %v5052, %v5045
    %v5424 = vpack.c.b16 %v5053, %v5046
    %v5425 = vpack.c.b16 %v5054, %v5047
    %v5426 = vpack.c.b16 %v5055, %v5048
    %v5427 = vpack.c.b16 %v5056, %v5049
    %v5428 = vpack.c.b16 %v5064, %v5057
    %v5429 = vpack.c.b16 %v5065, %v5058
    %v5430 = vpack.c.b16 %v5066, %v5059
    %v5431 = vpack.c.b16 %v5067, %v5060
    %v5432 = vpack.c.b16 %v5068, %v5061
    %v5433 = vpack.c.b16 %v5069, %v5062
    %v5434 = vpack.c.b16 %v5070, %v5063
    %v5435 = vpack.c.b16 %v5078, %v5071
    %v5436 = vpack.c.b16 %v5079, %v5072
    %v5437 = vpack.c.b16 %v5080, %v5073
    %v5438 = vpack.c.b16 %v5081, %v5074
    %v5439 = vpack.c.b16 %v5082, %v5075
    %v5440 = vpack.c.b16 %v5083, %v5076
    %v5441 = vpack.c.b16 %v5084, %v5077
    %v5442 = vpack.c.b16 %v5092, %v5085
    %v5443 = vpack.c.b16 %v5093, %v5086
    %v5444 = vpack.c.b16 %v5094, %v5087
    %v5445 = vpack.c.b16 %v5095, %v5088
    %v5446 = vpack.c.b16 %v5096, %v5089
    %v5447 = vpack.c.b16 %v5097, %v5090
    %v5448 = vpack.c.b16 %v5098, %v5091
    %v5449 = vpack.c.b16 %v5106, %v5099
    %v5450 = vpack.c.b16 %v5107, %v5100
    %v5451 = vpack.c.b16 %v5108, %v5101
    %v5452 = vpack.c.b16 %v5109, %v5102
    %v5453 = vpack.c.b16 %v5110, %v5103
    %v5454 = vpack.c.b16 %v5111, %v5104
    %v5455 = vpack.c.b16 %v5112, %v5105
    %v5456 = vpack.c.b16 %v5120, %v5113
    %v5457 = vpack.c.b16 %v5121, %v5114
    %v5458 = vpack.c.b16 %v5122, %v5115
    %v5459 = vpack.c.b16 %v5123, %v5116
    %v5460 = vpack.c.b16 %v5124, %v5117
    %v5461 = vpack.c.b16 %v5125, %v5118
    %v5462 = vpack.c.b16 %v5126, %v5119
    %v5463 = vpack.c.b16 %v5134, %v5127
    %v5464 = vpack.c.b16 %v5135, %v5128
    %v5465 = vpack.c.b16 %v5136, %v5129
    %v5466 = vpack.c.b16 %v5137, %v5130
    %v5467 = vpack.c.b16 %v5138, %v5131
    %v5468 = vpack.c.b16 %v5139, %v5132
    %v5469 = vpack.c.b16 %v5140, %v5133
    %v5470 = vpack.c.b16 %v5148, %v5141
    %v5471 = vpack.c.b16 %v5149, %v5142
    %v5472 = vpack.c.b16 %v5150, %v5143
    %v5473 = vpack.c.b16 %v5151, %v5144
    %v5474 = vpack.c.b16 %v5152, %v5145
    %v5475 = vpack.c.b16 %v5153, %v5146
    %v5476 = vpack.c.b16 %v5154, %v5147
    %v5477 = vpack.c.b16 %v5162, %v5155
    %v5478 = vpack.c.b16 %v5163, %v5156
    %v5479 = vpack.c.b16 %v5164, %v5157
    %v5480 = vpack.c.b16 %v5165, %v5158
    %v5481 = vpack.c.b16 %v5166, %v5159
    %v5482 = vpack.c.b16 %v5167, %v5160
    %v5483 = vpack.c.b16 %v5168, %v5161
    %v5484 = vpack.c.b16 %v5176, %v5169
    %v5485 = vpack.c.b16 %v5177, %v5170
    %v5486 = vpack.c.b16 %v5178, %v5171
    %v5487 = vpack.c.b16 %v5179, %v5172
    %v5488 = vpack.c.b16 %v5180, %v5173
    %v5489 = vpack.c.b16 %v5181, %v5174
    %v5490 = vpack.c.b16 %v5182, %v5175
    %v5491 = vpack.c.b16 %v5190, %v5183
    %v5492 = vpack.c.b16 %v5191, %v5184
    %v5493 = vpack.c.b16 %v5192, %v5185
    %v5494 = vpack.c.b16 %v5193, %v5186
    %v5495 = vpack.c.b16 %v5194, %v5187
    %v5496 = vpack.c.b16 %v5195, %v5188
    %v5497 = vpack.c.b16 %v5196, %v5189
    %v5498 = vpack.c.b16 %v5204, %v5197
    %v5499 = vpack.c.b16 %v5205, %v5198
    %v5500 = vpack.c.b16 %v5206, %v5199
    %v5501 = vpack.c.b16 %v5207, %v5200
    %v5502 = vpack.c.b16 %v5208, %v5201
    %v5503 = vpack.c.b16 %v5209, %v5202
    %v5504 = vpack.c.b16 %v5210, %v5203
    %v5505 = vpack.c.b16 %v5218, %v5211
    %v5506 = vpack.c.b16 %v5219, %v5212
    %v5507 = vpack.c.b16 %v5220, %v5213
    %v5508 = vpack.c.b16 %v5221, %v5214
    %v5509 = vpack.c.b16 %v5222, %v5215
    %v5510 = vpack.c.b16 %v5223, %v5216
    %v5511 = vpack.c.b16 %v5224, %v5217
    %v5512 = vpack.c.b16 %v5232, %v5225
    %v5513 = vpack.c.b16 %v5233, %v5226
    %v5514 = vpack.c.b16 %v5234, %v5227
    %v5515 = vpack.c.b16 %v5235, %v5228
    %v5516 = vpack.c.b16 %v5236, %v5229
    %v5517 = vpack.c.b16 %v5237, %v5230
    %v5518 = vpack.c.b16 %v5238, %v5231
    %v5519 = vpack.c.b16 %v5246, %v5239
    %v5520 = vpack.c.b16 %v5247, %v5240
    %v5521 = vpack.c.b16 %v5248, %v5241
    %v5522 = vpack.c.b16 %v5249, %v5242
    %v5523 = vpack.c.b16 %v5250, %v5243
    %v5524 = vpack.c.b16 %v5251, %v5244
    %v5525 = vpack.c.b16 %v5252, %v5245
    %v5526 = vpack.c.b16 %v5260, %v5253
    %v5527 = vpack.c.b16 %v5261, %v5254
    %v5528 = vpack.c.b16 %v5262, %v5255
    %v5529 = vpack.c.b16 %v5263, %v5256
    %v5530 = vpack.c.b16 %v5264, %v5257
    %v5531 = vpack.c.b16 %v5265, %v5258
    %v5532 = vpack.c.b16 %v5266, %v5259
    %v5533 = vpack.c.b16 %v5274, %v5267
    %v5534 = vpack.c.b16 %v5275, %v5268
    %v5535 = vpack.c.b16 %v5276, %v5269
    %v5536 = vpack.c.b16 %v5277, %v5270
    %v5537 = vpack.c.b16 %v5278, %v5271
    %v5538 = vpack.c.b16 %v5279, %v5272
    %v5539 = vpack.c.b16 %v5280, %v5273
    %v5540 = vpack.c.b16 %v5288, %v5281
    %v5541 = vpack.c.b16 %v5289, %v5282
    %v5542 = vpack.c.b16 %v5290, %v5283
    %v5543 = vpack.c.b16 %v5291, %v5284
    %v5544 = vpack.c.b16 %v5292, %v5285
    %v5545 = vpack.c.b16 %v5293, %v5286
    %v5546 = vpack.c.b16 %v5294, %v5287
    %v5547 = vpack.c.b16 %v5302, %v5295
    %v5548 = vpack.c.b16 %v5303, %v5296
    %v5549 = vpack.c.b16 %v5304, %v5297
    %v5550 = vpack.c.b16 %v5305, %v5298
    %v5551 = vpack.c.b16 %v5306, %v5299
    %v5552 = vpack.c.b16 %v5307, %v5300
    %v5553 = vpack.c.b16 %v5308, %v5301
    %v5554 = vpack.c.b16 %v5316, %v5309
    %v5555 = vpack.c.b16 %v5317, %v5310
    %v5556 = vpack.c.b16 %v5318, %v5311
    %v5557 = vpack.c.b16 %v5319, %v5312
    %v5558 = vpack.c.b16 %v5320, %v5313
    %v5559 = vpack.c.b16 %v5321, %v5314
    %v5560 = vpack.c.b16 %v5322, %v5315
    %v5561 = vpack.c.b16 %v5330, %v5323
    %v5562 = vpack.c.b16 %v5331, %v5324
    %v5563 = vpack.c.b16 %v5332, %v5325
    %v5564 = vpack.c.b16 %v5333, %v5326
    %v5565 = vpack.c.b16 %v5334, %v5327
    %v5566 = vpack.c.b16 %v5335, %v5328
    %v5567 = vpack.c.b16 %v5336, %v5329
    %v5568 = vpack.c.b16 %v5344, %v5337
    %v5569 = vpack.c.b16 %v5345, %v5338
    %v5570 = vpack.c.b16 %v5346, %v5339
    %v5571 = vpack.c.b16 %v5347, %v5340
    %v5572 = vpack.c.b16 %v5348, %v5341
    %v5573 = vpack.c.b16 %v5349, %v5342
    %v5574 = vpack.c.b16 %v5350, %v5343
    %5799 = vmatprep.subr.bf16.mxu0 %v5352
    %5800 = vmatpush1.bf16.msra.mxu0 %v5351
    %5801 = vmatprep.subr.bf16.mxu0 %v5359
    %5802 = vmatpush1.bf16.msra.mxu0 %v5358
    %5803 = vmatprep.subr.bf16.mxu0 %v5366
    %5804 = vmatpush1.bf16.msra.mxu0 %v5365
    %5805 = vmatprep.subr.bf16.mxu0 %v5373
    %5806 = vmatpush1.bf16.msra.mxu0 %v5372
    %5807 = vmatprep.subr.bf16.mxu0 %v5380
    %5808 = vmatpush1.bf16.msra.mxu0 %v5379
    %5809 = vmatprep.subr.bf16.mxu0 %v5387
    %5810 = vmatpush1.bf16.msra.mxu0 %v5386
    %5811 = vmatprep.subr.bf16.mxu0 %v5394
    %5812 = vmatpush1.bf16.msra.mxu0 %v5393
    %5813 = vmatprep.subr.bf16.mxu0 %v5401
    %5814 = vmatpush1.bf16.msra.mxu0 %v5400
    %5815 = vmatprep.subr.bf16.mxu0 %v5408
    %5816 = vmatpush1.bf16.msra.mxu0 %v5407
    %5817 = vmatprep.subr.bf16.mxu0 %v5415
    %5818 = vmatpush1.bf16.msra.mxu0 %v5414
    %5819 = vmatprep.subr.bf16.mxu0 %v5422
    %5820 = vmatpush1.bf16.msra.mxu0 %v5421
    %5821 = vmatprep.subr.bf16.mxu0 %v5429
    %5822 = vmatpush1.bf16.msra.mxu0 %v5428
    %5823 = vmatprep.subr.bf16.mxu0 %v5436
    %5824 = vmatpush1.bf16.msra.mxu0 %v5435
    %5825 = vmatprep.subr.bf16.mxu0 %v5443
    %5826 = vmatpush1.bf16.msra.mxu0 %v5442
    %5827 = vmatprep.subr.bf16.mxu0 %v5450
    %5828 = vmatpush1.bf16.msra.mxu0 %v5449
    %5829 = vmatprep.subr.bf16.mxu0 %v5457
    %5830 = vmatpush1.bf16.msra.mxu0 %v5456
    %5831 = vmatprep.mubr.bf16.mxu0 %v4339
    %5832 = vmatmul.mubr.bf16.gmra.mrb[0].mxu0 %v4338
    %v5833 = vpop.f32.mrb[0].mxu0
    %v5834 = vadd.f32 %v4615, %v5833
    %v5835 = vpop.f32.mrb[0].mxu0
    %v5836 = vadd.f32 %v4619, %v5835
    %v5837 = vpop.f32.mrb[0].mxu0
    %v5838 = vadd.f32 %v4615, %v5837
    %v5839 = vpop.f32.mrb[0].mxu0
    %v5840 = vadd.f32 %v4619, %v5839
    %5841 = vmatprep.mubr.bf16.mxu0 %v4343
    %5842 = vmatmul.mubr.bf16.gmra.mrb[0].mxu0 %v4342
    %v5843 = vpop.f32.mrb[0].mxu0
    %v5844 = vadd.f32 %v4615, %v5843
    %v5845 = vpop.f32.mrb[0].mxu0
    %v5846 = vadd.f32 %v4619, %v5845
    %v5847 = vpop.f32.mrb[0].mxu0
    %v5848 = vadd.f32 %v4615, %v5847
    %v5849 = vpop.f32.mrb[0].mxu0
    %v5850 = vadd.f32 %v4619, %v5849
    %5851 = vmatprep.mubr.bf16.mxu0 %v4347
    %5852 = vmatmul.mubr.bf16.gmra.mrb[0].mxu0 %v4346
    %v5853 = vpop.f32.mrb[0].mxu0
    %v5854 = vadd.f32 %v4615, %v5853
    %v5855 = vpop.f32.mrb[0].mxu0
    %v5856 = vadd.f32 %v4619, %v5855
    %v5857 = vpop.f32.mrb[0].mxu0
    %v5858 = vadd.f32 %v4615, %v5857
    %v5859 = vpop.f32.mrb[0].mxu0
    %v5860 = vadd.f32 %v4619, %v5859
    %5861 = vmatprep.mubr.bf16.mxu0 %v4351
    %5862 = vmatmul.mubr.bf16.gmra.mrb[0].mxu0 %v4350
    %v5863 = vpop.f32.mrb[0].mxu0
    %v5864 = vadd.f32 %v4615, %v5863
    %v5865 = vpop.f32.mrb[0].mxu0
    %v5866 = vadd.f32 %v4619, %v5865
    %v5867 = vpop.f32.mrb[0].mxu0
    %v5868 = vadd.f32 %v4615, %v5867
    %v5869 = vpop.f32.mrb[0].mxu0
    %v5870 = vadd.f32 %v4619, %v5869
    %5871 = vdwg.mxu0
    %5872 = vmatprep.subr.bf16.mxu0 %v5464
    %5873 = vmatpush1.bf16.msra.mxu0 %v5463
    %5874 = vmatprep.subr.bf16.mxu0 %v5471
    %5875 = vmatpush1.bf16.msra.mxu0 %v5470
    %5876 = vmatprep.subr.bf16.mxu0 %v5478
    %5877 = vmatpush1.bf16.msra.mxu0 %v5477
    %5878 = vmatprep.subr.bf16.mxu0 %v5485
    %5879 = vmatpush1.bf16.msra.mxu0 %v5484
    %5880 = vmatprep.subr.bf16.mxu0 %v5492
    %5881 = vmatpush1.bf16.msra.mxu0 %v5491
    %5882 = vmatprep.subr.bf16.mxu0 %v5499
    %5883 = vmatpush1.bf16.msra.mxu0 %v5498
    %5884 = vmatprep.subr.bf16.mxu0 %v5506
    %5885 = vmatpush1.bf16.msra.mxu0 %v5505
    %5886 = vmatprep.subr.bf16.mxu0 %v5513
    %5887 = vmatpush1.bf16.msra.mxu0 %v5512
    %5888 = vmatprep.subr.bf16.mxu0 %v5520
    %5889 = vmatpush1.bf16.msra.mxu0 %v5519
    %5890 = vmatprep.subr.bf16.mxu0 %v5527
    %5891 = vmatpush1.bf16.msra.mxu0 %v5526
    %5892 = vmatprep.subr.bf16.mxu0 %v5534
    %5893 = vmatpush1.bf16.msra.mxu0 %v5533
    %5894 = vmatprep.subr.bf16.mxu0 %v5541
    %5895 = vmatpush1.bf16.msra.mxu0 %v5540
    %5896 = vmatprep.subr.bf16.mxu0 %v5548
    %5897 = vmatpush1.bf16.msra.mxu0 %v5547
    %5898 = vmatprep.subr.bf16.mxu0 %v5555
    %5899 = vmatpush1.bf16.msra.mxu0 %v5554
    %5900 = vmatprep.subr.bf16.mxu0 %v5562
    %5901 = vmatpush1.bf16.msra.mxu0 %v5561
    %5902 = vmatprep.subr.bf16.mxu0 %v5569
    %5903 = vmatpush1.bf16.msra.mxu0 %v5568
    %5904 = vmatprep.mubr.bf16.mxu0 %v4341
    %5905 = vmatmul.mubr.bf16.gmra.mrb[0].mxu0 %v4340
    %v5906 = vpop.f32.mrb[0].mxu0
    %v5907 = vadd.f32 %v5834, %v5906
    %v5908 = vpop.f32.mrb[0].mxu0
    %v5909 = vadd.f32 %v5836, %v5908
    %v5910 = vpop.f32.mrb[0].mxu0
    %v5911 = vadd.f32 %v5838, %v5910
    %v5912 = vpop.f32.mrb[0].mxu0
    %v5913 = vadd.f32 %v5840, %v5912
    %5914 = vmatprep.mubr.bf16.mxu0 %v4345
    %5915 = vmatmul.mubr.bf16.gmra.mrb[0].mxu0 %v4344
    %v5916 = vpop.f32.mrb[0].mxu0
    %v5917 = vadd.f32 %v5844, %v5916
    %v5918 = vpop.f32.mrb[0].mxu0
    %v5919 = vadd.f32 %v5846, %v5918
    %v5920 = vpop.f32.mrb[0].mxu0
    %v5921 = vadd.f32 %v5848, %v5920
    %v5922 = vpop.f32.mrb[0].mxu0
    %v5923 = vadd.f32 %v5850, %v5922
    %5924 = vmatprep.mubr.bf16.mxu0 %v4349
    %5925 = vmatmul.mubr.bf16.gmra.mrb[0].mxu0 %v4348
    %v5926 = vpop.f32.mrb[0].mxu0
    %v5927 = vadd.f32 %v5854, %v5926
    %v5928 = vpop.f32.mrb[0].mxu0
    %v5929 = vadd.f32 %v5856, %v5928
    %v5930 = vpop.f32.mrb[0].mxu0
    %v5931 = vadd.f32 %v5858, %v5930
    %v5932 = vpop.f32.mrb[0].mxu0
    %v5933 = vadd.f32 %v5860, %v5932
    %5934 = vmatprep.mubr.bf16.mxu0 %v4353
    %5935 = vmatmul.mubr.bf16.gmra.mrb[0].mxu0 %v4352
    %v5936 = vpop.f32.mrb[0].mxu0
    %v5937 = vadd.f32 %v5864, %v5936
    %v5938 = vpop.f32.mrb[0].mxu0
    %v5939 = vadd.f32 %v5866, %v5938
    %v5940 = vpop.f32.mrb[0].mxu0
    %v5941 = vadd.f32 %v5868, %v5940
    %v5942 = vpop.f32.mrb[0].mxu0
    %v5943 = vadd.f32 %v5870, %v5942
    %5944 = vdwg.mxu0
    %5945 = vmatprep.subr.bf16.mxu0 %v5354
    %5946 = vmatpush1.bf16.msra.mxu0 %v5353
    %5947 = vmatprep.subr.bf16.mxu0 %v5361
    %5948 = vmatpush1.bf16.msra.mxu0 %v5360
    %5949 = vmatprep.subr.bf16.mxu0 %v5368
    %5950 = vmatpush1.bf16.msra.mxu0 %v5367
    %5951 = vmatprep.subr.bf16.mxu0 %v5375
    %5952 = vmatpush1.bf16.msra.mxu0 %v5374
    %5953 = vmatprep.subr.bf16.mxu0 %v5382
    %5954 = vmatpush1.bf16.msra.mxu0 %v5381
    %5955 = vmatprep.subr.bf16.mxu0 %v5389
    %5956 = vmatpush1.bf16.msra.mxu0 %v5388
    %5957 = vmatprep.subr.bf16.mxu0 %v5396
    %5958 = vmatpush1.bf16.msra.mxu0 %v5395
    %5959 = vmatprep.subr.bf16.mxu0 %v5403
    %5960 = vmatpush1.bf16.msra.mxu0 %v5402
    %5961 = vmatprep.subr.bf16.mxu0 %v5410
    %5962 = vmatpush1.bf16.msra.mxu0 %v5409
    %5963 = vmatprep.subr.bf16.mxu0 %v5417
    %5964 = vmatpush1.bf16.msra.mxu0 %v5416
    %5965 = vmatprep.subr.bf16.mxu0 %v5424
    %5966 = vmatpush1.bf16.msra.mxu0 %v5423
    %5967 = vmatprep.subr.bf16.mxu0 %v5431
    %5968 = vmatpush1.bf16.msra.mxu0 %v5430
    %5969 = vmatprep.subr.bf16.mxu0 %v5438
    %5970 = vmatpush1.bf16.msra.mxu0 %v5437
    %5971 = vmatprep.subr.bf16.mxu0 %v5445
    %5972 = vmatpush1.bf16.msra.mxu0 %v5444
    %5973 = vmatprep.subr.bf16.mxu0 %v5452
    %5974 = vmatpush1.bf16.msra.mxu0 %v5451
    %5975 = vmatprep.subr.bf16.mxu0 %v5459
    %5976 = vmatpush1.bf16.msra.mxu0 %v5458
    %5977 = vmatprep.mubr.bf16.mxu0 %v4339
    %5978 = vmatmul.mubr.bf16.gmra.mrb[0].mxu0 %v4338
    %v5979 = vpop.f32.mrb[0].mxu0
    %v5980 = vadd.f32 %v4623, %v5979
    %v5981 = vpop.f32.mrb[0].mxu0
    %v5982 = vadd.f32 %v4627, %v5981
    %v5983 = vpop.f32.mrb[0].mxu0
    %v5984 = vadd.f32 %v4623, %v5983
    %v5985 = vpop.f32.mrb[0].mxu0
    %v5986 = vadd.f32 %v4627, %v5985
    %5987 = vmatprep.mubr.bf16.mxu0 %v4343
    %5988 = vmatmul.mubr.bf16.gmra.mrb[0].mxu0 %v4342
    %v5989 = vpop.f32.mrb[0].mxu0
    %v5990 = vadd.f32 %v4623, %v5989
    %v5991 = vpop.f32.mrb[0].mxu0
    %v5992 = vadd.f32 %v4627, %v5991
    %v5993 = vpop.f32.mrb[0].mxu0
    %v5994 = vadd.f32 %v4623, %v5993
    %v5995 = vpop.f32.mrb[0].mxu0
    %v5996 = vadd.f32 %v4627, %v5995
    %5997 = vmatprep.mubr.bf16.mxu0 %v4347
    %5998 = vmatmul.mubr.bf16.gmra.mrb[0].mxu0 %v4346
    %v5999 = vpop.f32.mrb[0].mxu0
    %v6000 = vadd.f32 %v4623, %v5999
    %v6001 = vpop.f32.mrb[0].mxu0
    %v6002 = vadd.f32 %v4627, %v6001
    %v6003 = vpop.f32.mrb[0].mxu0
    %v6004 = vadd.f32 %v4623, %v6003
    %v6005 = vpop.f32.mrb[0].mxu0
    %v6006 = vadd.f32 %v4627, %v6005
    %6007 = vmatprep.mubr.bf16.mxu0 %v4351
    %6008 = vmatmul.mubr.bf16.gmra.mrb[0].mxu0 %v4350
    %v6009 = vpop.f32.mrb[0].mxu0
    %v6010 = vadd.f32 %v4623, %v6009
    %v6011 = vpop.f32.mrb[0].mxu0
    %v6012 = vadd.f32 %v4627, %v6011
    %v6013 = vpop.f32.mrb[0].mxu0
    %v6014 = vadd.f32 %v4623, %v6013
    %v6015 = vpop.f32.mrb[0].mxu0
    %v6016 = vadd.f32 %v4627, %v6015
    %6017 = vdwg.mxu0
    %6018 = vmatprep.subr.bf16.mxu0 %v5466
    %6019 = vmatpush1.bf16.msra.mxu0 %v5465
    %6020 = vmatprep.subr.bf16.mxu0 %v5473
    %6021 = vmatpush1.bf16.msra.mxu0 %v5472
    %6022 = vmatprep.subr.bf16.mxu0 %v5480
    %6023 = vmatpush1.bf16.msra.mxu0 %v5479
    %6024 = vmatprep.subr.bf16.mxu0 %v5487
    %6025 = vmatpush1.bf16.msra.mxu0 %v5486
    %6026 = vmatprep.subr.bf16.mxu0 %v5494
    %6027 = vmatpush1.bf16.msra.mxu0 %v5493
    %6028 = vmatprep.subr.bf16.mxu0 %v5501
    %6029 = vmatpush1.bf16.msra.mxu0 %v5500
    %6030 = vmatprep.subr.bf16.mxu0 %v5508
    %6031 = vmatpush1.bf16.msra.mxu0 %v5507
    %6032 = vmatprep.subr.bf16.mxu0 %v5515
    %6033 = vmatpush1.bf16.msra.mxu0 %v5514
    %6034 = vmatprep.subr.bf16.mxu0 %v5522
    %6035 = vmatpush1.bf16.msra.mxu0 %v5521
    %6036 = vmatprep.subr.bf16.mxu0 %v5529
    %6037 = vmatpush1.bf16.msra.mxu0 %v5528
    %6038 = vmatprep.subr.bf16.mxu0 %v5536
    %6039 = vmatpush1.bf16.msra.mxu0 %v5535
    %6040 = vmatprep.subr.bf16.mxu0 %v5543
    %6041 = vmatpush1.bf16.msra.mxu0 %v5542
    %6042 = vmatprep.subr.bf16.mxu0 %v5550
    %6043 = vmatpush1.bf16.msra.mxu0 %v5549
    %6044 = vmatprep.subr.bf16.mxu0 %v5557
    %6045 = vmatpush1.bf16.msra.mxu0 %v5556
    %6046 = vmatprep.subr.bf16.mxu0 %v5564
    %6047 = vmatpush1.bf16.msra.mxu0 %v5563
    %6048 = vmatprep.subr.bf16.mxu0 %v5571
    %6049 = vmatpush1.bf16.msra.mxu0 %v5570
    %6050 = vmatprep.mubr.bf16.mxu0 %v4341
    %6051 = vmatmul.mubr.bf16.gmra.mrb[0].mxu0 %v4340
    %v6052 = vpop.f32.mrb[0].mxu0
    %v6053 = vadd.f32 %v5980, %v6052
    %v6054 = vpop.f32.mrb[0].mxu0
    %v6055 = vadd.f32 %v5982, %v6054
    %v6056 = vpop.f32.mrb[0].mxu0
    %v6057 = vadd.f32 %v5984, %v6056
    %v6058 = vpop.f32.mrb[0].mxu0
    %v6059 = vadd.f32 %v5986, %v6058
    %6060 = vmatprep.mubr.bf16.mxu0 %v4345
    %6061 = vmatmul.mubr.bf16.gmra.mrb[0].mxu0 %v4344
    %v6062 = vpop.f32.mrb[0].mxu0
    %v6063 = vadd.f32 %v5990, %v6062
    %v6064 = vpop.f32.mrb[0].mxu0
    %v6065 = vadd.f32 %v5992, %v6064
    %v6066 = vpop.f32.mrb[0].mxu0
    %v6067 = vadd.f32 %v5994, %v6066
    %v6068 = vpop.f32.mrb[0].mxu0
    %v6069 = vadd.f32 %v5996, %v6068
    %6070 = vmatprep.mubr.bf16.mxu0 %v4349
    %6071 = vmatmul.mubr.bf16.gmra.mrb[0].mxu0 %v4348
    %v6072 = vpop.f32.mrb[0].mxu0
    %v6073 = vadd.f32 %v6000, %v6072
    %v6074 = vpop.f32.mrb[0].mxu0
    %v6075 = vadd.f32 %v6002, %v6074
    %v6076 = vpop.f32.mrb[0].mxu0
    %v6077 = vadd.f32 %v6004, %v6076
    %v6078 = vpop.f32.mrb[0].mxu0
    %v6079 = vadd.f32 %v6006, %v6078
    %6080 = vmatprep.mubr.bf16.mxu0 %v4353
    %6081 = vmatmul.mubr.bf16.gmra.mrb[0].mxu0 %v4352
    %v6082 = vpop.f32.mrb[0].mxu0
    %v6083 = vadd.f32 %v6010, %v6082
    %v6084 = vpop.f32.mrb[0].mxu0
    %v6085 = vadd.f32 %v6012, %v6084
    %v6086 = vpop.f32.mrb[0].mxu0
    %v6087 = vadd.f32 %v6014, %v6086
    %v6088 = vpop.f32.mrb[0].mxu0
    %v6089 = vadd.f32 %v6016, %v6088
    %6090 = vdwg.mxu0
    %6091 = vmatprep.subr.bf16.mxu0 %v5356
    %6092 = vmatpush1.bf16.msra.mxu0 %v5355
    %6093 = vmatprep.subr.bf16.mxu0 %v5363
    %6094 = vmatpush1.bf16.msra.mxu0 %v5362
    %6095 = vmatprep.subr.bf16.mxu0 %v5370
    %6096 = vmatpush1.bf16.msra.mxu0 %v5369
    %6097 = vmatprep.subr.bf16.mxu0 %v5377
    %6098 = vmatpush1.bf16.msra.mxu0 %v5376
    %6099 = vmatprep.subr.bf16.mxu0 %v5384
    %6100 = vmatpush1.bf16.msra.mxu0 %v5383
    %6101 = vmatprep.subr.bf16.mxu0 %v5391
    %6102 = vmatpush1.bf16.msra.mxu0 %v5390
    %6103 = vmatprep.subr.bf16.mxu0 %v5398
    %6104 = vmatpush1.bf16.msra.mxu0 %v5397
    %6105 = vmatprep.subr.bf16.mxu0 %v5405
    %6106 = vmatpush1.bf16.msra.mxu0 %v5404
    %6107 = vmatprep.subr.bf16.mxu0 %v5412
    %6108 = vmatpush1.bf16.msra.mxu0 %v5411
    %6109 = vmatprep.subr.bf16.mxu0 %v5419
    %6110 = vmatpush1.bf16.msra.mxu0 %v5418
    %6111 = vmatprep.subr.bf16.mxu0 %v5426
    %6112 = vmatpush1.bf16.msra.mxu0 %v5425
    %6113 = vmatprep.subr.bf16.mxu0 %v5433
    %6114 = vmatpush1.bf16.msra.mxu0 %v5432
    %6115 = vmatprep.subr.bf16.mxu0 %v5440
    %6116 = vmatpush1.bf16.msra.mxu0 %v5439
    %6117 = vmatprep.subr.bf16.mxu0 %v5447
    %6118 = vmatpush1.bf16.msra.mxu0 %v5446
    %6119 = vmatprep.subr.bf16.mxu0 %v5454
    %6120 = vmatpush1.bf16.msra.mxu0 %v5453
    %6121 = vmatprep.subr.bf16.mxu0 %v5461
    %6122 = vmatpush1.bf16.msra.mxu0 %v5460
    %6123 = vmatprep.mubr.bf16.mxu0 %v4339
    %6124 = vmatmul.mubr.bf16.gmra.mrb[0].mxu0 %v4338
    %v6125 = vpop.f32.mrb[0].mxu0
    %v6126 = vadd.f32 %v4631, %v6125
    %v6127 = vpop.f32.mrb[0].mxu0
    %v6128 = vadd.f32 %v4635, %v6127
    %v6129 = vpop.f32.mrb[0].mxu0
    %v6130 = vadd.f32 %v4631, %v6129
    %v6131 = vpop.f32.mrb[0].mxu0
    %v6132 = vadd.f32 %v4635, %v6131
    %6133 = vmatprep.mubr.bf16.mxu0 %v4343
    %6134 = vmatmul.mubr.bf16.gmra.mrb[0].mxu0 %v4342
    %v6135 = vpop.f32.mrb[0].mxu0
    %v6136 = vadd.f32 %v4631, %v6135
    %v6137 = vpop.f32.mrb[0].mxu0
    %v6138 = vadd.f32 %v4635, %v6137
    %v6139 = vpop.f32.mrb[0].mxu0
    %v6140 = vadd.f32 %v4631, %v6139
    %v6141 = vpop.f32.mrb[0].mxu0
    %v6142 = vadd.f32 %v4635, %v6141
    %6143 = vmatprep.mubr.bf16.mxu0 %v4347
    %6144 = vmatmul.mubr.bf16.gmra.mrb[0].mxu0 %v4346
    %v6145 = vpop.f32.mrb[0].mxu0
    %v6146 = vadd.f32 %v4631, %v6145
    %v6147 = vpop.f32.mrb[0].mxu0
    %v6148 = vadd.f32 %v4635, %v6147
    %v6149 = vpop.f32.mrb[0].mxu0
    %v6150 = vadd.f32 %v4631, %v6149
    %v6151 = vpop.f32.mrb[0].mxu0
    %v6152 = vadd.f32 %v4635, %v6151
    %6153 = vmatprep.mubr.bf16.mxu0 %v4351
    %6154 = vmatmul.mubr.bf16.gmra.mrb[0].mxu0 %v4350
    %v6155 = vpop.f32.mrb[0].mxu0
    %v6156 = vadd.f32 %v4631, %v6155
    %v6157 = vpop.f32.mrb[0].mxu0
    %v6158 = vadd.f32 %v4635, %v6157
    %v6159 = vpop.f32.mrb[0].mxu0
    %v6160 = vadd.f32 %v4631, %v6159
    %v6161 = vpop.f32.mrb[0].mxu0
    %v6162 = vadd.f32 %v4635, %v6161
    %6163 = vdwg.mxu0
    %6164 = vmatprep.subr.bf16.mxu0 %v5468
    %6165 = vmatpush1.bf16.msra.mxu0 %v5467
    %6166 = vmatprep.subr.bf16.mxu0 %v5475
    %6167 = vmatpush1.bf16.msra.mxu0 %v5474
    %6168 = vmatprep.subr.bf16.mxu0 %v5482
    %6169 = vmatpush1.bf16.msra.mxu0 %v5481
    %6170 = vmatprep.subr.bf16.mxu0 %v5489
    %6171 = vmatpush1.bf16.msra.mxu0 %v5488
    %6172 = vmatprep.subr.bf16.mxu0 %v5496
    %6173 = vmatpush1.bf16.msra.mxu0 %v5495
    %6174 = vmatprep.subr.bf16.mxu0 %v5503
    %6175 = vmatpush1.bf16.msra.mxu0 %v5502
    %6176 = vmatprep.subr.bf16.mxu0 %v5510
    %6177 = vmatpush1.bf16.msra.mxu0 %v5509
    %6178 = vmatprep.subr.bf16.mxu0 %v5517
    %6179 = vmatpush1.bf16.msra.mxu0 %v5516
    %6180 = vmatprep.subr.bf16.mxu0 %v5524
    %6181 = vmatpush1.bf16.msra.mxu0 %v5523
    %6182 = vmatprep.subr.bf16.mxu0 %v5531
    %6183 = vmatpush1.bf16.msra.mxu0 %v5530
    %6184 = vmatprep.subr.bf16.mxu0 %v5538
    %6185 = vmatpush1.bf16.msra.mxu0 %v5537
    %6186 = vmatprep.subr.bf16.mxu0 %v5545
    %6187 = vmatpush1.bf16.msra.mxu0 %v5544
    %6188 = vmatprep.subr.bf16.mxu0 %v5552
    %6189 = vmatpush1.bf16.msra.mxu0 %v5551
    %6190 = vmatprep.subr.bf16.mxu0 %v5559
    %6191 = vmatpush1.bf16.msra.mxu0 %v5558
    %6192 = vmatprep.subr.bf16.mxu0 %v5566
    %6193 = vmatpush1.bf16.msra.mxu0 %v5565
    %6194 = vmatprep.subr.bf16.mxu0 %v5573
    %6195 = vmatpush1.bf16.msra.mxu0 %v5572
    %6196 = vmatprep.mubr.bf16.mxu0 %v4341
    %6197 = vmatmul.mubr.bf16.gmra.mrb[0].mxu0 %v4340
    %v6198 = vpop.f32.mrb[0].mxu0
    %v6199 = vadd.f32 %v6126, %v6198
    %v6200 = vpop.f32.mrb[0].mxu0
    %v6201 = vadd.f32 %v6128, %v6200
    %v6202 = vpop.f32.mrb[0].mxu0
    %v6203 = vadd.f32 %v6130, %v6202
    %v6204 = vpop.f32.mrb[0].mxu0
    %v6205 = vadd.f32 %v6132, %v6204
    %6206 = vmatprep.mubr.bf16.mxu0 %v4345
    %6207 = vmatmul.mubr.bf16.gmra.mrb[0].mxu0 %v4344
    %v6208 = vpop.f32.mrb[0].mxu0
    %v6209 = vadd.f32 %v6136, %v6208
    %v6210 = vpop.f32.mrb[0].mxu0
    %v6211 = vadd.f32 %v6138, %v6210
    %v6212 = vpop.f32.mrb[0].mxu0
    %v6213 = vadd.f32 %v6140, %v6212
    %v6214 = vpop.f32.mrb[0].mxu0
    %v6215 = vadd.f32 %v6142, %v6214
    %6216 = vmatprep.mubr.bf16.mxu0 %v4349
    %6217 = vmatmul.mubr.bf16.gmra.mrb[0].mxu0 %v4348
    %v6218 = vpop.f32.mrb[0].mxu0
    %v6219 = vadd.f32 %v6146, %v6218
    %v6220 = vpop.f32.mrb[0].mxu0
    %v6221 = vadd.f32 %v6148, %v6220
    %v6222 = vpop.f32.mrb[0].mxu0
    %v6223 = vadd.f32 %v6150, %v6222
    %v6224 = vpop.f32.mrb[0].mxu0
    %v6225 = vadd.f32 %v6152, %v6224
    %6226 = vmatprep.mubr.bf16.mxu0 %v4353
    %6227 = vmatmul.mubr.bf16.gmra.mrb[0].mxu0 %v4352
    %v6228 = vpop.f32.mrb[0].mxu0
    %v6229 = vadd.f32 %v6156, %v6228
    %v6230 = vpop.f32.mrb[0].mxu0
    %v6231 = vadd.f32 %v6158, %v6230
    %v6232 = vpop.f32.mrb[0].mxu0
    %v6233 = vadd.f32 %v6160, %v6232
    %v6234 = vpop.f32.mrb[0].mxu0
    %v6235 = vadd.f32 %v6162, %v6234
    %6236 = vdwg.mxu0
    %6237 = vmatprep.subr.bf16.mxu0 0
    %6238 = vmatpush1.bf16.msra.mxu0 %v5357
    %6239 = vmatprep.subr.bf16.mxu0 0
    %6240 = vmatpush1.bf16.msra.mxu0 %v5364
    %6241 = vmatprep.subr.bf16.mxu0 0
    %6242 = vmatpush1.bf16.msra.mxu0 %v5371
    %6243 = vmatprep.subr.bf16.mxu0 0
    %6244 = vmatpush1.bf16.msra.mxu0 %v5378
    %6245 = vmatprep.subr.bf16.mxu0 0
    %6246 = vmatpush1.bf16.msra.mxu0 %v5385
    %6247 = vmatprep.subr.bf16.mxu0 0
    %6248 = vmatpush1.bf16.msra.mxu0 %v5392
    %6249 = vmatprep.subr.bf16.mxu0 0
    %6250 = vmatpush1.bf16.msra.mxu0 %v5399
    %6251 = vmatprep.subr.bf16.mxu0 0
    %6252 = vmatpush1.bf16.msra.mxu0 %v5406
    %6253 = vmatprep.subr.bf16.mxu0 0
    %6254 = vmatpush1.bf16.msra.mxu0 %v5413
    %6255 = vmatprep.subr.bf16.mxu0 0
    %6256 = vmatpush1.bf16.msra.mxu0 %v5420
    %6257 = vmatprep.subr.bf16.mxu0 0
    %6258 = vmatpush1.bf16.msra.mxu0 %v5427
    %6259 = vmatprep.subr.bf16.mxu0 0
    %6260 = vmatpush1.bf16.msra.mxu0 %v5434
    %6261 = vmatprep.subr.bf16.mxu0 0
    %6262 = vmatpush1.bf16.msra.mxu0 %v5441
    %6263 = vmatprep.subr.bf16.mxu0 0
    %6264 = vmatpush1.bf16.msra.mxu0 %v5448
    %6265 = vmatprep.subr.bf16.mxu0 0
    %6266 = vmatpush1.bf16.msra.mxu0 %v5455
    %6267 = vmatprep.subr.bf16.mxu0 0
    %6268 = vmatpush1.bf16.msra.mxu0 %v5462
    %6269 = vmatprep.mubr.bf16.mxu0 %v4339
    %6270 = vmatmul.mubr.bf16.gmra.mrb[0].mxu0 %v4338
    %v6271 = vpop.f32.mrb[0].mxu0
    %v6272 = vadd.f32 %v4639, %v6271
    %v6273 = vpop.f32.mrb[0].mxu0
    %v6274 = vpop.f32.mrb[0].mxu0
    %v6275 = vadd.f32 %v4639, %v6274
    %v6276 = vpop.f32.mrb[0].mxu0
    %6277 = vmatprep.mubr.bf16.mxu0 %v4343
    %6278 = vmatmul.mubr.bf16.gmra.mrb[0].mxu0 %v4342
    %v6279 = vpop.f32.mrb[0].mxu0
    %v6280 = vadd.f32 %v4639, %v6279
    %v6281 = vpop.f32.mrb[0].mxu0
    %v6282 = vpop.f32.mrb[0].mxu0
    %v6283 = vadd.f32 %v4639, %v6282
    %v6284 = vpop.f32.mrb[0].mxu0
    %6285 = vmatprep.mubr.bf16.mxu0 %v4347
    %6286 = vmatmul.mubr.bf16.gmra.mrb[0].mxu0 %v4346
    %v6287 = vpop.f32.mrb[0].mxu0
    %v6288 = vadd.f32 %v4639, %v6287
    %v6289 = vpop.f32.mrb[0].mxu0
    %v6290 = vpop.f32.mrb[0].mxu0
    %v6291 = vadd.f32 %v4639, %v6290
    %v6292 = vpop.f32.mrb[0].mxu0
    %6293 = vmatprep.mubr.bf16.mxu0 %v4351
    %6294 = vmatmul.mubr.bf16.gmra.mrb[0].mxu0 %v4350
    %v6295 = vpop.f32.mrb[0].mxu0
    %v6296 = vadd.f32 %v4639, %v6295
    %v6297 = vpop.f32.mrb[0].mxu0
    %v6298 = vpop.f32.mrb[0].mxu0
    %v6299 = vadd.f32 %v4639, %v6298
    %v6300 = vpop.f32.mrb[0].mxu0
    %6301 = vdwg.mxu0
    %6302 = vmatprep.subr.bf16.mxu0 0
    %6303 = vmatpush1.bf16.msra.mxu0 %v5469
    %6304 = vmatprep.subr.bf16.mxu0 0
    %6305 = vmatpush1.bf16.msra.mxu0 %v5476
    %6306 = vmatprep.subr.bf16.mxu0 0
    %6307 = vmatpush1.bf16.msra.mxu0 %v5483
    %6308 = vmatprep.subr.bf16.mxu0 0
    %6309 = vmatpush1.bf16.msra.mxu0 %v5490
    %6310 = vmatprep.subr.bf16.mxu0 0
    %6311 = vmatpush1.bf16.msra.mxu0 %v5497
    %6312 = vmatprep.subr.bf16.mxu0 0
    %6313 = vmatpush1.bf16.msra.mxu0 %v5504
    %6314 = vmatprep.subr.bf16.mxu0 0
    %6315 = vmatpush1.bf16.msra.mxu0 %v5511
    %6316 = vmatprep.subr.bf16.mxu0 0
    %6317 = vmatpush1.bf16.msra.mxu0 %v5518
    %6318 = vmatprep.subr.bf16.mxu0 0
    %6319 = vmatpush1.bf16.msra.mxu0 %v5525
    %6320 = vmatprep.subr.bf16.mxu0 0
    %6321 = vmatpush1.bf16.msra.mxu0 %v5532
    %6322 = vmatprep.subr.bf16.mxu0 0
    %6323 = vmatpush1.bf16.msra.mxu0 %v5539
    %6324 = vmatprep.subr.bf16.mxu0 0
    %6325 = vmatpush1.bf16.msra.mxu0 %v5546
    %6326 = vmatprep.subr.bf16.mxu0 0
    %6327 = vmatpush1.bf16.msra.mxu0 %v5553
    %6328 = vmatprep.subr.bf16.mxu0 0
    %6329 = vmatpush1.bf16.msra.mxu0 %v5560
    %6330 = vmatprep.subr.bf16.mxu0 0
    %6331 = vmatpush1.bf16.msra.mxu0 %v5567
    %6332 = vmatprep.subr.bf16.mxu0 0
    %6333 = vmatpush1.bf16.msra.mxu0 %v5574
    %6334 = vmatprep.mubr.bf16.mxu0 %v4341
    %6335 = vmatmul.mubr.bf16.gmra.mrb[0].mxu0 %v4340
    %v6336 = vpop.f32.mrb[0].mxu0
    %v6337 = vadd.f32 %v6272, %v6336
    %v6338 = vpop.f32.mrb[0].mxu0
    %v6339 = vpop.f32.mrb[0].mxu0
    %v6340 = vadd.f32 %v6275, %v6339
    %v6341 = vpop.f32.mrb[0].mxu0
    %6342 = vmatprep.mubr.bf16.mxu0 %v4345
    %6343 = vmatmul.mubr.bf16.gmra.mrb[0].mxu0 %v4344
    %v6344 = vpop.f32.mrb[0].mxu0
    %v6345 = vadd.f32 %v6280, %v6344
    %v6346 = vpop.f32.mrb[0].mxu0
    %v6347 = vpop.f32.mrb[0].mxu0
    %v6348 = vadd.f32 %v6283, %v6347
    %v6349 = vpop.f32.mrb[0].mxu0
    %6350 = vmatprep.mubr.bf16.mxu0 %v4349
    %6351 = vmatmul.mubr.bf16.gmra.mrb[0].mxu0 %v4348
    %v6352 = vpop.f32.mrb[0].mxu0
    %v6353 = vadd.f32 %v6288, %v6352
    %v6354 = vpop.f32.mrb[0].mxu0
    %v6355 = vpop.f32.mrb[0].mxu0
    %v6356 = vadd.f32 %v6291, %v6355
    %v6357 = vpop.f32.mrb[0].mxu0
    %6358 = vmatprep.mubr.bf16.mxu0 %v4353
    %6359 = vmatmul.mubr.bf16.gmra.mrb[0].mxu0 %v4352
    %v6360 = vpop.f32.mrb[0].mxu0
    %v6361 = vadd.f32 %v6296, %v6360
    %v6362 = vpop.f32.mrb[0].mxu0
    %v6363 = vpop.f32.mrb[0].mxu0
    %v6364 = vadd.f32 %v6299, %v6363
    %v6365 = vpop.f32.mrb[0].mxu0
    %6366 = vdwg.mxu0
    %6367 = vst [vmem:[#allocation2] sm:$0xff] %v5907
    %6368 = vst [vmem:[#allocation2 + $0x8] sm:$0xff] %v5909
    %6369 = vst [vmem:[#allocation2 + $0x10] sm:$0xff] %v6053
    %6370 = vst [vmem:[#allocation2 + $0x18] sm:$0xff] %v6055
    %6371 = vst [vmem:[#allocation2 + $0x20] sm:$0xff] %v6199
    %6372 = vst [vmem:[#allocation2 + $0x28] sm:$0xff] %v6201
    %6373 = vst.msk [vmem:[#allocation2 + $0x30] sm:$0xff] %vm1307, %v6337
    %6374 = vst [vmem:[#allocation2 + $0x38] sm:$0xff] %v5911
    %6375 = vst [vmem:[#allocation2 + $0x40] sm:$0xff] %v5913
    %6376 = vst [vmem:[#allocation2 + $0x48] sm:$0xff] %v6057
    %6377 = vst [vmem:[#allocation2 + $0x50] sm:$0xff] %v6059
    %6378 = vst [vmem:[#allocation2 + $0x58] sm:$0xff] %v6203
    %6379 = vst [vmem:[#allocation2 + $0x60] sm:$0xff] %v6205
    %6380 = vst.msk [vmem:[#allocation2 + $0x68] sm:$0xff] %vm1307, %v6340
    %6381 = vst [vmem:[#allocation2 + $0x70] sm:$0xff] %v5917
    %6382 = vst [vmem:[#allocation2 + $0x78] sm:$0xff] %v5919
    %6383 = vst [vmem:[#allocation2 + $0x80] sm:$0xff] %v6063
    %6384 = vst [vmem:[#allocation2 + $0x88] sm:$0xff] %v6065
    %6385 = vst [vmem:[#allocation2 + $0x90] sm:$0xff] %v6209
    %6386 = vst [vmem:[#allocation2 + $0x98] sm:$0xff] %v6211
    %6387 = vst.msk [vmem:[#allocation2 + $0xa0] sm:$0xff] %vm1307, %v6345
    %6388 = vst [vmem:[#allocation2 + $0xa8] sm:$0xff] %v5921
    %6389 = vst [vmem:[#allocation2 + $0xb0] sm:$0xff] %v5923
    %6390 = vst [vmem:[#allocation2 + $0xb8] sm:$0xff] %v6067
    %6391 = vst [vmem:[#allocation2 + $0xc0] sm:$0xff] %v6069
    %6392 = vst [vmem:[#allocation2 + $0xc8] sm:$0xff] %v6213
    %6393 = vst [vmem:[#allocation2 + $0xd0] sm:$0xff] %v6215
    %6394 = vst.msk [vmem:[#allocation2 + $0xd8] sm:$0xff] %vm1307, %v6348
    %6395 = vst [vmem:[#allocation2 + $0xe0] sm:$0xff] %v5927
    %6396 = vst [vmem:[#allocation2 + $0xe8] sm:$0xff] %v5929
    %6397 = vst [vmem:[#allocation2 + $0xf0] sm:$0xff] %v6073
    %6398 = vst [vmem:[#allocation2 + $0xf8] sm:$0xff] %v6075
    %6399 = vst [vmem:[#allocation2 + $0x100] sm:$0xff] %v6219
    %6400 = vst [vmem:[#allocation2 + $0x108] sm:$0xff] %v6221
    %6401 = vst.msk [vmem:[#allocation2 + $0x110] sm:$0xff] %vm1307, %v6353
    %6402 = vst [vmem:[#allocation2 + $0x118] sm:$0xff] %v5931
    %6403 = vst [vmem:[#allocation2 + $0x120] sm:$0xff] %v5933
    %6404 = vst [vmem:[#allocation2 + $0x128] sm:$0xff] %v6077
    %6405 = vst [vmem:[#allocation2 + $0x130] sm:$0xff] %v6079
    %6406 = vst [vmem:[#allocation2 + $0x138] sm:$0xff] %v6223
    %6407 = vst [vmem:[#allocation2 + $0x140] sm:$0xff] %v6225
    %6408 = vst.msk [vmem:[#allocation2 + $0x148] sm:$0xff] %vm1307, %v6356
    %6409 = vst [vmem:[#allocation2 + $0x150] sm:$0xff] %v5937
    %6410 = vst [vmem:[#allocation2 + $0x158] sm:$0xff] %v5939
    %6411 = vst [vmem:[#allocation2 + $0x160] sm:$0xff] %v6083
    %6412 = vst [vmem:[#allocation2 + $0x168] sm:$0xff] %v6085
    %6413 = vst [vmem:[#allocation2 + $0x170] sm:$0xff] %v6229
    %6414 = vst [vmem:[#allocation2 + $0x178] sm:$0xff] %v6231
    %6415 = vst.msk [vmem:[#allocation2 + $0x180] sm:$0xff] %vm1307, %v6361
    %6416 = vst [vmem:[#allocation2 + $0x188] sm:$0xff] %v5941
    %6417 = vst [vmem:[#allocation2 + $0x190] sm:$0xff] %v5943
    %6418 = vst [vmem:[#allocation2 + $0x198] sm:$0xff] %v6087
    %6419 = vst [vmem:[#allocation2 + $0x1a0] sm:$0xff] %v6089
    %6420 = vst [vmem:[#allocation2 + $0x1a8] sm:$0xff] %v6233
    %6421 = vst [vmem:[#allocation2 + $0x1b0] sm:$0xff] %v6235
    %6422 = vst.msk [vmem:[#allocation2 + $0x1b8] sm:$0xff] %vm1307, %v6364
    // Predicated region
    $region50: #{autoencoder_forward.1} parent=1 // pred_check
      _
    $region51: #{autoencoder_forward.1} parent=1 // pred_check_branch
      %6424 = sbr.rel (0) target = $region53
    $region52: #{autoencoder_forward.1} parent=1 // pred_region
      %s6426 = ssub.s32 7168, 7168
      %6427 = vsyncadd [#allocation3], %s6426
      %s6428 = sshll.u32 [#allocation2], 4
      %s6429 = int_to_ptr.vmem [resolvable:$true] %s6428
      %6434 = dma.vmem_to_hbm [thread:$0]  %s6429, 7168, %s12, [#allocation3], 896, 896, 56
    $region53: #{autoencoder_forward.1} parent=1 // pred_fallthru
      _
    // Predicated region
    $region54: #{autoencoder_forward.1} parent=1 // pred_check
      _
    $region55: #{autoencoder_forward.1} parent=1 // pred_check_branch
      %6436 = sbr.rel (0) target = $region57
    $region56: #{autoencoder_forward.1} parent=1 // pred_region
      _
    $region57: #{autoencoder_forward.1} parent=1 // pred_fallthru
      _
    // Predicated region
    $region58: #{autoencoder_forward.1} parent=1 // pred_check
      _
    $region59: #{autoencoder_forward.1} parent=1 // pred_check_branch
      %6438 = sbr.rel (0) target = $region61
    $region60: #{autoencoder_forward.1} parent=1 // pred_region
      %6439 = dma.done [#allocation3], 7168
    $region61: #{autoencoder_forward.1} parent=1 // pred_fallthru
      _
    // Predicated region
    $region62: #{autoencoder_forward.1} parent=1 // pred_check
      _
    $region63: #{autoencoder_forward.1} parent=1 // pred_check_branch
      %6441 = sbr.rel (0) target = $region65
    $region64: #{autoencoder_forward.1} parent=1 // pred_region
      _
    $region65: #{autoencoder_forward.1} parent=1 // pred_fallthru
      _
    %6442 = vsyncpa [#allocation3], 1

</llo_original>
